<compile_context>
chip_gen: v6e
topology: v6e:2x2x1
jax: 0.10.0
libtpu: 0.0.40
codegen_flags: <defaults>
</compile_context>

<pallas_src>
import math

import jax
import jax.numpy as jnp
from jax import lax
from jax.experimental import pallas as pl
from jax.experimental.pallas import tpu as pltpu

K_DB = 50.0
BN_EPS = 1e-5
BN_GAMMA = 1.0
BN_BETA = 1e-4

DEFAULT_TILE_PIXELS = 512          # ~85% of HBM roofline; fits v7x scoped VMEM
VMEM_LIMIT_BYTES = 32 * 1024 * 1024


# --------------------------------------------------------------------------- #
# Kernels
# --------------------------------------------------------------------------- #
def _conv1_kernel(x_ref, w_ref, b_ref, y_ref, stats_ref):
    """3x3 conv, both branches fused (K=9C, N=2*C4) + BN1 sum/sumsq accumulation."""
    y = jnp.dot(x_ref[...], w_ref[...],
                preferred_element_type=jnp.float32) + b_ref[...]
    y_ref[...] = y

    @pl.when(pl.program_id(0) == 0)
    def _():
        stats_ref[...] = jnp.zeros_like(stats_ref)

    stats_ref[...] = stats_ref[...] + jnp.concatenate(
        [jnp.sum(y, axis=0, keepdims=True),
         jnp.sum(y * y, axis=0, keepdims=True)], axis=0)


def _deconv1_kernel(y1_ref, bn1_ref, w_ref, b_ref, h2_ref, stats_ref):
    """BN1 + ReLU + first 2x2/s2 deconv (both branches x 4 offsets fused) + BN2 stats."""
    h1 = jnp.maximum(y1_ref[...] * bn1_ref[0:1, :] + bn1_ref[1:2, :], 0.0)
    h2 = jnp.dot(h1, w_ref[...],
                 preferred_element_type=jnp.float32) + b_ref[...]
    h2_ref[...] = h2

    @pl.when(pl.program_id(0) == 0)
    def _():
        stats_ref[...] = jnp.zeros_like(stats_ref)

    stats_ref[...] = stats_ref[...] + jnp.concatenate(
        [jnp.sum(h2, axis=0, keepdims=True),
         jnp.sum(h2 * h2, axis=0, keepdims=True)], axis=0)


def _deconv2_kernel(h2_ref, bn2_ref, w_ref, b_ref, out_ref):
    """BN2 + ReLU + second deconv (32 logits) + sigmoids + fused [TM,48] store."""
    h = jnp.maximum(h2_ref[...] * bn2_ref[0:1, :] + bn2_ref[1:2, :], 0.0)
    z = jnp.dot(h, w_ref[...],
                preferred_element_type=jnp.float32) + b_ref[...]
    p = 1.0 / (1.0 + jnp.exp(-z))          # cols 0..15 binary, 16..31 threshold
    p_bin = p[:, 0:16]
    p_thr = p[:, 16:32]
    p_apx = 1.0 / (1.0 + jnp.exp(-K_DB * (p_bin - p_thr)))
    out_ref[...] = jnp.concatenate([p_bin, p_thr, p_apx], axis=1)


# --------------------------------------------------------------------------- #
# Wrapper helpers
# --------------------------------------------------------------------------- #
def _block_diag(blocks):
    rows = sum(b.shape[0] for b in blocks)
    cols = sum(b.shape[1] for b in blocks)
    out = jnp.zeros((rows, cols), blocks[0].dtype)
    r = c = 0
    for b in blocks:
        out = out.at[r:r + b.shape[0], c:c + b.shape[1]].set(b)
        r += b.shape[0]
        c += b.shape[1]
    return out


def _bn_affine(stats, count):
    """stats rows = (sum, sumsq) over `count` samples -> rows (scale, shift)."""
    mean = stats[0:1] / count
    var = jnp.maximum(stats[1:2] / count - mean * mean, 0.0)   # biased variance
    scale = BN_GAMMA * lax.rsqrt(var + BN_EPS)
    shift = BN_BETA - mean * scale
    return jnp.concatenate([scale, shift], axis=0)


def _pick_pix_tile(m, target=DEFAULT_TILE_PIXELS):
    if m <= target:
        return m
    for d in range(min(m, target), 0, -1):
        if m % d == 0 and d % 8 == 0:
            return d
    return m


# --------------------------------------------------------------------------- #
# Forward
# --------------------------------------------------------------------------- #
def dbhead_forward(x_nchw, params, *, pix_tile=None):
    N, C, H, W = x_nchw.shape
    C4 = C // 4
    M = N * H * W

    # ---- wrapper glue: NCHW -> NHWC, zero-pad, lane-dense im2col [M, 9C] ----
    x_nhwc = jnp.transpose(x_nchw, (0, 2, 3, 1)).astype(jnp.float32)
    x_pad = jnp.pad(x_nhwc, ((0, 0), (1, 1), (1, 1), (0, 0)))
    xcols = jnp.concatenate(
        [x_pad[:, ky:ky + H, kx:kx + W, :] for ky in range(3) for kx in range(3)],
        axis=-1).reshape(M, 9 * C)

    # ---- fused weights (branch / offset fusion decided here, not in-kernel) ----
    # conv1: rows = (tap k = ky*3+kx, ci), cols = (branch, co); threshold bias=False.
    w1 = jnp.concatenate([params['w1b'].reshape(9 * C, C4),
                          params['w1t'].reshape(9 * C, C4)], axis=1)        # [9C, 2C4]
    b1 = jnp.concatenate([params['b1b'],
                          jnp.zeros((1, C4), jnp.float32)], axis=1)         # [1, 2C4]

    # deconv1: block-diag over branches; per-branch cols = (ab offset, co).
    def flat_deconv1(w):                      # [4(ab), C4, C4] -> [C4, 4*C4]
        return jnp.transpose(w, (1, 0, 2)).reshape(C4, 4 * C4)
    w2 = _block_diag([flat_deconv1(params['w2b']),
                      flat_deconv1(params['w2t'])])                         # [2C4, 8C4]
    b2 = jnp.concatenate([jnp.tile(params['b2b'], (1, 4)),
                          jnp.tile(params['b2t'], (1, 4))], axis=1)         # [1, 8C4]

    # deconv2: 8 diagonal blocks (branch-major, ab-minor), cols = (br, ab, cd).
    w3 = _block_diag([params['w3b']] * 4 + [params['w3t']] * 4)             # [8C4, 32]
    b3 = jnp.concatenate([jnp.tile(params['b3b'], (1, 16)),
                          jnp.tile(params['b3t'], (1, 16))], axis=1)        # [1, 32]

    if pix_tile is None:
        pix_tile = _pick_pix_tile(M)
    assert M % pix_tile == 0, (M, pix_tile)
    assert pix_tile % 8 == 0 or pix_tile == M, pix_tile
    grid = (M // pix_tile,)

    cp_reduce = pltpu.CompilerParams(dimension_semantics=("arbitrary",),
                                     vmem_limit_bytes=VMEM_LIMIT_BYTES)
    cp_parallel = pltpu.CompilerParams(dimension_semantics=("parallel",),
                                       vmem_limit_bytes=VMEM_LIMIT_BYTES)

    # ---- pass 1: conv1 (fused branches) + BN1 stats ----
    y1, stats1 = pl.pallas_call(
        _conv1_kernel,
        grid=grid,
        in_specs=[
            pl.BlockSpec((pix_tile, 9 * C), lambda i: (i, 0)),
            pl.BlockSpec((9 * C, 2 * C4), lambda i: (0, 0)),
            pl.BlockSpec((1, 2 * C4), lambda i: (0, 0)),
        ],
        out_specs=(
            pl.BlockSpec((pix_tile, 2 * C4), lambda i: (i, 0)),
            pl.BlockSpec((2, 2 * C4), lambda i: (0, 0)),
        ),
        out_shape=(
            jax.ShapeDtypeStruct((M, 2 * C4), jnp.float32),
            jax.ShapeDtypeStruct((2, 2 * C4), jnp.float32),
        ),
        compiler_params=cp_reduce,
    )(xcols, w1, b1)

    bn1 = _bn_affine(stats1, M)                                             # [2, 2C4]

    # ---- pass 2: BN1 + ReLU + deconv1 (branches x 4 offsets fused) + BN2 stats ----
    h2, stats2 = pl.pallas_call(
        _deconv1_kernel,
        grid=grid,
        in_specs=[
            pl.BlockSpec((pix_tile, 2 * C4), lambda i: (i, 0)),
            pl.BlockSpec((2, 2 * C4), lambda i: (0, 0)),
            pl.BlockSpec((2 * C4, 8 * C4), lambda i: (0, 0)),
            pl.BlockSpec((1, 8 * C4), lambda i: (0, 0)),
        ],
        out_specs=(
            pl.BlockSpec((pix_tile, 8 * C4), lambda i: (i, 0)),
            pl.BlockSpec((2, 8 * C4), lambda i: (0, 0)),
        ),
        out_shape=(
            jax.ShapeDtypeStruct((M, 8 * C4), jnp.float32),
            jax.ShapeDtypeStruct((2, 8 * C4), jnp.float32),
        ),
        compiler_params=cp_reduce,
    )(y1, bn1, w2, b2)

    # BN2 stats are over the whole 2Hx2W map: combine the 4 (a,b) offset groups.
    s2 = stats2.reshape(2, 2, 4, C4).sum(axis=2).reshape(2, 2 * C4)
    bn2_bc = _bn_affine(s2, 4 * M)                                          # [2, 2C4]
    bn2 = jnp.tile(bn2_bc.reshape(2, 2, 1, C4), (1, 1, 4, 1)).reshape(2, 8 * C4)

    # ---- pass 3: BN2 + ReLU + deconv2 + sigmoids + fused output ----
    out_flat = pl.pallas_call(
        _deconv2_kernel,
        grid=grid,
        in_specs=[
            pl.BlockSpec((pix_tile, 8 * C4), lambda i: (i, 0)),
            pl.BlockSpec((2, 8 * C4), lambda i: (0, 0)),
            pl.BlockSpec((8 * C4, 32), lambda i: (0, 0)),
            pl.BlockSpec((1, 32), lambda i: (0, 0)),
        ],
        out_specs=pl.BlockSpec((pix_tile, 48), lambda i: (i, 0)),
        out_shape=jax.ShapeDtypeStruct((M, 48), jnp.float32),
        compiler_params=cp_parallel,
    )(h2, bn2, w3, b3)

    # ---- un-block the 16 sub-pixel positions back to NCHW [N, 3, 4H, 4W] ----
    def unblock(flat16):                       # [M, 16] -> [N, 4H, 4W]
        t = flat16.reshape(N, H, W, 2, 2, 2, 2)          # n, i, j, a, b, c, d
        t = jnp.transpose(t, (0, 1, 3, 5, 2, 4, 6))      # n, i, a, c, j, b, d
        return t.reshape(N, 4 * H, 4 * W)

    return jnp.stack([unblock(out_flat[:, 0:16]),
                      unblock(out_flat[:, 16:32]),
                      unblock(out_flat[:, 32:48])], axis=1)


# --------------------------------------------------------------------------- #
# Pure-JAX reference (NHWC convs via lax) for correctness checking
# --------------------------------------------------------------------------- #
def reference_forward(x_nchw, params):
    N, C, H, W = x_nchw.shape
    C4 = C // 4
    x = jnp.transpose(x_nchw, (0, 2, 3, 1)).astype(jnp.float32)

    def bn_relu(y):
        m = jnp.mean(y, axis=(0, 1, 2), keepdims=True)
        v = jnp.mean((y - m) ** 2, axis=(0, 1, 2), keepdims=True)
        return jnp.maximum((y - m) / jnp.sqrt(v + BN_EPS) * BN_GAMMA + BN_BETA, 0.0)

    def deconv2x2(h, w_abco, bias):            # h [N,h,w,Ci], w [2,2,Ci,Co]
        y = jnp.einsum('nhwc,abco->nhawbo', h, w_abco,
                       precision=lax.Precision.HIGHEST)
        n, hh, _, ww, _, co = y.shape
        return y.reshape(n, 2 * hh, 2 * ww, co) + bias

    def branch(w1, b1, w2, b2, w3, b3):
        y1 = lax.conv_general_dilated(
            x, w1.reshape(3, 3, C, C4), window_strides=(1, 1), padding='SAME',
            dimension_numbers=('NHWC', 'HWIO', 'NHWC'),
            precision=lax.Precision.HIGHEST)
        if b1 is not None:
            y1 = y1 + b1.reshape(1, 1, 1, C4)
        h1 = bn_relu(y1)
        h2 = bn_relu(deconv2x2(h1, w2.reshape(2, 2, C4, C4),
                               b2.reshape(1, 1, 1, C4)))
        z = deconv2x2(h2, jnp.transpose(w3, (1, 0)).reshape(2, 2, C4, 1),
                      b3.reshape(1, 1, 1, 1))
        return 1.0 / (1.0 + jnp.exp(-z))

    binary = branch(params['w1b'], params['b1b'], params['w2b'], params['b2b'],
                    params['w3b'], params['b3b'])
    thresh = branch(params['w1t'], None, params['w2t'], params['b2t'],
                    params['w3t'], params['b3t'])
    apx = 1.0 / (1.0 + jnp.exp(-K_DB * (binary - thresh)))
    out = jnp.concatenate([binary, thresh, apx], axis=-1)   # [N, 4H, 4W, 3]
    return jnp.transpose(out, (0, 3, 1, 2))                 # NCHW


# --------------------------------------------------------------------------- #
# Deterministic synthetic weights (kaiming-normal convs, uniform biases)
# --------------------------------------------------------------------------- #
def init_params(key, C):
    C4 = C // 4
    ks = jax.random.split(key, 11)

    def kn(k, shape, fan_in):
        return jax.random.normal(k, shape, jnp.float32) * math.sqrt(2.0 / fan_in)

    def ub(k, shape, fan_in):
        b = 1.0 / math.sqrt(fan_in)
        return jax.random.uniform(k, shape, jnp.float32, -b, b)

    p = {}
    # binarize branch
    p['w1b'] = kn(ks[0], (9, C, C4), C * 9)      # Conv2d weight (per-tap, [in,out])
    p['b1b'] = ub(ks[1], (1, C4), C * 9)         # Conv2d bias (default bias=True)
    p['w2b'] = kn(ks[2], (4, C4, C4), C4 * 4)    # ConvTranspose2d weight [ab, in, out]
    p['b2b'] = ub(ks[3], (1, C4), C4 * 4)
    p['w3b'] = kn(ks[4], (C4, 4), 1 * 4)         # ConvTranspose2d weight [in, cd]
    p['b3b'] = ub(ks[5], (1, 1), C4 * 4)
    # threshold branch (Conv2d has bias=False)
    p['w1t'] = kn(ks[6], (9, C, C4), C * 9)
    p['w2t'] = kn(ks[7], (4, C4, C4), C4 * 4)
    p['b2t'] = ub(ks[8], (1, C4), C4 * 4)
    p['w3t'] = kn(ks[9], (C4, 4), 1 * 4)
    p['b3t'] = ub(ks[10], (1, 1), C4 * 4)
    return p


if __name__ == "__main__":
    key = jax.random.PRNGKey(0)
    kx_, kp = jax.random.split(key)

    N, C, H, W = 2, 16, 16, 16                  # in_chans=16 -> in_chans//4 = 4
    x = jax.random.normal(kx_, (N, C, H, W), jnp.float32)
    params = init_params(kp, C)

    ref = reference_forward(x, params)

    # auto tiling (single tile at this toy size)
    out_auto = jax.block_until_ready(jax.jit(lambda a: dbhead_forward(a, params))(x))
    # forced 4-step grids: exercises pipelining + cross-tile BN stat accumulation
    out_tiled = jax.block_until_ready(
        jax.jit(lambda a: dbhead_forward(a, params, pix_tile=128))(x))

    assert out_auto.shape == (N, 3, 4 * H, 4 * W), out_auto.shape
    for name, out in (("auto", out_auto), ("tiled", out_tiled)):
        err = float(jnp.max(jnp.abs(out - ref)))
        assert jnp.allclose(out, ref, atol=2e-3, rtol=2e-3), \
            f"{name}: max abs err = {err}"

    print("KERNEL_OK")
</pallas_src>

<mosaic_0001>
module attributes {stable_mosaic.version = 11 : i64} {
  func.func @_conv1_kernel(%arg0: i32, %arg1: memref<512x144xf32, #tpu.memory_space<vmem>>, %arg2: memref<144x8xf32, #tpu.memory_space<vmem>>, %arg3: memref<1x8xf32, #tpu.memory_space<vmem>>, %arg4: memref<512x8xf32, #tpu.memory_space<vmem>>, %arg5: memref<2x8xf32, #tpu.memory_space<vmem>>) attributes {dimension_semantics = [#tpu.dimension_semantics<arbitrary>], iteration_bounds = array<i64: 1>, scalar_prefetch = 0 : i64, scratch_operands = 0 : i64, tpu.core_type = #tpu.core_type<tc>, window_params = [{transform_indices = @transform_0, window_bounds = array<i64: 512, 144>}, {pipeline_mode = #tpu.pipeline_mode<synchronous>, transform_indices = @transform_1, window_bounds = array<i64: 144, 8>}, {pipeline_mode = #tpu.pipeline_mode<synchronous>, transform_indices = @transform_2, window_bounds = array<i64: 1, 8>}, {transform_indices = @transform_3, window_bounds = array<i64: 512, 8>}, {pipeline_mode = #tpu.pipeline_mode<synchronous>, transform_indices = @transform_4, window_bounds = array<i64: 2, 8>}]} {
    %c0 = arith.constant 0 : index
    %c0_0 = arith.constant 0 : index
    %0 = vector.load %arg1[%c0, %c0_0] : memref<512x144xf32, #tpu.memory_space<vmem>>, vector<512x144xf32>
    %c0_1 = arith.constant 0 : index
    %c0_2 = arith.constant 0 : index
    %1 = vector.load %arg2[%c0_1, %c0_2] : memref<144x8xf32, #tpu.memory_space<vmem>>, vector<144x8xf32>
    %cst = arith.constant dense<0.000000e+00> : vector<512x8xf32>
    %2 = tpu.matmul %0, %1, %cst {dimension_numbers = #tpu.dot_dimension_numbers<[1], [0], [0], [1], [0, 0, 1, 1], [], []>} : vector<512x144xf32>, vector<144x8xf32>, vector<512x8xf32> -> vector<512x8xf32>
    %c0_3 = arith.constant 0 : index
    %c0_4 = arith.constant 0 : index
    %3 = vector.load %arg3[%c0_3, %c0_4] : memref<1x8xf32, #tpu.memory_space<vmem>>, vector<1x8xf32>
    %4 = vector.broadcast %3 : vector<1x8xf32> to vector<512x8xf32>
    %5 = arith.addf %2, %4 : vector<512x8xf32>
    %c0_5 = arith.constant 0 : index
    %c0_6 = arith.constant 0 : index
    %6 = vector.load %arg4[%c0_5, %c0_6] : memref<512x8xf32, #tpu.memory_space<vmem>>, vector<512x8xf32>
    tpu.vector_store %arg4[%c0_5, %c0_6], %5 {strides = array<i32>} : memref<512x8xf32, #tpu.memory_space<vmem>>, vector<512x8xf32>,
    %c0_i32 = arith.constant 0 : i32
    %7 = arith.cmpi eq, %arg0, %c0_i32 : i32
    %8 = arith.extui %7 : i1 to i32
    %c0_i32_7 = arith.constant 0 : i32
    %9 = arith.cmpi ne, %8, %c0_i32_7 : i32
    scf.if %9 {
      %cst_14 = arith.constant 0.000000e+00 : f32
      %19 = vector.broadcast %cst_14 : f32 to vector<2x8xf32>
      %c0_15 = arith.constant 0 : index
      %c0_16 = arith.constant 0 : index
      %20 = vector.load %arg5[%c0_15, %c0_16] : memref<2x8xf32, #tpu.memory_space<vmem>>, vector<2x8xf32>
      tpu.vector_store %arg5[%c0_15, %c0_16], %19 {strides = array<i32>} : memref<2x8xf32, #tpu.memory_space<vmem>>, vector<2x8xf32>,
    } else {
    }
    %c0_8 = arith.constant 0 : index
    %c0_9 = arith.constant 0 : index
    %10 = vector.load %arg5[%c0_8, %c0_9] : memref<2x8xf32, #tpu.memory_space<vmem>>, vector<2x8xf32>
    %cst_10 = arith.constant dense<0.000000e+00> : vector<8xf32>
    %11 = vector.multi_reduction <add>, %5, %cst_10 [0] : vector<512x8xf32> to vector<8xf32>
    %12 = vector.shape_cast %11 : vector<8xf32> to vector<1x8xf32>
    %13 = arith.mulf %5, %5 : vector<512x8xf32>
    %cst_11 = arith.constant dense<0.000000e+00> : vector<8xf32>
    %14 = vector.multi_reduction <add>, %13, %cst_11 [0] : vector<512x8xf32> to vector<8xf32>
    %15 = vector.shape_cast %14 : vector<8xf32> to vector<1x8xf32>
    %16 = tpu.concatenate %12, %15 in 0 : vector<1x8xf32>, vector<1x8xf32> -> vector<2x8xf32>
    %17 = arith.addf %10, %16 : vector<2x8xf32>
    %c0_12 = arith.constant 0 : index
    %c0_13 = arith.constant 0 : index
    %18 = vector.load %arg5[%c0_12, %c0_13] : memref<2x8xf32, #tpu.memory_space<vmem>>, vector<2x8xf32>
    tpu.vector_store %arg5[%c0_12, %c0_13], %17 {strides = array<i32>} : memref<2x8xf32, #tpu.memory_space<vmem>>, vector<2x8xf32>,
    return
  }
  func.func @transform_0(%arg0: i32) -> (i32, i32) {
    %c0_i32 = arith.constant 0 : i32
    %c0_i32_0 = arith.constant 0 : i32
    return %arg0, %c0_i32 : i32, i32
  }
  func.func @transform_1(%arg0: i32) -> (i32, i32) {
    %c0_i32 = arith.constant 0 : i32
    %c0_i32_0 = arith.constant 0 : i32
    %c0_i32_1 = arith.constant 0 : i32
    return %c0_i32, %c0_i32_0 : i32, i32
  }
  func.func @transform_2(%arg0: i32) -> (i32, i32) {
    %c0_i32 = arith.constant 0 : i32
    %c0_i32_0 = arith.constant 0 : i32
    %c0_i32_1 = arith.constant 0 : i32
    return %c0_i32, %c0_i32_0 : i32, i32
  }
  func.func @transform_3(%arg0: i32) -> (i32, i32) {
    %c0_i32 = arith.constant 0 : i32
    %c0_i32_0 = arith.constant 0 : i32
    return %arg0, %c0_i32 : i32, i32
  }
  func.func @transform_4(%arg0: i32) -> (i32, i32) {
    %c0_i32 = arith.constant 0 : i32
    %c0_i32_0 = arith.constant 0 : i32
    %c0_i32_1 = arith.constant 0 : i32
    return %c0_i32, %c0_i32_0 : i32, i32
  }
}

module attributes {stable_mosaic.version = 11 : i64} {
  func.func @_deconv1_kernel(%arg0: i32, %arg1: memref<512x8xf32, #tpu.memory_space<vmem>>, %arg2: memref<2x8xf32, #tpu.memory_space<vmem>>, %arg3: memref<8x32xf32, #tpu.memory_space<vmem>>, %arg4: memref<1x32xf32, #tpu.memory_space<vmem>>, %arg5: memref<512x32xf32, #tpu.memory_space<vmem>>, %arg6: memref<2x32xf32, #tpu.memory_space<vmem>>) attributes {dimension_semantics = [#tpu.dimension_semantics<arbitrary>], iteration_bounds = array<i64: 1>, scalar_prefetch = 0 : i64, scratch_operands = 0 : i64, tpu.core_type = #tpu.core_type<tc>, window_params = [{transform_indices = @transform_0, window_bounds = array<i64: 512, 8>}, {pipeline_mode = #tpu.pipeline_mode<synchronous>, transform_indices = @transform_1, window_bounds = array<i64: 2, 8>}, {pipeline_mode = #tpu.pipeline_mode<synchronous>, transform_indices = @transform_2, window_bounds = array<i64: 8, 32>}, {pipeline_mode = #tpu.pipeline_mode<synchronous>, transform_indices = @transform_3, window_bounds = array<i64: 1, 32>}, {transform_indices = @transform_4, window_bounds = array<i64: 512, 32>}, {pipeline_mode = #tpu.pipeline_mode<synchronous>, transform_indices = @transform_5, window_bounds = array<i64: 2, 32>}]} {
    %c0 = arith.constant 0 : index
    %c0_0 = arith.constant 0 : index
    %0 = vector.load %arg1[%c0, %c0_0] : memref<512x8xf32, #tpu.memory_space<vmem>>, vector<512x8xf32>
    %c0_1 = arith.constant 0 : index
    %c0_2 = arith.constant 0 : index
    %1 = vector.load %arg2[%c0_1, %c0_2] : memref<2x8xf32, #tpu.memory_space<vmem>>, vector<1x8xf32>
    %2 = vector.broadcast %1 : vector<1x8xf32> to vector<512x8xf32>
    %3 = arith.mulf %0, %2 : vector<512x8xf32>
    %c1 = arith.constant 1 : index
    %c0_3 = arith.constant 0 : index
    %4 = vector.load %arg2[%c1, %c0_3] : memref<2x8xf32, #tpu.memory_space<vmem>>, vector<1x8xf32>
    %5 = vector.broadcast %4 : vector<1x8xf32> to vector<512x8xf32>
    %6 = arith.addf %3, %5 : vector<512x8xf32>
    %cst = arith.constant 0.000000e+00 : f32
    %7 = vector.broadcast %cst : f32 to vector<512x8xf32>
    %8 = arith.maximumf %6, %7 : vector<512x8xf32>
    %c0_4 = arith.constant 0 : index
    %c0_5 = arith.constant 0 : index
    %9 = vector.load %arg3[%c0_4, %c0_5] : memref<8x32xf32, #tpu.memory_space<vmem>>, vector<8x32xf32>
    %cst_6 = arith.constant dense<0.000000e+00> : vector<512x32xf32>
    %10 = tpu.matmul %8, %9, %cst_6 {dimension_numbers = #tpu.dot_dimension_numbers<[1], [0], [0], [1], [0, 0, 1, 1], [], []>} : vector<512x8xf32>, vector<8x32xf32>, vector<512x32xf32> -> vector<512x32xf32>
    %c0_7 = arith.constant 0 : index
    %c0_8 = arith.constant 0 : index
    %11 = vector.load %arg4[%c0_7, %c0_8] : memref<1x32xf32, #tpu.memory_space<vmem>>, vector<1x32xf32>
    %12 = vector.broadcast %11 : vector<1x32xf32> to vector<512x32xf32>
    %13 = arith.addf %10, %12 : vector<512x32xf32>
    %c0_9 = arith.constant 0 : index
    %c0_10 = arith.constant 0 : index
    %14 = vector.load %arg5[%c0_9, %c0_10] : memref<512x32xf32, #tpu.memory_space<vmem>>, vector<512x32xf32>
    tpu.vector_store %arg5[%c0_9, %c0_10], %13 {strides = array<i32>} : memref<512x32xf32, #tpu.memory_space<vmem>>, vector<512x32xf32>,
    %c0_i32 = arith.constant 0 : i32
    %15 = arith.cmpi eq, %arg0, %c0_i32 : i32
    %16 = arith.extui %15 : i1 to i32
    %c0_i32_11 = arith.constant 0 : i32
    %17 = arith.cmpi ne, %16, %c0_i32_11 : i32
    scf.if %17 {
      %cst_18 = arith.constant 0.000000e+00 : f32
      %27 = vector.broadcast %cst_18 : f32 to vector<2x32xf32>
      %c0_19 = arith.constant 0 : index
      %c0_20 = arith.constant 0 : index
      %28 = vector.load %arg6[%c0_19, %c0_20] : memref<2x32xf32, #tpu.memory_space<vmem>>, vector<2x32xf32>
      tpu.vector_store %arg6[%c0_19, %c0_20], %27 {strides = array<i32>} : memref<2x32xf32, #tpu.memory_space<vmem>>, vector<2x32xf32>,
    } else {
    }
    %c0_12 = arith.constant 0 : index
    %c0_13 = arith.constant 0 : index
    %18 = vector.load %arg6[%c0_12, %c0_13] : memref<2x32xf32, #tpu.memory_space<vmem>>, vector<2x32xf32>
    %cst_14 = arith.constant dense<0.000000e+00> : vector<32xf32>
    %19 = vector.multi_reduction <add>, %13, %cst_14 [0] : vector<512x32xf32> to vector<32xf32>
    %20 = vector.shape_cast %19 : vector<32xf32> to vector<1x32xf32>
    %21 = arith.mulf %13, %13 : vector<512x32xf32>
    %cst_15 = arith.constant dense<0.000000e+00> : vector<32xf32>
    %22 = vector.multi_reduction <add>, %21, %cst_15 [0] : vector<512x32xf32> to vector<32xf32>
    %23 = vector.shape_cast %22 : vector<32xf32> to vector<1x32xf32>
    %24 = tpu.concatenate %20, %23 in 0 : vector<1x32xf32>, vector<1x32xf32> -> vector<2x32xf32>
    %25 = arith.addf %18, %24 : vector<2x32xf32>
    %c0_16 = arith.constant 0 : index
    %c0_17 = arith.constant 0 : index
    %26 = vector.load %arg6[%c0_16, %c0_17] : memref<2x32xf32, #tpu.memory_space<vmem>>, vector<2x32xf32>
    tpu.vector_store %arg6[%c0_16, %c0_17], %25 {strides = array<i32>} : memref<2x32xf32, #tpu.memory_space<vmem>>, vector<2x32xf32>,
    return
  }
  func.func @transform_0(%arg0: i32) -> (i32, i32) {
    %c0_i32 = arith.constant 0 : i32
    %c0_i32_0 = arith.constant 0 : i32
    return %arg0, %c0_i32 : i32, i32
  }
  func.func @transform_1(%arg0: i32) -> (i32, i32) {
    %c0_i32 = arith.constant 0 : i32
    %c0_i32_0 = arith.constant 0 : i32
    %c0_i32_1 = arith.constant 0 : i32
    return %c0_i32, %c0_i32_0 : i32, i32
  }
  func.func @transform_2(%arg0: i32) -> (i32, i32) {
    %c0_i32 = arith.constant 0 : i32
    %c0_i32_0 = arith.constant 0 : i32
    %c0_i32_1 = arith.constant 0 : i32
    return %c0_i32, %c0_i32_0 : i32, i32
  }
  func.func @transform_3(%arg0: i32) -> (i32, i32) {
    %c0_i32 = arith.constant 0 : i32
    %c0_i32_0 = arith.constant 0 : i32
    %c0_i32_1 = arith.constant 0 : i32
    return %c0_i32, %c0_i32_0 : i32, i32
  }
  func.func @transform_4(%arg0: i32) -> (i32, i32) {
    %c0_i32 = arith.constant 0 : i32
    %c0_i32_0 = arith.constant 0 : i32
    return %arg0, %c0_i32 : i32, i32
  }
  func.func @transform_5(%arg0: i32) -> (i32, i32) {
    %c0_i32 = arith.constant 0 : i32
    %c0_i32_0 = arith.constant 0 : i32
    %c0_i32_1 = arith.constant 0 : i32
    return %c0_i32, %c0_i32_0 : i32, i32
  }
}

module attributes {stable_mosaic.version = 11 : i64} {
  func.func @_deconv2_kernel(%arg0: i32, %arg1: memref<512x32xf32, #tpu.memory_space<vmem>>, %arg2: memref<2x32xf32, #tpu.memory_space<vmem>>, %arg3: memref<32x32xf32, #tpu.memory_space<vmem>>, %arg4: memref<1x32xf32, #tpu.memory_space<vmem>>, %arg5: memref<512x48xf32, #tpu.memory_space<vmem>>) attributes {dimension_semantics = [#tpu.dimension_semantics<parallel>], iteration_bounds = array<i64: 1>, scalar_prefetch = 0 : i64, scratch_operands = 0 : i64, tpu.core_type = #tpu.core_type<tc>, window_params = [{transform_indices = @transform_0, window_bounds = array<i64: 512, 32>}, {pipeline_mode = #tpu.pipeline_mode<synchronous>, transform_indices = @transform_1, window_bounds = array<i64: 2, 32>}, {pipeline_mode = #tpu.pipeline_mode<synchronous>, transform_indices = @transform_2, window_bounds = array<i64: 32, 32>}, {pipeline_mode = #tpu.pipeline_mode<synchronous>, transform_indices = @transform_3, window_bounds = array<i64: 1, 32>}, {transform_indices = @transform_4, window_bounds = array<i64: 512, 48>}]} {
    %c0 = arith.constant 0 : index
    %c0_0 = arith.constant 0 : index
    %0 = vector.load %arg1[%c0, %c0_0] : memref<512x32xf32, #tpu.memory_space<vmem>>, vector<512x32xf32>
    %c0_1 = arith.constant 0 : index
    %c0_2 = arith.constant 0 : index
    %1 = vector.load %arg2[%c0_1, %c0_2] : memref<2x32xf32, #tpu.memory_space<vmem>>, vector<1x32xf32>
    %2 = vector.broadcast %1 : vector<1x32xf32> to vector<512x32xf32>
    %3 = arith.mulf %0, %2 : vector<512x32xf32>
    %c1 = arith.constant 1 : index
    %c0_3 = arith.constant 0 : index
    %4 = vector.load %arg2[%c1, %c0_3] : memref<2x32xf32, #tpu.memory_space<vmem>>, vector<1x32xf32>
    %5 = vector.broadcast %4 : vector<1x32xf32> to vector<512x32xf32>
    %6 = arith.addf %3, %5 : vector<512x32xf32>
    %cst = arith.constant 0.000000e+00 : f32
    %7 = vector.broadcast %cst : f32 to vector<512x32xf32>
    %8 = arith.maximumf %6, %7 : vector<512x32xf32>
    %c0_4 = arith.constant 0 : index
    %c0_5 = arith.constant 0 : index
    %9 = vector.load %arg3[%c0_4, %c0_5] : memref<32x32xf32, #tpu.memory_space<vmem>>, vector<32x32xf32>
    %cst_6 = arith.constant dense<0.000000e+00> : vector<512x32xf32>
    %10 = tpu.matmul %8, %9, %cst_6 {dimension_numbers = #tpu.dot_dimension_numbers<[1], [0], [0], [1], [0, 0, 1, 1], [], []>} : vector<512x32xf32>, vector<32x32xf32>, vector<512x32xf32> -> vector<512x32xf32>
    %c0_7 = arith.constant 0 : index
    %c0_8 = arith.constant 0 : index
    %11 = vector.load %arg4[%c0_7, %c0_8] : memref<1x32xf32, #tpu.memory_space<vmem>>, vector<1x32xf32>
    %12 = vector.broadcast %11 : vector<1x32xf32> to vector<512x32xf32>
    %13 = arith.addf %10, %12 : vector<512x32xf32>
    %cst_9 = arith.constant 0.000000e+00 : f32
    %14 = vector.broadcast %cst_9 : f32 to vector<512x32xf32>
    %15 = arith.subf %14, %13 : vector<512x32xf32>
    %16 = math.exp %15 : vector<512x32xf32>
    %cst_10 = arith.constant 1.000000e+00 : f32
    %17 = vector.broadcast %cst_10 : f32 to vector<512x32xf32>
    %18 = arith.addf %17, %16 : vector<512x32xf32>
    %cst_11 = arith.constant 1.000000e+00 : f32
    %19 = vector.broadcast %cst_11 : f32 to vector<512x32xf32>
    %20 = arith.divf %19, %18 : vector<512x32xf32>
    %21 = vector.extract_strided_slice %20 {offsets = [0, 0], sizes = [512, 16], strides = [1, 1]} : vector<512x32xf32> to vector<512x16xf32>
    %22 = vector.extract_strided_slice %20 {offsets = [0, 16], sizes = [512, 16], strides = [1, 1]} : vector<512x32xf32> to vector<512x16xf32>
    %23 = arith.subf %21, %22 : vector<512x16xf32>
    %cst_12 = arith.constant -5.000000e+01 : f32
    %24 = vector.broadcast %cst_12 : f32 to vector<512x16xf32>
    %25 = arith.mulf %24, %23 : vector<512x16xf32>
    %26 = math.exp %25 : vector<512x16xf32>
    %cst_13 = arith.constant 1.000000e+00 : f32
    %27 = vector.broadcast %cst_13 : f32 to vector<512x16xf32>
    %28 = arith.addf %27, %26 : vector<512x16xf32>
    %cst_14 = arith.constant 1.000000e+00 : f32
    %29 = vector.broadcast %cst_14 : f32 to vector<512x16xf32>
    %30 = arith.divf %29, %28 : vector<512x16xf32>
    %31 = tpu.concatenate %21, %22, %30 in 1 : vector<512x16xf32>, vector<512x16xf32>, vector<512x16xf32> -> vector<512x48xf32>
    %c0_15 = arith.constant 0 : index
    %c0_16 = arith.constant 0 : index
    %32 = vector.load %arg5[%c0_15, %c0_16] : memref<512x48xf32, #tpu.memory_space<vmem>>, vector<512x48xf32>
    tpu.vector_store %arg5[%c0_15, %c0_16], %31 {strides = array<i32>} : memref<512x48xf32, #tpu.memory_space<vmem>>, vector<512x48xf32>,
    return
  }
  func.func @transform_0(%arg0: i32) -> (i32, i32) {
    %c0_i32 = arith.constant 0 : i32
    %c0_i32_0 = arith.constant 0 : i32
    return %arg0, %c0_i32 : i32, i32
  }
  func.func @transform_1(%arg0: i32) -> (i32, i32) {
    %c0_i32 = arith.constant 0 : i32
    %c0_i32_0 = arith.constant 0 : i32
    %c0_i32_1 = arith.constant 0 : i32
    return %c0_i32, %c0_i32_0 : i32, i32
  }
  func.func @transform_2(%arg0: i32) -> (i32, i32) {
    %c0_i32 = arith.constant 0 : i32
    %c0_i32_0 = arith.constant 0 : i32
    %c0_i32_1 = arith.constant 0 : i32
    return %c0_i32, %c0_i32_0 : i32, i32
  }
  func.func @transform_3(%arg0: i32) -> (i32, i32) {
    %c0_i32 = arith.constant 0 : i32
    %c0_i32_0 = arith.constant 0 : i32
    %c0_i32_1 = arith.constant 0 : i32
    return %c0_i32, %c0_i32_0 : i32, i32
  }
  func.func @transform_4(%arg0: i32) -> (i32, i32) {
    %c0_i32 = arith.constant 0 : i32
    %c0_i32_0 = arith.constant 0 : i32
    return %arg0, %c0_i32 : i32, i32
  }
}

</mosaic_0001>

<llo_original>
// kernel: tile.23
$region0: #{tile.23}
  %s0 = inlined_call_operand.vmem [shape: f32[2,2,4,1,1,4], index: 0, kind: input, shape index: {}]
  %s1 = inlined_call_operand.vmem [shape: f32[2,32], index: 1, kind: output, shape index: {}]
  $region1: #{tile.23} parent=0
    #allocation0 [shape = 'u8[4096]{0}', space=vmem, size = 0x1000, scoped, tag = 'scoped mem for output reshape']
    #allocation1 [shape = 'u8[16384]{0}', space=vmem, size = 0x4000, scoped, tag = 'scoped mem for input reshape']
    %s3 = sshll.u32 1, 4
    %s4 = ssub.s32 %s3, 1
    %s5 = smul.addr 4, 3
    %s6 = scalar_lea.vmem %s0, %s5
    %v7 = vld [vmem:[%s6] sm:%s4]
    %s8 = scalar_lea.vmem [#allocation1], 24
    %9 = vst [vmem:[%s8] sm:%s4] %v7
    %s10 = smul.addr 4, 2
    %s11 = scalar_lea.vmem %s0, %s10
    %v12 = vld [vmem:[%s11] sm:%s4]
    %s13 = scalar_lea.vmem [#allocation1], 16
    %14 = vst [vmem:[%s13] sm:%s4] %v12
    %s15 = scalar_lea.vmem %s0, 4
    %v16 = vld [vmem:[%s15] sm:%s4]
    %s17 = scalar_lea.vmem [#allocation1], 8
    %18 = vst [vmem:[%s17] sm:%s4] %v16
    %v19 = vld [vmem:[%s0] sm:%s4]
    %20 = vst [vmem:[#allocation1] sm:%s4] %v19
    %s21 = smov 3
    %v22 = vld [vmem:[#allocation1] ss:$16 sm:%s21]
    %vm23 = vcmask 31744
    %24 = vst.msk [vmem:[#allocation0] sm:$0x3] %vm23, %v22
    %s25 = scalar_lea.vmem [#allocation1], 11
    %s26 = smov 3
    %v27 = vld [vmem:[%s25] ss:$16 sm:%s26]
    %28 = vrot.lane.b32.xlu0 %v27, 28
    %v29 = vpop.permute.xlu0 %28
    %vm30 = vcmask 261344
    %31 = vst.msk [vmem:[#allocation0] sm:$0x3] %vm30, %v29
    %s32 = scalar_lea.vmem [#allocation1], 10
    %s33 = smov 3
    %v34 = vld [vmem:[%s32] ss:$16 sm:%s33]
    %35 = vrot.lane.b32.xlu0 %v34, 24
    %v36 = vpop.permute.xlu0 %35
    %vm37 = vcmask 228544
    %38 = vst.msk [vmem:[#allocation0] sm:$0x3] %vm37, %v36
    %s39 = scalar_lea.vmem [#allocation1], 9
    %s40 = smov 3
    %v41 = vld [vmem:[%s39] ss:$16 sm:%s40]
    %42 = vrot.lane.b32.xlu0 %v41, 20
    %v43 = vpop.permute.xlu0 %42
    %vm44 = vcmask 195744
    %45 = vst.msk [vmem:[#allocation0] sm:$0x3] %vm44, %v43
    %s46 = scalar_lea.vmem [#allocation1], 8
    %s47 = smov 3
    %v48 = vld [vmem:[%s46] ss:$16 sm:%s47]
    %49 = vrot.lane.b32.xlu0 %v48, 16
    %v50 = vpop.permute.xlu0 %49
    %vm51 = vcmask 162944
    %52 = vst.msk [vmem:[#allocation0] sm:$0x3] %vm51, %v50
    %s53 = scalar_lea.vmem [#allocation1], 3
    %s54 = smov 3
    %v55 = vld [vmem:[%s53] ss:$16 sm:%s54]
    %56 = vrot.lane.b32.xlu0 %v55, 12
    %v57 = vpop.permute.xlu0 %56
    %vm58 = vcmask 130144
    %59 = vst.msk [vmem:[#allocation0] sm:$0x3] %vm58, %v57
    %s60 = scalar_lea.vmem [#allocation1], 2
    %s61 = smov 3
    %v62 = vld [vmem:[%s60] ss:$16 sm:%s61]
    %63 = vrot.lane.b32.xlu0 %v62, 8
    %v64 = vpop.permute.xlu0 %63
    %vm65 = vcmask 97344
    %66 = vst.msk [vmem:[#allocation0] sm:$0x3] %vm65, %v64
    %s67 = scalar_lea.vmem [#allocation1], 1
    %s68 = smov 3
    %v69 = vld [vmem:[%s67] ss:$16 sm:%s68]
    %70 = vrot.lane.b32.xlu0 %v69, 4
    %v71 = vpop.permute.xlu0 %70
    %vm72 = vcmask 64544
    %73 = vst.msk [vmem:[#allocation0] sm:$0x3] %vm72, %v71
    %s75 = sshll.u32 1, 2
    %s76 = ssub.s32 %s75, 1
    %v78 = vld [vmem:[#allocation0] sm:%s76]
    %s79 = sshll.u32 1, 2
    %s80 = ssub.s32 %s79, 1
    %81 = vst [vmem:[%s1] sm:%s80] %v78

// kernel: _lambda_.3
$region0: #{_lambda_.3}
  #allocation0 [shape = 'u32[]', space=smem, size = 0x4, offset = 0x4, fixed_abs, tag = 'smem constant byte address 0x4 - core index']
  #allocation1 [shape = 'u32[144,128]{1,0:T(1,128)}', space=vmem, size = 0x12000, scoped, tag = 'internal scratch']
  %s0 = inlined_call_operand.vmem [shape: f32[512,144], index: 0, kind: input, shape index: {}]
  %s1 = inlined_call_operand.vmem [shape: f32[144,8], index: 1, kind: input, shape index: {}]
  %s2 = inlined_call_operand.vmem [shape: f32[1,8], index: 2, kind: input, shape index: {}]
  %s3 = inlined_call_operand.vmem [shape: f32[512,8], index: 3, kind: output, shape index: {0}]
  %s4 = inlined_call_operand.vmem [shape: f32[2,8], index: 4, kind: output, shape index: {1}]
  %5 = xla_tuple %s3, %s4
  %s6 = sld [smem:[#allocation0]]
  $region34: #{_lambda_.3} parent=0
    _
  %s8 = ssub.s32 1, %s6
  %s9 = scalar_select 0, %s8, %s6
  // Predicated region
  $region2: #{_lambda_.3} parent=0 // pred_check
    _
  $region3: #{_lambda_.3} parent=0 // pred_check_branch
    %11 = sbr.rel (0) target = $region5
  $region4: #{_lambda_.3} parent=0 // pred_region
    _
  $region5: #{_lambda_.3} parent=0 // pred_fallthru
    _
  // Predicated region
  $region6: #{_lambda_.3} parent=0 // pred_check
    _
  $region7: #{_lambda_.3} parent=0 // pred_check_branch
    %13 = sbr.rel (0) target = $region9
  $region8: #{_lambda_.3} parent=0 // pred_region
    _
  $region9: #{_lambda_.3} parent=0 // pred_fallthru
    _
  // Predicated region
  $region10: #{_lambda_.3} parent=0 // pred_check
    _
  $region11: #{_lambda_.3} parent=0 // pred_check_branch
    %15 = sbr.rel (0) target = $region13
  $region12: #{_lambda_.3} parent=0 // pred_region
    _
  $region13: #{_lambda_.3} parent=0 // pred_fallthru
    _
  %v16 = vld [vmem:[%s0] sm:$0xff]
  %v17 = vld [vmem:[%s0 + $0x8] sm:$0xff]
  %v18 = vld [vmem:[%s0 + $0x10] sm:$0xff]
  %v19 = vld [vmem:[%s0 + $0x18] sm:$0xff]
  %v20 = vld [vmem:[%s0 + $0x20] sm:$0xff]
  %v21 = vld [vmem:[%s0 + $0x28] sm:$0xff]
  %v22 = vld [vmem:[%s0 + $0x30] sm:$0xff]
  %v23 = vld [vmem:[%s0 + $0x38] sm:$0xff]
  %v24 = vld [vmem:[%s0 + $0x40] sm:$0xff]
  %v25 = vld [vmem:[%s0 + $0x48] sm:$0xff]
  %v26 = vld [vmem:[%s0 + $0x50] sm:$0xff]
  %v27 = vld [vmem:[%s0 + $0x58] sm:$0xff]
  %v28 = vld [vmem:[%s0 + $0x60] sm:$0xff]
  %v29 = vld [vmem:[%s0 + $0x68] sm:$0xff]
  %v30 = vld [vmem:[%s0 + $0x70] sm:$0xff]
  %v31 = vld [vmem:[%s0 + $0x78] sm:$0xff]
  %v32 = vld [vmem:[%s0 + $0x80] sm:$0xff]
  %v33 = vld [vmem:[%s0 + $0x88] sm:$0xff]
  %v34 = vld [vmem:[%s0 + $0x90] sm:$0xff]
  %v35 = vld [vmem:[%s0 + $0x98] sm:$0xff]
  %v36 = vld [vmem:[%s0 + $0xa0] sm:$0xff]
  %v37 = vld [vmem:[%s0 + $0xa8] sm:$0xff]
  %v38 = vld [vmem:[%s0 + $0xb0] sm:$0xff]
  %v39 = vld [vmem:[%s0 + $0xb8] sm:$0xff]
  %v40 = vld [vmem:[%s0 + $0xc0] sm:$0xff]
  %v41 = vld [vmem:[%s0 + $0xc8] sm:$0xff]
  %v42 = vld [vmem:[%s0 + $0xd0] sm:$0xff]
  %v43 = vld [vmem:[%s0 + $0xd8] sm:$0xff]
  %v44 = vld [vmem:[%s0 + $0xe0] sm:$0xff]
  %v45 = vld [vmem:[%s0 + $0xe8] sm:$0xff]
  %v46 = vld [vmem:[%s0 + $0xf0] sm:$0xff]
  %v47 = vld [vmem:[%s0 + $0xf8] sm:$0xff]
  %v48 = vld [vmem:[%s0 + $0x100] sm:$0xff]
  %v49 = vld [vmem:[%s0 + $0x108] sm:$0xff]
  %v50 = vld [vmem:[%s0 + $0x110] sm:$0xff]
  %v51 = vld [vmem:[%s0 + $0x118] sm:$0xff]
  %v52 = vld [vmem:[%s0 + $0x120] sm:$0xff]
  %v53 = vld [vmem:[%s0 + $0x128] sm:$0xff]
  %v54 = vld [vmem:[%s0 + $0x130] sm:$0xff]
  %v55 = vld [vmem:[%s0 + $0x138] sm:$0xff]
  %v56 = vld [vmem:[%s0 + $0x140] sm:$0xff]
  %v57 = vld [vmem:[%s0 + $0x148] sm:$0xff]
  %v58 = vld [vmem:[%s0 + $0x150] sm:$0xff]
  %v59 = vld [vmem:[%s0 + $0x158] sm:$0xff]
  %v60 = vld [vmem:[%s0 + $0x160] sm:$0xff]
  %v61 = vld [vmem:[%s0 + $0x168] sm:$0xff]
  %v62 = vld [vmem:[%s0 + $0x170] sm:$0xff]
  %v63 = vld [vmem:[%s0 + $0x178] sm:$0xff]
  %v64 = vld [vmem:[%s0 + $0x180] sm:$0xff]
  %v65 = vld [vmem:[%s0 + $0x188] sm:$0xff]
  %v66 = vld [vmem:[%s0 + $0x190] sm:$0xff]
  %v67 = vld [vmem:[%s0 + $0x198] sm:$0xff]
  %v68 = vld [vmem:[%s0 + $0x1a0] sm:$0xff]
  %v69 = vld [vmem:[%s0 + $0x1a8] sm:$0xff]
  %v70 = vld [vmem:[%s0 + $0x1b0] sm:$0xff]
  %v71 = vld [vmem:[%s0 + $0x1b8] sm:$0xff]
  %v72 = vld [vmem:[%s0 + $0x1c0] sm:$0xff]
  %v73 = vld [vmem:[%s0 + $0x1c8] sm:$0xff]
  %v74 = vld [vmem:[%s0 + $0x1d0] sm:$0xff]
  %v75 = vld [vmem:[%s0 + $0x1d8] sm:$0xff]
  %v76 = vld [vmem:[%s0 + $0x1e0] sm:$0xff]
  %v77 = vld [vmem:[%s0 + $0x1e8] sm:$0xff]
  %v78 = vld [vmem:[%s0 + $0x1f0] sm:$0xff]
  %v79 = vld [vmem:[%s0 + $0x1f8] sm:$0xff]
  %v80 = vld [vmem:[%s0 + $0x200] sm:$0xff]
  %v81 = vld [vmem:[%s0 + $0x208] sm:$0xff]
  %v82 = vld [vmem:[%s0 + $0x210] sm:$0xff]
  %v83 = vld [vmem:[%s0 + $0x218] sm:$0xff]
  %v84 = vld [vmem:[%s0 + $0x220] sm:$0xff]
  %v85 = vld [vmem:[%s0 + $0x228] sm:$0xff]
  %v86 = vld [vmem:[%s0 + $0x230] sm:$0xff]
  %v87 = vld [vmem:[%s0 + $0x238] sm:$0xff]
  %v88 = vld [vmem:[%s0 + $0x240] sm:$0xff]
  %v89 = vld [vmem:[%s0 + $0x248] sm:$0xff]
  %v90 = vld [vmem:[%s0 + $0x250] sm:$0xff]
  %v91 = vld [vmem:[%s0 + $0x258] sm:$0xff]
  %v92 = vld [vmem:[%s0 + $0x260] sm:$0xff]
  %v93 = vld [vmem:[%s0 + $0x268] sm:$0xff]
  %v94 = vld [vmem:[%s0 + $0x270] sm:$0xff]
  %v95 = vld [vmem:[%s0 + $0x278] sm:$0xff]
  %v96 = vld [vmem:[%s0 + $0x280] sm:$0xff]
  %v97 = vld [vmem:[%s0 + $0x288] sm:$0xff]
  %v98 = vld [vmem:[%s0 + $0x290] sm:$0xff]
  %v99 = vld [vmem:[%s0 + $0x298] sm:$0xff]
  %v100 = vld [vmem:[%s0 + $0x2a0] sm:$0xff]
  %v101 = vld [vmem:[%s0 + $0x2a8] sm:$0xff]
  %v102 = vld [vmem:[%s0 + $0x2b0] sm:$0xff]
  %v103 = vld [vmem:[%s0 + $0x2b8] sm:$0xff]
  %v104 = vld [vmem:[%s0 + $0x2c0] sm:$0xff]
  %v105 = vld [vmem:[%s0 + $0x2c8] sm:$0xff]
  %v106 = vld [vmem:[%s0 + $0x2d0] sm:$0xff]
  %v107 = vld [vmem:[%s0 + $0x2d8] sm:$0xff]
  %v108 = vld [vmem:[%s0 + $0x2e0] sm:$0xff]
  %v109 = vld [vmem:[%s0 + $0x2e8] sm:$0xff]
  %v110 = vld [vmem:[%s0 + $0x2f0] sm:$0xff]
  %v111 = vld [vmem:[%s0 + $0x2f8] sm:$0xff]
  %v112 = vld [vmem:[%s0 + $0x300] sm:$0xff]
  %v113 = vld [vmem:[%s0 + $0x308] sm:$0xff]
  %v114 = vld [vmem:[%s0 + $0x310] sm:$0xff]
  %v115 = vld [vmem:[%s0 + $0x318] sm:$0xff]
  %v116 = vld [vmem:[%s0 + $0x320] sm:$0xff]
  %v117 = vld [vmem:[%s0 + $0x328] sm:$0xff]
  %v118 = vld [vmem:[%s0 + $0x330] sm:$0xff]
  %v119 = vld [vmem:[%s0 + $0x338] sm:$0xff]
  %v120 = vld [vmem:[%s0 + $0x340] sm:$0xff]
  %v121 = vld [vmem:[%s0 + $0x348] sm:$0xff]
  %v122 = vld [vmem:[%s0 + $0x350] sm:$0xff]
  %v123 = vld [vmem:[%s0 + $0x358] sm:$0xff]
  %v124 = vld [vmem:[%s0 + $0x360] sm:$0xff]
  %v125 = vld [vmem:[%s0 + $0x368] sm:$0xff]
  %v126 = vld [vmem:[%s0 + $0x370] sm:$0xff]
  %v127 = vld [vmem:[%s0 + $0x378] sm:$0xff]
  %v128 = vld [vmem:[%s0 + $0x380] sm:$0xff]
  %v129 = vld [vmem:[%s0 + $0x388] sm:$0xff]
  %v130 = vld [vmem:[%s0 + $0x390] sm:$0xff]
  %v131 = vld [vmem:[%s0 + $0x398] sm:$0xff]
  %v132 = vld [vmem:[%s0 + $0x3a0] sm:$0xff]
  %v133 = vld [vmem:[%s0 + $0x3a8] sm:$0xff]
  %v134 = vld [vmem:[%s0 + $0x3b0] sm:$0xff]
  %v135 = vld [vmem:[%s0 + $0x3b8] sm:$0xff]
  %v136 = vld [vmem:[%s0 + $0x3c0] sm:$0xff]
  %v137 = vld [vmem:[%s0 + $0x3c8] sm:$0xff]
  %v138 = vld [vmem:[%s0 + $0x3d0] sm:$0xff]
  %v139 = vld [vmem:[%s0 + $0x3d8] sm:$0xff]
  %v140 = vld [vmem:[%s0 + $0x3e0] sm:$0xff]
  %v141 = vld [vmem:[%s0 + $0x3e8] sm:$0xff]
  %v142 = vld [vmem:[%s0 + $0x3f0] sm:$0xff]
  %v143 = vld [vmem:[%s0 + $0x3f8] sm:$0xff]
  %v144 = vld [vmem:[%s1] sm:$0xff]
  %v145 = vld [vmem:[%s1 + $0x8] sm:$0xff]
  %v146 = vld [vmem:[%s1 + $0x10] sm:$0xff]
  %v147 = vld [vmem:[%s1 + $0x18] sm:$0xff]
  %v148 = vld [vmem:[%s1 + $0x20] sm:$0xff]
  %v149 = vld [vmem:[%s1 + $0x28] sm:$0xff]
  %v150 = vld [vmem:[%s1 + $0x30] sm:$0xff]
  %v151 = vld [vmem:[%s1 + $0x38] sm:$0xff]
  %v152 = vld [vmem:[%s1 + $0x40] sm:$0xff]
  %v153 = vld [vmem:[%s1 + $0x48] sm:$0xff]
  %v154 = vld [vmem:[%s1 + $0x50] sm:$0xff]
  %v155 = vld [vmem:[%s1 + $0x58] sm:$0xff]
  %v156 = vld [vmem:[%s1 + $0x60] sm:$0xff]
  %v157 = vld [vmem:[%s1 + $0x68] sm:$0xff]
  %v158 = vld [vmem:[%s1 + $0x70] sm:$0xff]
  %v159 = vld [vmem:[%s1 + $0x78] sm:$0xff]
  %v160 = vld [vmem:[%s1 + $0x80] sm:$0xff]
  %v161 = vld [vmem:[%s1 + $0x88] sm:$0xff]
  %v162 = vld [vmem:[%s2] sm:$0x1]
  %v164 = vlaneseq
  %v165 = vshrl.u32 %v164, 7
  %v166 = vsub.s32 0, %v165
  %v167 = vrot.slane %v162, %v166
  %vm169 = vcmask 130048
  %v171 = vsel %vm169, %v17, 0
  %v174 = vsel %vm169, %v19, 0
  %v177 = vsel %vm169, %v21, 0
  %v180 = vsel %vm169, %v23, 0
  %v183 = vsel %vm169, %v25, 0
  %v186 = vsel %vm169, %v27, 0
  %v189 = vsel %vm169, %v29, 0
  %v192 = vsel %vm169, %v31, 0
  %v195 = vsel %vm169, %v33, 0
  %v198 = vsel %vm169, %v35, 0
  %v201 = vsel %vm169, %v37, 0
  %v204 = vsel %vm169, %v39, 0
  %v207 = vsel %vm169, %v41, 0
  %v210 = vsel %vm169, %v43, 0
  %v213 = vsel %vm169, %v45, 0
  %v216 = vsel %vm169, %v47, 0
  %v219 = vsel %vm169, %v49, 0
  %v222 = vsel %vm169, %v51, 0
  %v225 = vsel %vm169, %v53, 0
  %v228 = vsel %vm169, %v55, 0
  %v231 = vsel %vm169, %v57, 0
  %v234 = vsel %vm169, %v59, 0
  %v237 = vsel %vm169, %v61, 0
  %v240 = vsel %vm169, %v63, 0
  %v243 = vsel %vm169, %v65, 0
  %v246 = vsel %vm169, %v67, 0
  %v249 = vsel %vm169, %v69, 0
  %v252 = vsel %vm169, %v71, 0
  %v255 = vsel %vm169, %v73, 0
  %v258 = vsel %vm169, %v75, 0
  %v261 = vsel %vm169, %v77, 0
  %v264 = vsel %vm169, %v79, 0
  %v267 = vsel %vm169, %v81, 0
  %v270 = vsel %vm169, %v83, 0
  %v273 = vsel %vm169, %v85, 0
  %v276 = vsel %vm169, %v87, 0
  %v279 = vsel %vm169, %v89, 0
  %v282 = vsel %vm169, %v91, 0
  %v285 = vsel %vm169, %v93, 0
  %v288 = vsel %vm169, %v95, 0
  %v291 = vsel %vm169, %v97, 0
  %v294 = vsel %vm169, %v99, 0
  %v297 = vsel %vm169, %v101, 0
  %v300 = vsel %vm169, %v103, 0
  %v303 = vsel %vm169, %v105, 0
  %v306 = vsel %vm169, %v107, 0
  %v309 = vsel %vm169, %v109, 0
  %v312 = vsel %vm169, %v111, 0
  %v315 = vsel %vm169, %v113, 0
  %v318 = vsel %vm169, %v115, 0
  %v321 = vsel %vm169, %v117, 0
  %v324 = vsel %vm169, %v119, 0
  %v327 = vsel %vm169, %v121, 0
  %v330 = vsel %vm169, %v123, 0
  %v333 = vsel %vm169, %v125, 0
  %v336 = vsel %vm169, %v127, 0
  %v339 = vsel %vm169, %v129, 0
  %v342 = vsel %vm169, %v131, 0
  %v345 = vsel %vm169, %v133, 0
  %v348 = vsel %vm169, %v135, 0
  %v351 = vsel %vm169, %v137, 0
  %v354 = vsel %vm169, %v139, 0
  %v357 = vsel %vm169, %v141, 0
  %v360 = vsel %vm169, %v143, 0
  %362 = vmatprep.subr.mxu0 0.0
  %363 = vmatpush1.msra.mxu0 %v159
  %364 = vmatprep.subr.mxu0 0.0
  %365 = vmatpush1.msra.mxu0 %v158
  %366 = vmatprep.subr.mxu0 0.0
  %367 = vmatpush1.msra.mxu0 %v157
  %368 = vmatprep.subr.mxu0 0.0
  %369 = vmatpush1.msra.mxu0 %v156
  %370 = vmatprep.subr.mxu0 0.0
  %371 = vmatpush1.msra.mxu0 %v155
  %372 = vmatprep.subr.mxu0 0.0
  %373 = vmatpush1.msra.mxu0 %v154
  %374 = vmatprep.subr.mxu0 0.0
  %375 = vmatpush1.msra.mxu0 %v153
  %376 = vmatprep.subr.mxu0 0.0
  %377 = vmatpush1.msra.mxu0 %v152
  %378 = vmatprep.subr.mxu0 0.0
  %379 = vmatpush1.msra.mxu0 %v151
  %380 = vmatprep.subr.mxu0 0.0
  %381 = vmatpush1.msra.mxu0 %v150
  %382 = vmatprep.subr.mxu0 0.0
  %383 = vmatpush1.msra.mxu0 %v149
  %384 = vmatprep.subr.mxu0 0.0
  %385 = vmatpush1.msra.mxu0 %v148
  %386 = vmatprep.subr.mxu0 0.0
  %387 = vmatpush1.msra.mxu0 %v147
  %388 = vmatprep.subr.mxu0 0.0
  %389 = vmatpush1.msra.mxu0 %v146
  %390 = vmatprep.subr.mxu0 0.0
  %391 = vmatpush1.msra.mxu0 %v145
  %392 = vmatprep.subr.mxu0 0.0
  %393 = vmatpush1.msra.mxu0 %v144
  %394 = vmatprep.subr.mxu0 0.0
  %395 = vmatpush2.msra.mxu0 0.0
  %396 = vmatprep.subr.mxu0 0.0
  %397 = vmatpush2.msra.mxu0 0.0
  %398 = vmatprep.subr.mxu0 0.0
  %399 = vmatpush2.msra.mxu0 0.0
  %400 = vmatprep.subr.mxu0 0.0
  %401 = vmatpush2.msra.mxu0 0.0
  %402 = vmatprep.subr.mxu0 0.0
  %403 = vmatpush2.msra.mxu0 0.0
  %404 = vmatprep.subr.mxu0 0.0
  %405 = vmatpush2.msra.mxu0 0.0
  %406 = vmatprep.subr.mxu0 0.0
  %407 = vmatpush2.msra.mxu0 0.0
  %408 = vmatprep.subr.mxu0 0.0
  %409 = vmatpush2.msra.mxu0 0.0
  %410 = vmatprep.subr.mxu0 0.0
  %411 = vmatpush2.msra.mxu0 0.0
  %412 = vmatprep.subr.mxu0 0.0
  %413 = vmatpush2.msra.mxu0 0.0
  %414 = vmatprep.subr.mxu0 0.0
  %415 = vmatpush2.msra.mxu0 0.0
  %416 = vmatprep.subr.mxu0 0.0
  %417 = vmatpush2.msra.mxu0 0.0
  %418 = vmatprep.subr.mxu0 0.0
  %419 = vmatpush2.msra.mxu0 0.0
  %420 = vmatprep.subr.mxu0 0.0
  %421 = vmatpush2.msra.mxu0 0.0
  %422 = vmatprep.subr.mxu0 0.0
  %423 = vmatpush2.msra.mxu0 %v161
  %424 = vmatprep.subr.mxu0 0.0
  %425 = vmatpush2.msra.mxu0 %v160
  %426 = vmatprep.mubr.f32.mxu0 %v171
  %427 = vmatmul.mubr.f32.gmra.mxu0 %v16
  %v428 = vpop.f32.mrf.mxu0
  %v429 = vadd.f32 %v167, %v428
  %v430 = vpop.f32.mrf.mxu0
  %431 = vmatprep.mubr.f32.mxu0 %v174
  %432 = vmatmul.mubr.f32.gmra.mxu0 %v18
  %v433 = vpop.f32.mrf.mxu0
  %v434 = vadd.f32 %v167, %v433
  %v435 = vpop.f32.mrf.mxu0
  %436 = vmatprep.mubr.f32.mxu0 %v177
  %437 = vmatmul.mubr.f32.gmra.mxu0 %v20
  %v438 = vpop.f32.mrf.mxu0
  %v439 = vadd.f32 %v167, %v438
  %v440 = vpop.f32.mrf.mxu0
  %441 = vmatprep.mubr.f32.mxu0 %v180
  %442 = vmatmul.mubr.f32.gmra.mxu0 %v22
  %v443 = vpop.f32.mrf.mxu0
  %v444 = vadd.f32 %v167, %v443
  %v445 = vpop.f32.mrf.mxu0
  %446 = vmatprep.mubr.f32.mxu0 %v183
  %447 = vmatmul.mubr.f32.gmra.mxu0 %v24
  %v448 = vpop.f32.mrf.mxu0
  %v449 = vadd.f32 %v167, %v448
  %v450 = vpop.f32.mrf.mxu0
  %451 = vmatprep.mubr.f32.mxu0 %v186
  %452 = vmatmul.mubr.f32.gmra.mxu0 %v26
  %v453 = vpop.f32.mrf.mxu0
  %v454 = vadd.f32 %v167, %v453
  %v455 = vpop.f32.mrf.mxu0
  %456 = vmatprep.mubr.f32.mxu0 %v189
  %457 = vmatmul.mubr.f32.gmra.mxu0 %v28
  %v458 = vpop.f32.mrf.mxu0
  %v459 = vadd.f32 %v167, %v458
  %v460 = vpop.f32.mrf.mxu0
  %461 = vmatprep.mubr.f32.mxu0 %v192
  %462 = vmatmul.mubr.f32.gmra.mxu0 %v30
  %v463 = vpop.f32.mrf.mxu0
  %v464 = vadd.f32 %v167, %v463
  %v465 = vpop.f32.mrf.mxu0
  %466 = vmatprep.mubr.f32.mxu0 %v195
  %467 = vmatmul.mubr.f32.gmra.mxu0 %v32
  %v468 = vpop.f32.mrf.mxu0
  %v469 = vadd.f32 %v167, %v468
  %v470 = vpop.f32.mrf.mxu0
  %471 = vmatprep.mubr.f32.mxu0 %v198
  %472 = vmatmul.mubr.f32.gmra.mxu0 %v34
  %v473 = vpop.f32.mrf.mxu0
  %v474 = vadd.f32 %v167, %v473
  %v475 = vpop.f32.mrf.mxu0
  %476 = vmatprep.mubr.f32.mxu0 %v201
  %477 = vmatmul.mubr.f32.gmra.mxu0 %v36
  %v478 = vpop.f32.mrf.mxu0
  %v479 = vadd.f32 %v167, %v478
  %v480 = vpop.f32.mrf.mxu0
  %481 = vmatprep.mubr.f32.mxu0 %v204
  %482 = vmatmul.mubr.f32.gmra.mxu0 %v38
  %v483 = vpop.f32.mrf.mxu0
  %v484 = vadd.f32 %v167, %v483
  %v485 = vpop.f32.mrf.mxu0
  %486 = vmatprep.mubr.f32.mxu0 %v207
  %487 = vmatmul.mubr.f32.gmra.mxu0 %v40
  %v488 = vpop.f32.mrf.mxu0
  %v489 = vadd.f32 %v167, %v488
  %v490 = vpop.f32.mrf.mxu0
  %491 = vmatprep.mubr.f32.mxu0 %v210
  %492 = vmatmul.mubr.f32.gmra.mxu0 %v42
  %v493 = vpop.f32.mrf.mxu0
  %v494 = vadd.f32 %v167, %v493
  %v495 = vpop.f32.mrf.mxu0
  %496 = vmatprep.mubr.f32.mxu0 %v213
  %497 = vmatmul.mubr.f32.gmra.mxu0 %v44
  %v498 = vpop.f32.mrf.mxu0
  %v499 = vadd.f32 %v167, %v498
  %v500 = vpop.f32.mrf.mxu0
  %501 = vmatprep.mubr.f32.mxu0 %v216
  %502 = vmatmul.mubr.f32.gmra.mxu0 %v46
  %v503 = vpop.f32.mrf.mxu0
  %v504 = vadd.f32 %v167, %v503
  %v505 = vpop.f32.mrf.mxu0
  %506 = vmatprep.mubr.f32.mxu0 %v219
  %507 = vmatmul.mubr.f32.gmra.mxu0 %v48
  %v508 = vpop.f32.mrf.mxu0
  %v509 = vadd.f32 %v167, %v508
  %v510 = vpop.f32.mrf.mxu0
  %511 = vmatprep.mubr.f32.mxu0 %v222
  %512 = vmatmul.mubr.f32.gmra.mxu0 %v50
  %v513 = vpop.f32.mrf.mxu0
  %v514 = vadd.f32 %v167, %v513
  %v515 = vpop.f32.mrf.mxu0
  %516 = vmatprep.mubr.f32.mxu0 %v225
  %517 = vmatmul.mubr.f32.gmra.mxu0 %v52
  %v518 = vpop.f32.mrf.mxu0
  %v519 = vadd.f32 %v167, %v518
  %v520 = vpop.f32.mrf.mxu0
  %521 = vmatprep.mubr.f32.mxu0 %v228
  %522 = vmatmul.mubr.f32.gmra.mxu0 %v54
  %v523 = vpop.f32.mrf.mxu0
  %v524 = vadd.f32 %v167, %v523
  %v525 = vpop.f32.mrf.mxu0
  %526 = vmatprep.mubr.f32.mxu0 %v231
  %527 = vmatmul.mubr.f32.gmra.mxu0 %v56
  %v528 = vpop.f32.mrf.mxu0
  %v529 = vadd.f32 %v167, %v528
  %v530 = vpop.f32.mrf.mxu0
  %531 = vmatprep.mubr.f32.mxu0 %v234
  %532 = vmatmul.mubr.f32.gmra.mxu0 %v58
  %v533 = vpop.f32.mrf.mxu0
  %v534 = vadd.f32 %v167, %v533
  %v535 = vpop.f32.mrf.mxu0
  %536 = vmatprep.mubr.f32.mxu0 %v237
  %537 = vmatmul.mubr.f32.gmra.mxu0 %v60
  %v538 = vpop.f32.mrf.mxu0
  %v539 = vadd.f32 %v167, %v538
  %v540 = vpop.f32.mrf.mxu0
  %541 = vmatprep.mubr.f32.mxu0 %v240
  %542 = vmatmul.mubr.f32.gmra.mxu0 %v62
  %v543 = vpop.f32.mrf.mxu0
  %v544 = vadd.f32 %v167, %v543
  %v545 = vpop.f32.mrf.mxu0
  %546 = vmatprep.mubr.f32.mxu0 %v243
  %547 = vmatmul.mubr.f32.gmra.mxu0 %v64
  %v548 = vpop.f32.mrf.mxu0
  %v549 = vadd.f32 %v167, %v548
  %v550 = vpop.f32.mrf.mxu0
  %551 = vmatprep.mubr.f32.mxu0 %v246
  %552 = vmatmul.mubr.f32.gmra.mxu0 %v66
  %v553 = vpop.f32.mrf.mxu0
  %v554 = vadd.f32 %v167, %v553
  %v555 = vpop.f32.mrf.mxu0
  %556 = vmatprep.mubr.f32.mxu0 %v249
  %557 = vmatmul.mubr.f32.gmra.mxu0 %v68
  %v558 = vpop.f32.mrf.mxu0
  %v559 = vadd.f32 %v167, %v558
  %v560 = vpop.f32.mrf.mxu0
  %561 = vmatprep.mubr.f32.mxu0 %v252
  %562 = vmatmul.mubr.f32.gmra.mxu0 %v70
  %v563 = vpop.f32.mrf.mxu0
  %v564 = vadd.f32 %v167, %v563
  %v565 = vpop.f32.mrf.mxu0
  %566 = vmatprep.mubr.f32.mxu0 %v255
  %567 = vmatmul.mubr.f32.gmra.mxu0 %v72
  %v568 = vpop.f32.mrf.mxu0
  %v569 = vadd.f32 %v167, %v568
  %v570 = vpop.f32.mrf.mxu0
  %571 = vmatprep.mubr.f32.mxu0 %v258
  %572 = vmatmul.mubr.f32.gmra.mxu0 %v74
  %v573 = vpop.f32.mrf.mxu0
  %v574 = vadd.f32 %v167, %v573
  %v575 = vpop.f32.mrf.mxu0
  %576 = vmatprep.mubr.f32.mxu0 %v261
  %577 = vmatmul.mubr.f32.gmra.mxu0 %v76
  %v578 = vpop.f32.mrf.mxu0
  %v579 = vadd.f32 %v167, %v578
  %v580 = vpop.f32.mrf.mxu0
  %581 = vmatprep.mubr.f32.mxu0 %v264
  %582 = vmatmul.mubr.f32.gmra.mxu0 %v78
  %v583 = vpop.f32.mrf.mxu0
  %v584 = vadd.f32 %v167, %v583
  %v585 = vpop.f32.mrf.mxu0
  %586 = vmatprep.mubr.f32.mxu0 %v267
  %587 = vmatmul.mubr.f32.gmra.mxu0 %v80
  %v588 = vpop.f32.mrf.mxu0
  %v589 = vadd.f32 %v167, %v588
  %v590 = vpop.f32.mrf.mxu0
  %591 = vmatprep.mubr.f32.mxu0 %v270
  %592 = vmatmul.mubr.f32.gmra.mxu0 %v82
  %v593 = vpop.f32.mrf.mxu0
  %v594 = vadd.f32 %v167, %v593
  %v595 = vpop.f32.mrf.mxu0
  %596 = vmatprep.mubr.f32.mxu0 %v273
  %597 = vmatmul.mubr.f32.gmra.mxu0 %v84
  %v598 = vpop.f32.mrf.mxu0
  %v599 = vadd.f32 %v167, %v598
  %v600 = vpop.f32.mrf.mxu0
  %601 = vmatprep.mubr.f32.mxu0 %v276
  %602 = vmatmul.mubr.f32.gmra.mxu0 %v86
  %v603 = vpop.f32.mrf.mxu0
  %v604 = vadd.f32 %v167, %v603
  %v605 = vpop.f32.mrf.mxu0
  %606 = vmatprep.mubr.f32.mxu0 %v279
  %607 = vmatmul.mubr.f32.gmra.mxu0 %v88
  %v608 = vpop.f32.mrf.mxu0
  %v609 = vadd.f32 %v167, %v608
  %v610 = vpop.f32.mrf.mxu0
  %611 = vmatprep.mubr.f32.mxu0 %v282
  %612 = vmatmul.mubr.f32.gmra.mxu0 %v90
  %v613 = vpop.f32.mrf.mxu0
  %v614 = vadd.f32 %v167, %v613
  %v615 = vpop.f32.mrf.mxu0
  %616 = vmatprep.mubr.f32.mxu0 %v285
  %617 = vmatmul.mubr.f32.gmra.mxu0 %v92
  %v618 = vpop.f32.mrf.mxu0
  %v619 = vadd.f32 %v167, %v618
  %v620 = vpop.f32.mrf.mxu0
  %621 = vmatprep.mubr.f32.mxu0 %v288
  %622 = vmatmul.mubr.f32.gmra.mxu0 %v94
  %v623 = vpop.f32.mrf.mxu0
  %v624 = vadd.f32 %v167, %v623
  %v625 = vpop.f32.mrf.mxu0
  %626 = vmatprep.mubr.f32.mxu0 %v291
  %627 = vmatmul.mubr.f32.gmra.mxu0 %v96
  %v628 = vpop.f32.mrf.mxu0
  %v629 = vadd.f32 %v167, %v628
  %v630 = vpop.f32.mrf.mxu0
  %631 = vmatprep.mubr.f32.mxu0 %v294
  %632 = vmatmul.mubr.f32.gmra.mxu0 %v98
  %v633 = vpop.f32.mrf.mxu0
  %v634 = vadd.f32 %v167, %v633
  %v635 = vpop.f32.mrf.mxu0
  %636 = vmatprep.mubr.f32.mxu0 %v297
  %637 = vmatmul.mubr.f32.gmra.mxu0 %v100
  %v638 = vpop.f32.mrf.mxu0
  %v639 = vadd.f32 %v167, %v638
  %v640 = vpop.f32.mrf.mxu0
  %641 = vmatprep.mubr.f32.mxu0 %v300
  %642 = vmatmul.mubr.f32.gmra.mxu0 %v102
  %v643 = vpop.f32.mrf.mxu0
  %v644 = vadd.f32 %v167, %v643
  %v645 = vpop.f32.mrf.mxu0
  %646 = vmatprep.mubr.f32.mxu0 %v303
  %647 = vmatmul.mubr.f32.gmra.mxu0 %v104
  %v648 = vpop.f32.mrf.mxu0
  %v649 = vadd.f32 %v167, %v648
  %v650 = vpop.f32.mrf.mxu0
  %651 = vmatprep.mubr.f32.mxu0 %v306
  %652 = vmatmul.mubr.f32.gmra.mxu0 %v106
  %v653 = vpop.f32.mrf.mxu0
  %v654 = vadd.f32 %v167, %v653
  %v655 = vpop.f32.mrf.mxu0
  %656 = vmatprep.mubr.f32.mxu0 %v309
  %657 = vmatmul.mubr.f32.gmra.mxu0 %v108
  %v658 = vpop.f32.mrf.mxu0
  %v659 = vadd.f32 %v167, %v658
  %v660 = vpop.f32.mrf.mxu0
  %661 = vmatprep.mubr.f32.mxu0 %v312
  %662 = vmatmul.mubr.f32.gmra.mxu0 %v110
  %v663 = vpop.f32.mrf.mxu0
  %v664 = vadd.f32 %v167, %v663
  %v665 = vpop.f32.mrf.mxu0
  %666 = vmatprep.mubr.f32.mxu0 %v315
  %667 = vmatmul.mubr.f32.gmra.mxu0 %v112
  %v668 = vpop.f32.mrf.mxu0
  %v669 = vadd.f32 %v167, %v668
  %v670 = vpop.f32.mrf.mxu0
  %671 = vmatprep.mubr.f32.mxu0 %v318
  %672 = vmatmul.mubr.f32.gmra.mxu0 %v114
  %v673 = vpop.f32.mrf.mxu0
  %v674 = vadd.f32 %v167, %v673
  %v675 = vpop.f32.mrf.mxu0
  %676 = vmatprep.mubr.f32.mxu0 %v321
  %677 = vmatmul.mubr.f32.gmra.mxu0 %v116
  %v678 = vpop.f32.mrf.mxu0
  %v679 = vadd.f32 %v167, %v678
  %v680 = vpop.f32.mrf.mxu0
  %681 = vmatprep.mubr.f32.mxu0 %v324
  %682 = vmatmul.mubr.f32.gmra.mxu0 %v118
  %v683 = vpop.f32.mrf.mxu0
  %v684 = vadd.f32 %v167, %v683
  %v685 = vpop.f32.mrf.mxu0
  %686 = vmatprep.mubr.f32.mxu0 %v327
  %687 = vmatmul.mubr.f32.gmra.mxu0 %v120
  %v688 = vpop.f32.mrf.mxu0
  %v689 = vadd.f32 %v167, %v688
  %v690 = vpop.f32.mrf.mxu0
  %691 = vmatprep.mubr.f32.mxu0 %v330
  %692 = vmatmul.mubr.f32.gmra.mxu0 %v122
  %v693 = vpop.f32.mrf.mxu0
  %v694 = vadd.f32 %v167, %v693
  %v695 = vpop.f32.mrf.mxu0
  %696 = vmatprep.mubr.f32.mxu0 %v333
  %697 = vmatmul.mubr.f32.gmra.mxu0 %v124
  %v698 = vpop.f32.mrf.mxu0
  %v699 = vadd.f32 %v167, %v698
  %v700 = vpop.f32.mrf.mxu0
  %701 = vmatprep.mubr.f32.mxu0 %v336
  %702 = vmatmul.mubr.f32.gmra.mxu0 %v126
  %v703 = vpop.f32.mrf.mxu0
  %v704 = vadd.f32 %v167, %v703
  %v705 = vpop.f32.mrf.mxu0
  %706 = vmatprep.mubr.f32.mxu0 %v339
  %707 = vmatmul.mubr.f32.gmra.mxu0 %v128
  %v708 = vpop.f32.mrf.mxu0
  %v709 = vadd.f32 %v167, %v708
  %v710 = vpop.f32.mrf.mxu0
  %711 = vmatprep.mubr.f32.mxu0 %v342
  %712 = vmatmul.mubr.f32.gmra.mxu0 %v130
  %v713 = vpop.f32.mrf.mxu0
  %v714 = vadd.f32 %v167, %v713
  %v715 = vpop.f32.mrf.mxu0
  %716 = vmatprep.mubr.f32.mxu0 %v345
  %717 = vmatmul.mubr.f32.gmra.mxu0 %v132
  %v718 = vpop.f32.mrf.mxu0
  %v719 = vadd.f32 %v167, %v718
  %v720 = vpop.f32.mrf.mxu0
  %721 = vmatprep.mubr.f32.mxu0 %v348
  %722 = vmatmul.mubr.f32.gmra.mxu0 %v134
  %v723 = vpop.f32.mrf.mxu0
  %v724 = vadd.f32 %v167, %v723
  %v725 = vpop.f32.mrf.mxu0
  %726 = vmatprep.mubr.f32.mxu0 %v351
  %727 = vmatmul.mubr.f32.gmra.mxu0 %v136
  %v728 = vpop.f32.mrf.mxu0
  %v729 = vadd.f32 %v167, %v728
  %v730 = vpop.f32.mrf.mxu0
  %731 = vmatprep.mubr.f32.mxu0 %v354
  %732 = vmatmul.mubr.f32.gmra.mxu0 %v138
  %v733 = vpop.f32.mrf.mxu0
  %v734 = vadd.f32 %v167, %v733
  %v735 = vpop.f32.mrf.mxu0
  %736 = vmatprep.mubr.f32.mxu0 %v357
  %737 = vmatmul.mubr.f32.gmra.mxu0 %v140
  %v738 = vpop.f32.mrf.mxu0
  %v739 = vadd.f32 %v167, %v738
  %v740 = vpop.f32.mrf.mxu0
  %741 = vmatprep.mubr.f32.mxu0 %v360
  %742 = vmatmul.mubr.f32.gmra.mxu0 %v142
  %v743 = vpop.f32.mrf.mxu0
  %v744 = vadd.f32 %v167, %v743
  %v745 = vpop.f32.mrf.mxu0
  %746 = vdwg.mxu0
  %vm747 = vcmask 64512
  %748 = vst.msk [vmem:[%s3] sm:$0xff] %vm747, %v429
  %749 = vst.msk [vmem:[%s3 + $0x8] sm:$0xff] %vm747, %v434
  %750 = vst.msk [vmem:[%s3 + $0x10] sm:$0xff] %vm747, %v439
  %751 = vst.msk [vmem:[%s3 + $0x18] sm:$0xff] %vm747, %v444
  %752 = vst.msk [vmem:[%s3 + $0x20] sm:$0xff] %vm747, %v449
  %753 = vst.msk [vmem:[%s3 + $0x28] sm:$0xff] %vm747, %v454
  %754 = vst.msk [vmem:[%s3 + $0x30] sm:$0xff] %vm747, %v459
  %755 = vst.msk [vmem:[%s3 + $0x38] sm:$0xff] %vm747, %v464
  %756 = vst.msk [vmem:[%s3 + $0x40] sm:$0xff] %vm747, %v469
  %757 = vst.msk [vmem:[%s3 + $0x48] sm:$0xff] %vm747, %v474
  %758 = vst.msk [vmem:[%s3 + $0x50] sm:$0xff] %vm747, %v479
  %759 = vst.msk [vmem:[%s3 + $0x58] sm:$0xff] %vm747, %v484
  %760 = vst.msk [vmem:[%s3 + $0x60] sm:$0xff] %vm747, %v489
  %761 = vst.msk [vmem:[%s3 + $0x68] sm:$0xff] %vm747, %v494
  %762 = vst.msk [vmem:[%s3 + $0x70] sm:$0xff] %vm747, %v499
  %763 = vst.msk [vmem:[%s3 + $0x78] sm:$0xff] %vm747, %v504
  %764 = vst.msk [vmem:[%s3 + $0x80] sm:$0xff] %vm747, %v509
  %765 = vst.msk [vmem:[%s3 + $0x88] sm:$0xff] %vm747, %v514
  %766 = vst.msk [vmem:[%s3 + $0x90] sm:$0xff] %vm747, %v519
  %767 = vst.msk [vmem:[%s3 + $0x98] sm:$0xff] %vm747, %v524
  %768 = vst.msk [vmem:[%s3 + $0xa0] sm:$0xff] %vm747, %v529
  %769 = vst.msk [vmem:[%s3 + $0xa8] sm:$0xff] %vm747, %v534
  %770 = vst.msk [vmem:[%s3 + $0xb0] sm:$0xff] %vm747, %v539
  %771 = vst.msk [vmem:[%s3 + $0xb8] sm:$0xff] %vm747, %v544
  %772 = vst.msk [vmem:[%s3 + $0xc0] sm:$0xff] %vm747, %v549
  %773 = vst.msk [vmem:[%s3 + $0xc8] sm:$0xff] %vm747, %v554
  %774 = vst.msk [vmem:[%s3 + $0xd0] sm:$0xff] %vm747, %v559
  %775 = vst.msk [vmem:[%s3 + $0xd8] sm:$0xff] %vm747, %v564
  %776 = vst.msk [vmem:[%s3 + $0xe0] sm:$0xff] %vm747, %v569
  %777 = vst.msk [vmem:[%s3 + $0xe8] sm:$0xff] %vm747, %v574
  %778 = vst.msk [vmem:[%s3 + $0xf0] sm:$0xff] %vm747, %v579
  %779 = vst.msk [vmem:[%s3 + $0xf8] sm:$0xff] %vm747, %v584
  %780 = vst.msk [vmem:[%s3 + $0x100] sm:$0xff] %vm747, %v589
  %781 = vst.msk [vmem:[%s3 + $0x108] sm:$0xff] %vm747, %v594
  %782 = vst.msk [vmem:[%s3 + $0x110] sm:$0xff] %vm747, %v599
  %783 = vst.msk [vmem:[%s3 + $0x118] sm:$0xff] %vm747, %v604
  %784 = vst.msk [vmem:[%s3 + $0x120] sm:$0xff] %vm747, %v609
  %785 = vst.msk [vmem:[%s3 + $0x128] sm:$0xff] %vm747, %v614
  %786 = vst.msk [vmem:[%s3 + $0x130] sm:$0xff] %vm747, %v619
  %787 = vst.msk [vmem:[%s3 + $0x138] sm:$0xff] %vm747, %v624
  %788 = vst.msk [vmem:[%s3 + $0x140] sm:$0xff] %vm747, %v629
  %789 = vst.msk [vmem:[%s3 + $0x148] sm:$0xff] %vm747, %v634
  %790 = vst.msk [vmem:[%s3 + $0x150] sm:$0xff] %vm747, %v639
  %791 = vst.msk [vmem:[%s3 + $0x158] sm:$0xff] %vm747, %v644
  %792 = vst.msk [vmem:[%s3 + $0x160] sm:$0xff] %vm747, %v649
  %793 = vst.msk [vmem:[%s3 + $0x168] sm:$0xff] %vm747, %v654
  %794 = vst.msk [vmem:[%s3 + $0x170] sm:$0xff] %vm747, %v659
  %795 = vst.msk [vmem:[%s3 + $0x178] sm:$0xff] %vm747, %v664
  %796 = vst.msk [vmem:[%s3 + $0x180] sm:$0xff] %vm747, %v669
  %797 = vst.msk [vmem:[%s3 + $0x188] sm:$0xff] %vm747, %v674
  %798 = vst.msk [vmem:[%s3 + $0x190] sm:$0xff] %vm747, %v679
  %799 = vst.msk [vmem:[%s3 + $0x198] sm:$0xff] %vm747, %v684
  %800 = vst.msk [vmem:[%s3 + $0x1a0] sm:$0xff] %vm747, %v689
  %801 = vst.msk [vmem:[%s3 + $0x1a8] sm:$0xff] %vm747, %v694
  %802 = vst.msk [vmem:[%s3 + $0x1b0] sm:$0xff] %vm747, %v699
  %803 = vst.msk [vmem:[%s3 + $0x1b8] sm:$0xff] %vm747, %v704
  %804 = vst.msk [vmem:[%s3 + $0x1c0] sm:$0xff] %vm747, %v709
  %805 = vst.msk [vmem:[%s3 + $0x1c8] sm:$0xff] %vm747, %v714
  %806 = vst.msk [vmem:[%s3 + $0x1d0] sm:$0xff] %vm747, %v719
  %807 = vst.msk [vmem:[%s3 + $0x1d8] sm:$0xff] %vm747, %v724
  %808 = vst.msk [vmem:[%s3 + $0x1e0] sm:$0xff] %vm747, %v729
  %809 = vst.msk [vmem:[%s3 + $0x1e8] sm:$0xff] %vm747, %v734
  %810 = vst.msk [vmem:[%s3 + $0x1f0] sm:$0xff] %vm747, %v739
  %811 = vst.msk [vmem:[%s3 + $0x1f8] sm:$0xff] %vm747, %v744
  %p812 = scmp.eq.s32.totalorder 0, 0
  // Predicated region
  $region14: #{_lambda_.3} parent=0 // pred_check
    %p813 = pneg %p812
  $region15: #{_lambda_.3} parent=0 // pred_check_branch
    %815 = sbr.rel (%p813) target = $region17
  $region16: #{_lambda_.3} parent=0 // pred_region
    %vm816 = vcmask 58368
    %817 = vst.msk [vmem:[%s4] sm:$0x3] %vm816, 0.0
  $region17: #{_lambda_.3} parent=0 // pred_fallthru
    _
  %v818 = vld [vmem:[%s4] sm:$0x3]
  %v819 = vsel %vm747, %v429, 0.0
  %v820 = vsel %vm747, %v434, 0.0
  %v821 = vadd.f32 %v819, %v820
  %v822 = vsel %vm747, %v439, 0.0
  %v823 = vadd.f32 %v821, %v822
  %v824 = vsel %vm747, %v444, 0.0
  %v825 = vadd.f32 %v823, %v824
  %v826 = vsel %vm747, %v449, 0.0
  %v827 = vadd.f32 %v825, %v826
  %v828 = vsel %vm747, %v454, 0.0
  %v829 = vadd.f32 %v827, %v828
  %v830 = vsel %vm747, %v459, 0.0
  %v831 = vadd.f32 %v829, %v830
  %v832 = vsel %vm747, %v464, 0.0
  %v833 = vadd.f32 %v831, %v832
  %v834 = vsel %vm747, %v469, 0.0
  %v835 = vadd.f32 %v833, %v834
  %v836 = vsel %vm747, %v474, 0.0
  %v837 = vadd.f32 %v835, %v836
  %v838 = vsel %vm747, %v479, 0.0
  %v839 = vadd.f32 %v837, %v838
  %v840 = vsel %vm747, %v484, 0.0
  %v841 = vadd.f32 %v839, %v840
  %v842 = vsel %vm747, %v489, 0.0
  %v843 = vadd.f32 %v841, %v842
  %v844 = vsel %vm747, %v494, 0.0
  %v845 = vadd.f32 %v843, %v844
  %v846 = vsel %vm747, %v499, 0.0
  %v847 = vadd.f32 %v845, %v846
  %v848 = vsel %vm747, %v504, 0.0
  %v849 = vadd.f32 %v847, %v848
  %v850 = vsel %vm747, %v509, 0.0
  %v851 = vadd.f32 %v849, %v850
  %v852 = vsel %vm747, %v514, 0.0
  %v853 = vadd.f32 %v851, %v852
  %v854 = vsel %vm747, %v519, 0.0
  %v855 = vadd.f32 %v853, %v854
  %v856 = vsel %vm747, %v524, 0.0
  %v857 = vadd.f32 %v855, %v856
  %v858 = vsel %vm747, %v529, 0.0
  %v859 = vadd.f32 %v857, %v858
  %v860 = vsel %vm747, %v534, 0.0
  %v861 = vadd.f32 %v859, %v860
  %v862 = vsel %vm747, %v539, 0.0
  %v863 = vadd.f32 %v861, %v862
  %v864 = vsel %vm747, %v544, 0.0
  %v865 = vadd.f32 %v863, %v864
  %v866 = vsel %vm747, %v549, 0.0
  %v867 = vadd.f32 %v865, %v866
  %v868 = vsel %vm747, %v554, 0.0
  %v869 = vadd.f32 %v867, %v868
  %v870 = vsel %vm747, %v559, 0.0
  %v871 = vadd.f32 %v869, %v870
  %v872 = vsel %vm747, %v564, 0.0
  %v873 = vadd.f32 %v871, %v872
  %v874 = vsel %vm747, %v569, 0.0
  %v875 = vadd.f32 %v873, %v874
  %v876 = vsel %vm747, %v574, 0.0
  %v877 = vadd.f32 %v875, %v876
  %v878 = vsel %vm747, %v579, 0.0
  %v879 = vadd.f32 %v877, %v878
  %v880 = vsel %vm747, %v584, 0.0
  %v881 = vadd.f32 %v879, %v880
  %v882 = vsel %vm747, %v589, 0.0
  %v883 = vadd.f32 %v881, %v882
  %v884 = vsel %vm747, %v594, 0.0
  %v885 = vadd.f32 %v883, %v884
  %v886 = vsel %vm747, %v599, 0.0
  %v887 = vadd.f32 %v885, %v886
  %v888 = vsel %vm747, %v604, 0.0
  %v889 = vadd.f32 %v887, %v888
  %v890 = vsel %vm747, %v609, 0.0
  %v891 = vadd.f32 %v889, %v890
  %v892 = vsel %vm747, %v614, 0.0
  %v893 = vadd.f32 %v891, %v892
  %v894 = vsel %vm747, %v619, 0.0
  %v895 = vadd.f32 %v893, %v894
  %v896 = vsel %vm747, %v624, 0.0
  %v897 = vadd.f32 %v895, %v896
  %v898 = vsel %vm747, %v629, 0.0
  %v899 = vadd.f32 %v897, %v898
  %v900 = vsel %vm747, %v634, 0.0
  %v901 = vadd.f32 %v899, %v900
  %v902 = vsel %vm747, %v639, 0.0
  %v903 = vadd.f32 %v901, %v902
  %v904 = vsel %vm747, %v644, 0.0
  %v905 = vadd.f32 %v903, %v904
  %v906 = vsel %vm747, %v649, 0.0
  %v907 = vadd.f32 %v905, %v906
  %v908 = vsel %vm747, %v654, 0.0
  %v909 = vadd.f32 %v907, %v908
  %v910 = vsel %vm747, %v659, 0.0
  %v911 = vadd.f32 %v909, %v910
  %v912 = vsel %vm747, %v664, 0.0
  %v913 = vadd.f32 %v911, %v912
  %v914 = vsel %vm747, %v669, 0.0
  %v915 = vadd.f32 %v913, %v914
  %v916 = vsel %vm747, %v674, 0.0
  %v917 = vadd.f32 %v915, %v916
  %v918 = vsel %vm747, %v679, 0.0
  %v919 = vadd.f32 %v917, %v918
  %v920 = vsel %vm747, %v684, 0.0
  %v921 = vadd.f32 %v919, %v920
  %v922 = vsel %vm747, %v689, 0.0
  %v923 = vadd.f32 %v921, %v922
  %v924 = vsel %vm747, %v694, 0.0
  %v925 = vadd.f32 %v923, %v924
  %v926 = vsel %vm747, %v699, 0.0
  %v927 = vadd.f32 %v925, %v926
  %v928 = vsel %vm747, %v704, 0.0
  %v929 = vadd.f32 %v927, %v928
  %v930 = vsel %vm747, %v709, 0.0
  %v931 = vadd.f32 %v929, %v930
  %v932 = vsel %vm747, %v714, 0.0
  %v933 = vadd.f32 %v931, %v932
  %v934 = vsel %vm747, %v719, 0.0
  %v935 = vadd.f32 %v933, %v934
  %v936 = vsel %vm747, %v724, 0.0
  %v937 = vadd.f32 %v935, %v936
  %v938 = vsel %vm747, %v729, 0.0
  %v939 = vadd.f32 %v937, %v938
  %v940 = vsel %vm747, %v734, 0.0
  %v941 = vadd.f32 %v939, %v940
  %v942 = vsel %vm747, %v739, 0.0
  %v943 = vadd.f32 %v941, %v942
  %v944 = vsel %vm747, %v744, 0.0
  %v945 = vadd.f32 %v943, %v944
  %v946 = vrot.slane %v945, 4
  %v947 = vadd.f32 %v945, %v946
  %v948 = vrot.slane %v947, 2
  %v949 = vadd.f32 %v947, %v948
  %v950 = vrot.slane %v949, 1
  %v951 = vadd.f32 %v949, %v950
  %v952 = vmul.f32 %v429, %v429
  %v953 = vmul.f32 %v434, %v434
  %v954 = vmul.f32 %v439, %v439
  %v955 = vmul.f32 %v444, %v444
  %v956 = vmul.f32 %v449, %v449
  %v957 = vmul.f32 %v454, %v454
  %v958 = vmul.f32 %v459, %v459
  %v959 = vmul.f32 %v464, %v464
  %v960 = vmul.f32 %v469, %v469
  %v961 = vmul.f32 %v474, %v474
  %v962 = vmul.f32 %v479, %v479
  %v963 = vmul.f32 %v484, %v484
  %v964 = vmul.f32 %v489, %v489
  %v965 = vmul.f32 %v494, %v494
  %v966 = vmul.f32 %v499, %v499
  %v967 = vmul.f32 %v504, %v504
  %v968 = vmul.f32 %v509, %v509
  %v969 = vmul.f32 %v514, %v514
  %v970 = vmul.f32 %v519, %v519
  %v971 = vmul.f32 %v524, %v524
  %v972 = vmul.f32 %v529, %v529
  %v973 = vmul.f32 %v534, %v534
  %v974 = vmul.f32 %v539, %v539
  %v975 = vmul.f32 %v544, %v544
  %v976 = vmul.f32 %v549, %v549
  %v977 = vmul.f32 %v554, %v554
  %v978 = vmul.f32 %v559, %v559
  %v979 = vmul.f32 %v564, %v564
  %v980 = vmul.f32 %v569, %v569
  %v981 = vmul.f32 %v574, %v574
  %v982 = vmul.f32 %v579, %v579
  %v983 = vmul.f32 %v584, %v584
  %v984 = vmul.f32 %v589, %v589
  %v985 = vmul.f32 %v594, %v594
  %v986 = vmul.f32 %v599, %v599
  %v987 = vmul.f32 %v604, %v604
  %v988 = vmul.f32 %v609, %v609
  %v989 = vmul.f32 %v614, %v614
  %v990 = vmul.f32 %v619, %v619
  %v991 = vmul.f32 %v624, %v624
  %v992 = vmul.f32 %v629, %v629
  %v993 = vmul.f32 %v634, %v634
  %v994 = vmul.f32 %v639, %v639
  %v995 = vmul.f32 %v644, %v644
  %v996 = vmul.f32 %v649, %v649
  %v997 = vmul.f32 %v654, %v654
  %v998 = vmul.f32 %v659, %v659
  %v999 = vmul.f32 %v664, %v664
  %v1000 = vmul.f32 %v669, %v669
  %v1001 = vmul.f32 %v674, %v674
  %v1002 = vmul.f32 %v679, %v679
  %v1003 = vmul.f32 %v684, %v684
  %v1004 = vmul.f32 %v689, %v689
  %v1005 = vmul.f32 %v694, %v694
  %v1006 = vmul.f32 %v699, %v699
  %v1007 = vmul.f32 %v704, %v704
  %v1008 = vmul.f32 %v709, %v709
  %v1009 = vmul.f32 %v714, %v714
  %v1010 = vmul.f32 %v719, %v719
  %v1011 = vmul.f32 %v724, %v724
  %v1012 = vmul.f32 %v729, %v729
  %v1013 = vmul.f32 %v734, %v734
  %v1014 = vmul.f32 %v739, %v739
  %v1015 = vmul.f32 %v744, %v744
  %v1016 = vsel %vm747, %v952, 0.0
  %v1017 = vsel %vm747, %v953, 0.0
  %v1018 = vadd.f32 %v1016, %v1017
  %v1019 = vsel %vm747, %v954, 0.0
  %v1020 = vadd.f32 %v1018, %v1019
  %v1021 = vsel %vm747, %v955, 0.0
  %v1022 = vadd.f32 %v1020, %v1021
  %v1023 = vsel %vm747, %v956, 0.0
  %v1024 = vadd.f32 %v1022, %v1023
  %v1025 = vsel %vm747, %v957, 0.0
  %v1026 = vadd.f32 %v1024, %v1025
  %v1027 = vsel %vm747, %v958, 0.0
  %v1028 = vadd.f32 %v1026, %v1027
  %v1029 = vsel %vm747, %v959, 0.0
  %v1030 = vadd.f32 %v1028, %v1029
  %v1031 = vsel %vm747, %v960, 0.0
  %v1032 = vadd.f32 %v1030, %v1031
  %v1033 = vsel %vm747, %v961, 0.0
  %v1034 = vadd.f32 %v1032, %v1033
  %v1035 = vsel %vm747, %v962, 0.0
  %v1036 = vadd.f32 %v1034, %v1035
  %v1037 = vsel %vm747, %v963, 0.0
  %v1038 = vadd.f32 %v1036, %v1037
  %v1039 = vsel %vm747, %v964, 0.0
  %v1040 = vadd.f32 %v1038, %v1039
  %v1041 = vsel %vm747, %v965, 0.0
  %v1042 = vadd.f32 %v1040, %v1041
  %v1043 = vsel %vm747, %v966, 0.0
  %v1044 = vadd.f32 %v1042, %v1043
  %v1045 = vsel %vm747, %v967, 0.0
  %v1046 = vadd.f32 %v1044, %v1045
  %v1047 = vsel %vm747, %v968, 0.0
  %v1048 = vadd.f32 %v1046, %v1047
  %v1049 = vsel %vm747, %v969, 0.0
  %v1050 = vadd.f32 %v1048, %v1049
  %v1051 = vsel %vm747, %v970, 0.0
  %v1052 = vadd.f32 %v1050, %v1051
  %v1053 = vsel %vm747, %v971, 0.0
  %v1054 = vadd.f32 %v1052, %v1053
  %v1055 = vsel %vm747, %v972, 0.0
  %v1056 = vadd.f32 %v1054, %v1055
  %v1057 = vsel %vm747, %v973, 0.0
  %v1058 = vadd.f32 %v1056, %v1057
  %v1059 = vsel %vm747, %v974, 0.0
  %v1060 = vadd.f32 %v1058, %v1059
  %v1061 = vsel %vm747, %v975, 0.0
  %v1062 = vadd.f32 %v1060, %v1061
  %v1063 = vsel %vm747, %v976, 0.0
  %v1064 = vadd.f32 %v1062, %v1063
  %v1065 = vsel %vm747, %v977, 0.0
  %v1066 = vadd.f32 %v1064, %v1065
  %v1067 = vsel %vm747, %v978, 0.0
  %v1068 = vadd.f32 %v1066, %v1067
  %v1069 = vsel %vm747, %v979, 0.0
  %v1070 = vadd.f32 %v1068, %v1069
  %v1071 = vsel %vm747, %v980, 0.0
  %v1072 = vadd.f32 %v1070, %v1071
  %v1073 = vsel %vm747, %v981, 0.0
  %v1074 = vadd.f32 %v1072, %v1073
  %v1075 = vsel %vm747, %v982, 0.0
  %v1076 = vadd.f32 %v1074, %v1075
  %v1077 = vsel %vm747, %v983, 0.0
  %v1078 = vadd.f32 %v1076, %v1077
  %v1079 = vsel %vm747, %v984, 0.0
  %v1080 = vadd.f32 %v1078, %v1079
  %v1081 = vsel %vm747, %v985, 0.0
  %v1082 = vadd.f32 %v1080, %v1081
  %v1083 = vsel %vm747, %v986, 0.0
  %v1084 = vadd.f32 %v1082, %v1083
  %v1085 = vsel %vm747, %v987, 0.0
  %v1086 = vadd.f32 %v1084, %v1085
  %v1087 = vsel %vm747, %v988, 0.0
  %v1088 = vadd.f32 %v1086, %v1087
  %v1089 = vsel %vm747, %v989, 0.0
  %v1090 = vadd.f32 %v1088, %v1089
  %v1091 = vsel %vm747, %v990, 0.0
  %v1092 = vadd.f32 %v1090, %v1091
  %v1093 = vsel %vm747, %v991, 0.0
  %v1094 = vadd.f32 %v1092, %v1093
  %v1095 = vsel %vm747, %v992, 0.0
  %v1096 = vadd.f32 %v1094, %v1095
  %v1097 = vsel %vm747, %v993, 0.0
  %v1098 = vadd.f32 %v1096, %v1097
  %v1099 = vsel %vm747, %v994, 0.0
  %v1100 = vadd.f32 %v1098, %v1099
  %v1101 = vsel %vm747, %v995, 0.0
  %v1102 = vadd.f32 %v1100, %v1101
  %v1103 = vsel %vm747, %v996, 0.0
  %v1104 = vadd.f32 %v1102, %v1103
  %v1105 = vsel %vm747, %v997, 0.0
  %v1106 = vadd.f32 %v1104, %v1105
  %v1107 = vsel %vm747, %v998, 0.0
  %v1108 = vadd.f32 %v1106, %v1107
  %v1109 = vsel %vm747, %v999, 0.0
  %v1110 = vadd.f32 %v1108, %v1109
  %v1111 = vsel %vm747, %v1000, 0.0
  %v1112 = vadd.f32 %v1110, %v1111
  %v1113 = vsel %vm747, %v1001, 0.0
  %v1114 = vadd.f32 %v1112, %v1113
  %v1115 = vsel %vm747, %v1002, 0.0
  %v1116 = vadd.f32 %v1114, %v1115
  %v1117 = vsel %vm747, %v1003, 0.0
  %v1118 = vadd.f32 %v1116, %v1117
  %v1119 = vsel %vm747, %v1004, 0.0
  %v1120 = vadd.f32 %v1118, %v1119
  %v1121 = vsel %vm747, %v1005, 0.0
  %v1122 = vadd.f32 %v1120, %v1121
  %v1123 = vsel %vm747, %v1006, 0.0
  %v1124 = vadd.f32 %v1122, %v1123
  %v1125 = vsel %vm747, %v1007, 0.0
  %v1126 = vadd.f32 %v1124, %v1125
  %v1127 = vsel %vm747, %v1008, 0.0
  %v1128 = vadd.f32 %v1126, %v1127
  %v1129 = vsel %vm747, %v1009, 0.0
  %v1130 = vadd.f32 %v1128, %v1129
  %v1131 = vsel %vm747, %v1010, 0.0
  %v1132 = vadd.f32 %v1130, %v1131
  %v1133 = vsel %vm747, %v1011, 0.0
  %v1134 = vadd.f32 %v1132, %v1133
  %v1135 = vsel %vm747, %v1012, 0.0
  %v1136 = vadd.f32 %v1134, %v1135
  %v1137 = vsel %vm747, %v1013, 0.0
  %v1138 = vadd.f32 %v1136, %v1137
  %v1139 = vsel %vm747, %v1014, 0.0
  %v1140 = vadd.f32 %v1138, %v1139
  %v1141 = vsel %vm747, %v1015, 0.0
  %v1142 = vadd.f32 %v1140, %v1141
  %v1143 = vrot.slane %v1142, 4
  %v1144 = vadd.f32 %v1142, %v1143
  %v1145 = vrot.slane %v1144, 2
  %v1146 = vadd.f32 %v1144, %v1145
  %v1147 = vrot.slane %v1146, 1
  %v1148 = vadd.f32 %v1146, %v1147
  %vm1149 = vcmask 1040384
  %v1150 = vsel %vm1149, %v951, %v1148
  %v1151 = vadd.f32 %v818, %v1150
  %vm1152 = vcmask 58368
  %1153 = vst.msk [vmem:[%s4] sm:$0x3] %vm1152, %v1151
  // Predicated region
  $region18: #{_lambda_.3} parent=0 // pred_check
    _
  $region19: #{_lambda_.3} parent=0 // pred_check_branch
    %1155 = sbr.rel (0) target = $region21
  $region20: #{_lambda_.3} parent=0 // pred_region
    _
  $region21: #{_lambda_.3} parent=0 // pred_fallthru
    _
  // Predicated region
  $region22: #{_lambda_.3} parent=0 // pred_check
    _
  $region23: #{_lambda_.3} parent=0 // pred_check_branch
    %1157 = sbr.rel (0) target = $region25
  $region24: #{_lambda_.3} parent=0 // pred_region
    _
  $region25: #{_lambda_.3} parent=0 // pred_fallthru
    _
  // Predicated region
  $region26: #{_lambda_.3} parent=0 // pred_check
    _
  $region27: #{_lambda_.3} parent=0 // pred_check_branch
    %1159 = sbr.rel (0) target = $region29
  $region28: #{_lambda_.3} parent=0 // pred_region
    _
  $region29: #{_lambda_.3} parent=0 // pred_fallthru
    _
  // Predicated region
  $region30: #{_lambda_.3} parent=0 // pred_check
    _
  $region31: #{_lambda_.3} parent=0 // pred_check_branch
    %1161 = sbr.rel (0) target = $region33
  $region32: #{_lambda_.3} parent=0 // pred_region
    _
  $region33: #{_lambda_.3} parent=0 // pred_fallthru
    _

// kernel: _lambda_.4
$region0: #{_lambda_.4}
  #allocation0 [shape = 'u32[]', space=smem, size = 0x4, offset = 0x4, fixed_abs, tag = 'smem constant byte address 0x4 - core index']
  #allocation1 [shape = 'u32[144,128]{1,0:T(1,128)}', space=vmem, size = 0x12000, scoped, tag = 'internal scratch']
  %s0 = inlined_call_operand.vmem [shape: f32[512,8], index: 0, kind: input, shape index: {}]
  %s1 = inlined_call_operand.vmem [shape: f32[2,8], index: 1, kind: input, shape index: {}]
  %s2 = inlined_call_operand.vmem [shape: f32[8,32], index: 2, kind: input, shape index: {}]
  %s3 = inlined_call_operand.vmem [shape: f32[1,32], index: 3, kind: input, shape index: {}]
  %s4 = inlined_call_operand.vmem [shape: f32[512,32], index: 4, kind: output, shape index: {0}]
  %s5 = inlined_call_operand.vmem [shape: f32[2,32], index: 5, kind: output, shape index: {1}]
  %6 = xla_tuple %s4, %s5
  %s7 = sld [smem:[#allocation0]]
  $region38: #{_lambda_.4} parent=0
    _
  %s9 = ssub.s32 1, %s7
  %s10 = scalar_select 0, %s9, %s7
  // Predicated region
  $region2: #{_lambda_.4} parent=0 // pred_check
    _
  $region3: #{_lambda_.4} parent=0 // pred_check_branch
    %12 = sbr.rel (0) target = $region5
  $region4: #{_lambda_.4} parent=0 // pred_region
    _
  $region5: #{_lambda_.4} parent=0 // pred_fallthru
    _
  // Predicated region
  $region6: #{_lambda_.4} parent=0 // pred_check
    _
  $region7: #{_lambda_.4} parent=0 // pred_check_branch
    %14 = sbr.rel (0) target = $region9
  $region8: #{_lambda_.4} parent=0 // pred_region
    _
  $region9: #{_lambda_.4} parent=0 // pred_fallthru
    _
  // Predicated region
  $region10: #{_lambda_.4} parent=0 // pred_check
    _
  $region11: #{_lambda_.4} parent=0 // pred_check_branch
    %16 = sbr.rel (0) target = $region13
  $region12: #{_lambda_.4} parent=0 // pred_region
    _
  $region13: #{_lambda_.4} parent=0 // pred_fallthru
    _
  // Predicated region
  $region14: #{_lambda_.4} parent=0 // pred_check
    _
  $region15: #{_lambda_.4} parent=0 // pred_check_branch
    %18 = sbr.rel (0) target = $region17
  $region16: #{_lambda_.4} parent=0 // pred_region
    _
  $region17: #{_lambda_.4} parent=0 // pred_fallthru
    _
  %v19 = vld [vmem:[%s0] sm:$0xff]
  %v20 = vld [vmem:[%s0 + $0x8] sm:$0xff]
  %v21 = vld [vmem:[%s0 + $0x10] sm:$0xff]
  %v22 = vld [vmem:[%s0 + $0x18] sm:$0xff]
  %v23 = vld [vmem:[%s0 + $0x20] sm:$0xff]
  %v24 = vld [vmem:[%s0 + $0x28] sm:$0xff]
  %v25 = vld [vmem:[%s0 + $0x30] sm:$0xff]
  %v26 = vld [vmem:[%s0 + $0x38] sm:$0xff]
  %v27 = vld [vmem:[%s0 + $0x40] sm:$0xff]
  %v28 = vld [vmem:[%s0 + $0x48] sm:$0xff]
  %v29 = vld [vmem:[%s0 + $0x50] sm:$0xff]
  %v30 = vld [vmem:[%s0 + $0x58] sm:$0xff]
  %v31 = vld [vmem:[%s0 + $0x60] sm:$0xff]
  %v32 = vld [vmem:[%s0 + $0x68] sm:$0xff]
  %v33 = vld [vmem:[%s0 + $0x70] sm:$0xff]
  %v34 = vld [vmem:[%s0 + $0x78] sm:$0xff]
  %v35 = vld [vmem:[%s0 + $0x80] sm:$0xff]
  %v36 = vld [vmem:[%s0 + $0x88] sm:$0xff]
  %v37 = vld [vmem:[%s0 + $0x90] sm:$0xff]
  %v38 = vld [vmem:[%s0 + $0x98] sm:$0xff]
  %v39 = vld [vmem:[%s0 + $0xa0] sm:$0xff]
  %v40 = vld [vmem:[%s0 + $0xa8] sm:$0xff]
  %v41 = vld [vmem:[%s0 + $0xb0] sm:$0xff]
  %v42 = vld [vmem:[%s0 + $0xb8] sm:$0xff]
  %v43 = vld [vmem:[%s0 + $0xc0] sm:$0xff]
  %v44 = vld [vmem:[%s0 + $0xc8] sm:$0xff]
  %v45 = vld [vmem:[%s0 + $0xd0] sm:$0xff]
  %v46 = vld [vmem:[%s0 + $0xd8] sm:$0xff]
  %v47 = vld [vmem:[%s0 + $0xe0] sm:$0xff]
  %v48 = vld [vmem:[%s0 + $0xe8] sm:$0xff]
  %v49 = vld [vmem:[%s0 + $0xf0] sm:$0xff]
  %v50 = vld [vmem:[%s0 + $0xf8] sm:$0xff]
  %v51 = vld [vmem:[%s0 + $0x100] sm:$0xff]
  %v52 = vld [vmem:[%s0 + $0x108] sm:$0xff]
  %v53 = vld [vmem:[%s0 + $0x110] sm:$0xff]
  %v54 = vld [vmem:[%s0 + $0x118] sm:$0xff]
  %v55 = vld [vmem:[%s0 + $0x120] sm:$0xff]
  %v56 = vld [vmem:[%s0 + $0x128] sm:$0xff]
  %v57 = vld [vmem:[%s0 + $0x130] sm:$0xff]
  %v58 = vld [vmem:[%s0 + $0x138] sm:$0xff]
  %v59 = vld [vmem:[%s0 + $0x140] sm:$0xff]
  %v60 = vld [vmem:[%s0 + $0x148] sm:$0xff]
  %v61 = vld [vmem:[%s0 + $0x150] sm:$0xff]
  %v62 = vld [vmem:[%s0 + $0x158] sm:$0xff]
  %v63 = vld [vmem:[%s0 + $0x160] sm:$0xff]
  %v64 = vld [vmem:[%s0 + $0x168] sm:$0xff]
  %v65 = vld [vmem:[%s0 + $0x170] sm:$0xff]
  %v66 = vld [vmem:[%s0 + $0x178] sm:$0xff]
  %v67 = vld [vmem:[%s0 + $0x180] sm:$0xff]
  %v68 = vld [vmem:[%s0 + $0x188] sm:$0xff]
  %v69 = vld [vmem:[%s0 + $0x190] sm:$0xff]
  %v70 = vld [vmem:[%s0 + $0x198] sm:$0xff]
  %v71 = vld [vmem:[%s0 + $0x1a0] sm:$0xff]
  %v72 = vld [vmem:[%s0 + $0x1a8] sm:$0xff]
  %v73 = vld [vmem:[%s0 + $0x1b0] sm:$0xff]
  %v74 = vld [vmem:[%s0 + $0x1b8] sm:$0xff]
  %v75 = vld [vmem:[%s0 + $0x1c0] sm:$0xff]
  %v76 = vld [vmem:[%s0 + $0x1c8] sm:$0xff]
  %v77 = vld [vmem:[%s0 + $0x1d0] sm:$0xff]
  %v78 = vld [vmem:[%s0 + $0x1d8] sm:$0xff]
  %v79 = vld [vmem:[%s0 + $0x1e0] sm:$0xff]
  %v80 = vld [vmem:[%s0 + $0x1e8] sm:$0xff]
  %v81 = vld [vmem:[%s0 + $0x1f0] sm:$0xff]
  %v82 = vld [vmem:[%s0 + $0x1f8] sm:$0xff]
  %v83 = vld [vmem:[%s1] sm:$0x1]
  %v84 = vlaneseq
  %v85 = vshrl.u32 %v84, 7
  %v86 = vsub.s32 0, %v85
  %v87 = vrot.slane %v83, %v86
  %v88 = vmul.f32 %v19, %v87
  %v89 = vmul.f32 %v20, %v87
  %v90 = vmul.f32 %v21, %v87
  %v91 = vmul.f32 %v22, %v87
  %v92 = vmul.f32 %v23, %v87
  %v93 = vmul.f32 %v24, %v87
  %v94 = vmul.f32 %v25, %v87
  %v95 = vmul.f32 %v26, %v87
  %v96 = vmul.f32 %v27, %v87
  %v97 = vmul.f32 %v28, %v87
  %v98 = vmul.f32 %v29, %v87
  %v99 = vmul.f32 %v30, %v87
  %v100 = vmul.f32 %v31, %v87
  %v101 = vmul.f32 %v32, %v87
  %v102 = vmul.f32 %v33, %v87
  %v103 = vmul.f32 %v34, %v87
  %v104 = vmul.f32 %v35, %v87
  %v105 = vmul.f32 %v36, %v87
  %v106 = vmul.f32 %v37, %v87
  %v107 = vmul.f32 %v38, %v87
  %v108 = vmul.f32 %v39, %v87
  %v109 = vmul.f32 %v40, %v87
  %v110 = vmul.f32 %v41, %v87
  %v111 = vmul.f32 %v42, %v87
  %v112 = vmul.f32 %v43, %v87
  %v113 = vmul.f32 %v44, %v87
  %v114 = vmul.f32 %v45, %v87
  %v115 = vmul.f32 %v46, %v87
  %v116 = vmul.f32 %v47, %v87
  %v117 = vmul.f32 %v48, %v87
  %v118 = vmul.f32 %v49, %v87
  %v119 = vmul.f32 %v50, %v87
  %v120 = vmul.f32 %v51, %v87
  %v121 = vmul.f32 %v52, %v87
  %v122 = vmul.f32 %v53, %v87
  %v123 = vmul.f32 %v54, %v87
  %v124 = vmul.f32 %v55, %v87
  %v125 = vmul.f32 %v56, %v87
  %v126 = vmul.f32 %v57, %v87
  %v127 = vmul.f32 %v58, %v87
  %v128 = vmul.f32 %v59, %v87
  %v129 = vmul.f32 %v60, %v87
  %v130 = vmul.f32 %v61, %v87
  %v131 = vmul.f32 %v62, %v87
  %v132 = vmul.f32 %v63, %v87
  %v133 = vmul.f32 %v64, %v87
  %v134 = vmul.f32 %v65, %v87
  %v135 = vmul.f32 %v66, %v87
  %v136 = vmul.f32 %v67, %v87
  %v137 = vmul.f32 %v68, %v87
  %v138 = vmul.f32 %v69, %v87
  %v139 = vmul.f32 %v70, %v87
  %v140 = vmul.f32 %v71, %v87
  %v141 = vmul.f32 %v72, %v87
  %v142 = vmul.f32 %v73, %v87
  %v143 = vmul.f32 %v74, %v87
  %v144 = vmul.f32 %v75, %v87
  %v145 = vmul.f32 %v76, %v87
  %v146 = vmul.f32 %v77, %v87
  %v147 = vmul.f32 %v78, %v87
  %v148 = vmul.f32 %v79, %v87
  %v149 = vmul.f32 %v80, %v87
  %v150 = vmul.f32 %v81, %v87
  %v151 = vmul.f32 %v82, %v87
  %v152 = vld [vmem:[%s1 + $0x1] sm:$0x1]
  %v153 = vlaneseq
  %v154 = vshrl.u32 %v153, 7
  %v155 = vsub.s32 0, %v154
  %v156 = vrot.slane %v152, %v155
  %v157 = vadd.f32 %v88, %v156
  %v158 = vadd.f32 %v89, %v156
  %v159 = vadd.f32 %v90, %v156
  %v160 = vadd.f32 %v91, %v156
  %v161 = vadd.f32 %v92, %v156
  %v162 = vadd.f32 %v93, %v156
  %v163 = vadd.f32 %v94, %v156
  %v164 = vadd.f32 %v95, %v156
  %v165 = vadd.f32 %v96, %v156
  %v166 = vadd.f32 %v97, %v156
  %v167 = vadd.f32 %v98, %v156
  %v168 = vadd.f32 %v99, %v156
  %v169 = vadd.f32 %v100, %v156
  %v170 = vadd.f32 %v101, %v156
  %v171 = vadd.f32 %v102, %v156
  %v172 = vadd.f32 %v103, %v156
  %v173 = vadd.f32 %v104, %v156
  %v174 = vadd.f32 %v105, %v156
  %v175 = vadd.f32 %v106, %v156
  %v176 = vadd.f32 %v107, %v156
  %v177 = vadd.f32 %v108, %v156
  %v178 = vadd.f32 %v109, %v156
  %v179 = vadd.f32 %v110, %v156
  %v180 = vadd.f32 %v111, %v156
  %v181 = vadd.f32 %v112, %v156
  %v182 = vadd.f32 %v113, %v156
  %v183 = vadd.f32 %v114, %v156
  %v184 = vadd.f32 %v115, %v156
  %v185 = vadd.f32 %v116, %v156
  %v186 = vadd.f32 %v117, %v156
  %v187 = vadd.f32 %v118, %v156
  %v188 = vadd.f32 %v119, %v156
  %v189 = vadd.f32 %v120, %v156
  %v190 = vadd.f32 %v121, %v156
  %v191 = vadd.f32 %v122, %v156
  %v192 = vadd.f32 %v123, %v156
  %v193 = vadd.f32 %v124, %v156
  %v194 = vadd.f32 %v125, %v156
  %v195 = vadd.f32 %v126, %v156
  %v196 = vadd.f32 %v127, %v156
  %v197 = vadd.f32 %v128, %v156
  %v198 = vadd.f32 %v129, %v156
  %v199 = vadd.f32 %v130, %v156
  %v200 = vadd.f32 %v131, %v156
  %v201 = vadd.f32 %v132, %v156
  %v202 = vadd.f32 %v133, %v156
  %v203 = vadd.f32 %v134, %v156
  %v204 = vadd.f32 %v135, %v156
  %v205 = vadd.f32 %v136, %v156
  %v206 = vadd.f32 %v137, %v156
  %v207 = vadd.f32 %v138, %v156
  %v208 = vadd.f32 %v139, %v156
  %v209 = vadd.f32 %v140, %v156
  %v210 = vadd.f32 %v141, %v156
  %v211 = vadd.f32 %v142, %v156
  %v212 = vadd.f32 %v143, %v156
  %v213 = vadd.f32 %v144, %v156
  %v214 = vadd.f32 %v145, %v156
  %v215 = vadd.f32 %v146, %v156
  %v216 = vadd.f32 %v147, %v156
  %v217 = vadd.f32 %v148, %v156
  %v218 = vadd.f32 %v149, %v156
  %v219 = vadd.f32 %v150, %v156
  %v220 = vadd.f32 %v151, %v156
  %v221 = vmax.f32 %v157, 0.0
  %v222 = vmax.f32 %v158, 0.0
  %v223 = vmax.f32 %v159, 0.0
  %v224 = vmax.f32 %v160, 0.0
  %v225 = vmax.f32 %v161, 0.0
  %v226 = vmax.f32 %v162, 0.0
  %v227 = vmax.f32 %v163, 0.0
  %v228 = vmax.f32 %v164, 0.0
  %v229 = vmax.f32 %v165, 0.0
  %v230 = vmax.f32 %v166, 0.0
  %v231 = vmax.f32 %v167, 0.0
  %v232 = vmax.f32 %v168, 0.0
  %v233 = vmax.f32 %v169, 0.0
  %v234 = vmax.f32 %v170, 0.0
  %v235 = vmax.f32 %v171, 0.0
  %v236 = vmax.f32 %v172, 0.0
  %v237 = vmax.f32 %v173, 0.0
  %v238 = vmax.f32 %v174, 0.0
  %v239 = vmax.f32 %v175, 0.0
  %v240 = vmax.f32 %v176, 0.0
  %v241 = vmax.f32 %v177, 0.0
  %v242 = vmax.f32 %v178, 0.0
  %v243 = vmax.f32 %v179, 0.0
  %v244 = vmax.f32 %v180, 0.0
  %v245 = vmax.f32 %v181, 0.0
  %v246 = vmax.f32 %v182, 0.0
  %v247 = vmax.f32 %v183, 0.0
  %v248 = vmax.f32 %v184, 0.0
  %v249 = vmax.f32 %v185, 0.0
  %v250 = vmax.f32 %v186, 0.0
  %v251 = vmax.f32 %v187, 0.0
  %v252 = vmax.f32 %v188, 0.0
  %v253 = vmax.f32 %v189, 0.0
  %v254 = vmax.f32 %v190, 0.0
  %v255 = vmax.f32 %v191, 0.0
  %v256 = vmax.f32 %v192, 0.0
  %v257 = vmax.f32 %v193, 0.0
  %v258 = vmax.f32 %v194, 0.0
  %v259 = vmax.f32 %v195, 0.0
  %v260 = vmax.f32 %v196, 0.0
  %v261 = vmax.f32 %v197, 0.0
  %v262 = vmax.f32 %v198, 0.0
  %v263 = vmax.f32 %v199, 0.0
  %v264 = vmax.f32 %v200, 0.0
  %v265 = vmax.f32 %v201, 0.0
  %v266 = vmax.f32 %v202, 0.0
  %v267 = vmax.f32 %v203, 0.0
  %v268 = vmax.f32 %v204, 0.0
  %v269 = vmax.f32 %v205, 0.0
  %v270 = vmax.f32 %v206, 0.0
  %v271 = vmax.f32 %v207, 0.0
  %v272 = vmax.f32 %v208, 0.0
  %v273 = vmax.f32 %v209, 0.0
  %v274 = vmax.f32 %v210, 0.0
  %v275 = vmax.f32 %v211, 0.0
  %v276 = vmax.f32 %v212, 0.0
  %v277 = vmax.f32 %v213, 0.0
  %v278 = vmax.f32 %v214, 0.0
  %v279 = vmax.f32 %v215, 0.0
  %v280 = vmax.f32 %v216, 0.0
  %v281 = vmax.f32 %v217, 0.0
  %v282 = vmax.f32 %v218, 0.0
  %v283 = vmax.f32 %v219, 0.0
  %v284 = vmax.f32 %v220, 0.0
  %v285 = vld [vmem:[%s2] sm:$0xff]
  %v286 = vld [vmem:[%s3] sm:$0x1]
  %v288 = vlaneseq
  %v289 = vshrl.u32 %v288, 7
  %v290 = vsub.s32 0, %v289
  %v291 = vrot.slane %v286, %v290
  %vm293 = vcmask 64512
  %v295 = vsel %vm293, %v221, 0
  %v298 = vsel %vm293, %v222, 0
  %v301 = vsel %vm293, %v223, 0
  %v304 = vsel %vm293, %v224, 0
  %v307 = vsel %vm293, %v225, 0
  %v310 = vsel %vm293, %v226, 0
  %v313 = vsel %vm293, %v227, 0
  %v316 = vsel %vm293, %v228, 0
  %v319 = vsel %vm293, %v229, 0
  %v322 = vsel %vm293, %v230, 0
  %v325 = vsel %vm293, %v231, 0
  %v328 = vsel %vm293, %v232, 0
  %v331 = vsel %vm293, %v233, 0
  %v334 = vsel %vm293, %v234, 0
  %v337 = vsel %vm293, %v235, 0
  %v340 = vsel %vm293, %v236, 0
  %v343 = vsel %vm293, %v237, 0
  %v346 = vsel %vm293, %v238, 0
  %v349 = vsel %vm293, %v239, 0
  %v352 = vsel %vm293, %v240, 0
  %v355 = vsel %vm293, %v241, 0
  %v358 = vsel %vm293, %v242, 0
  %v361 = vsel %vm293, %v243, 0
  %v364 = vsel %vm293, %v244, 0
  %v367 = vsel %vm293, %v245, 0
  %v370 = vsel %vm293, %v246, 0
  %v373 = vsel %vm293, %v247, 0
  %v376 = vsel %vm293, %v248, 0
  %v379 = vsel %vm293, %v249, 0
  %v382 = vsel %vm293, %v250, 0
  %v385 = vsel %vm293, %v251, 0
  %v388 = vsel %vm293, %v252, 0
  %v391 = vsel %vm293, %v253, 0
  %v394 = vsel %vm293, %v254, 0
  %v397 = vsel %vm293, %v255, 0
  %v400 = vsel %vm293, %v256, 0
  %v403 = vsel %vm293, %v257, 0
  %v406 = vsel %vm293, %v258, 0
  %v409 = vsel %vm293, %v259, 0
  %v412 = vsel %vm293, %v260, 0
  %v415 = vsel %vm293, %v261, 0
  %v418 = vsel %vm293, %v262, 0
  %v421 = vsel %vm293, %v263, 0
  %v424 = vsel %vm293, %v264, 0
  %v427 = vsel %vm293, %v265, 0
  %v430 = vsel %vm293, %v266, 0
  %v433 = vsel %vm293, %v267, 0
  %v436 = vsel %vm293, %v268, 0
  %v439 = vsel %vm293, %v269, 0
  %v442 = vsel %vm293, %v270, 0
  %v445 = vsel %vm293, %v271, 0
  %v448 = vsel %vm293, %v272, 0
  %v451 = vsel %vm293, %v273, 0
  %v454 = vsel %vm293, %v274, 0
  %v457 = vsel %vm293, %v275, 0
  %v460 = vsel %vm293, %v276, 0
  %v463 = vsel %vm293, %v277, 0
  %v466 = vsel %vm293, %v278, 0
  %v469 = vsel %vm293, %v279, 0
  %v472 = vsel %vm293, %v280, 0
  %v475 = vsel %vm293, %v281, 0
  %v478 = vsel %vm293, %v282, 0
  %v481 = vsel %vm293, %v283, 0
  %v484 = vsel %vm293, %v284, 0
  %486 = vmatprep.subr.mxu0 0.0
  %487 = vmatpush1.msra.mxu0 0.0
  %488 = vmatprep.subr.mxu0 0.0
  %489 = vmatpush1.msra.mxu0 0.0
  %490 = vmatprep.subr.mxu0 0.0
  %491 = vmatpush1.msra.mxu0 0.0
  %492 = vmatprep.subr.mxu0 0.0
  %493 = vmatpush1.msra.mxu0 0.0
  %494 = vmatprep.subr.mxu0 0.0
  %495 = vmatpush1.msra.mxu0 0.0
  %496 = vmatprep.subr.mxu0 0.0
  %497 = vmatpush1.msra.mxu0 0.0
  %498 = vmatprep.subr.mxu0 0.0
  %499 = vmatpush1.msra.mxu0 0.0
  %500 = vmatprep.subr.mxu0 0.0
  %501 = vmatpush1.msra.mxu0 0.0
  %502 = vmatprep.subr.mxu0 0.0
  %503 = vmatpush1.msra.mxu0 0.0
  %504 = vmatprep.subr.mxu0 0.0
  %505 = vmatpush1.msra.mxu0 0.0
  %506 = vmatprep.subr.mxu0 0.0
  %507 = vmatpush1.msra.mxu0 0.0
  %508 = vmatprep.subr.mxu0 0.0
  %509 = vmatpush1.msra.mxu0 0.0
  %510 = vmatprep.subr.mxu0 0.0
  %511 = vmatpush1.msra.mxu0 0.0
  %512 = vmatprep.subr.mxu0 0.0
  %513 = vmatpush1.msra.mxu0 0.0
  %514 = vmatprep.subr.mxu0 0.0
  %515 = vmatpush1.msra.mxu0 0.0
  %516 = vmatprep.subr.mxu0 0.0
  %517 = vmatpush1.msra.mxu0 %v285
  %518 = vmatprep.subr.mxu0 0.0
  %519 = vmatpush2.msra.mxu0 0.0
  %520 = vmatprep.subr.mxu0 0.0
  %521 = vmatpush2.msra.mxu0 0.0
  %522 = vmatprep.subr.mxu0 0.0
  %523 = vmatpush2.msra.mxu0 0.0
  %524 = vmatprep.subr.mxu0 0.0
  %525 = vmatpush2.msra.mxu0 0.0
  %526 = vmatprep.subr.mxu0 0.0
  %527 = vmatpush2.msra.mxu0 0.0
  %528 = vmatprep.subr.mxu0 0.0
  %529 = vmatpush2.msra.mxu0 0.0
  %530 = vmatprep.subr.mxu0 0.0
  %531 = vmatpush2.msra.mxu0 0.0
  %532 = vmatprep.subr.mxu0 0.0
  %533 = vmatpush2.msra.mxu0 0.0
  %534 = vmatprep.subr.mxu0 0.0
  %535 = vmatpush2.msra.mxu0 0.0
  %536 = vmatprep.subr.mxu0 0.0
  %537 = vmatpush2.msra.mxu0 0.0
  %538 = vmatprep.subr.mxu0 0.0
  %539 = vmatpush2.msra.mxu0 0.0
  %540 = vmatprep.subr.mxu0 0.0
  %541 = vmatpush2.msra.mxu0 0.0
  %542 = vmatprep.subr.mxu0 0.0
  %543 = vmatpush2.msra.mxu0 0.0
  %544 = vmatprep.subr.mxu0 0.0
  %545 = vmatpush2.msra.mxu0 0.0
  %546 = vmatprep.subr.mxu0 0.0
  %547 = vmatpush2.msra.mxu0 0.0
  %548 = vmatprep.subr.mxu0 0.0
  %549 = vmatpush2.msra.mxu0 0.0
  %550 = vmatprep.mubr.f32.mxu0 0.0
  %551 = vmatmul.mubr.f32.gmra.mxu0 %v295
  %v552 = vpop.f32.mrf.mxu0
  %v553 = vadd.f32 %v291, %v552
  %v554 = vpop.f32.mrf.mxu0
  %555 = vmatprep.mubr.f32.mxu0 0.0
  %556 = vmatmul.mubr.f32.gmra.mxu0 %v298
  %v557 = vpop.f32.mrf.mxu0
  %v558 = vadd.f32 %v291, %v557
  %v559 = vpop.f32.mrf.mxu0
  %560 = vmatprep.mubr.f32.mxu0 0.0
  %561 = vmatmul.mubr.f32.gmra.mxu0 %v301
  %v562 = vpop.f32.mrf.mxu0
  %v563 = vadd.f32 %v291, %v562
  %v564 = vpop.f32.mrf.mxu0
  %565 = vmatprep.mubr.f32.mxu0 0.0
  %566 = vmatmul.mubr.f32.gmra.mxu0 %v304
  %v567 = vpop.f32.mrf.mxu0
  %v568 = vadd.f32 %v291, %v567
  %v569 = vpop.f32.mrf.mxu0
  %570 = vmatprep.mubr.f32.mxu0 0.0
  %571 = vmatmul.mubr.f32.gmra.mxu0 %v307
  %v572 = vpop.f32.mrf.mxu0
  %v573 = vadd.f32 %v291, %v572
  %v574 = vpop.f32.mrf.mxu0
  %575 = vmatprep.mubr.f32.mxu0 0.0
  %576 = vmatmul.mubr.f32.gmra.mxu0 %v310
  %v577 = vpop.f32.mrf.mxu0
  %v578 = vadd.f32 %v291, %v577
  %v579 = vpop.f32.mrf.mxu0
  %580 = vmatprep.mubr.f32.mxu0 0.0
  %581 = vmatmul.mubr.f32.gmra.mxu0 %v313
  %v582 = vpop.f32.mrf.mxu0
  %v583 = vadd.f32 %v291, %v582
  %v584 = vpop.f32.mrf.mxu0
  %585 = vmatprep.mubr.f32.mxu0 0.0
  %586 = vmatmul.mubr.f32.gmra.mxu0 %v316
  %v587 = vpop.f32.mrf.mxu0
  %v588 = vadd.f32 %v291, %v587
  %v589 = vpop.f32.mrf.mxu0
  %590 = vmatprep.mubr.f32.mxu0 0.0
  %591 = vmatmul.mubr.f32.gmra.mxu0 %v319
  %v592 = vpop.f32.mrf.mxu0
  %v593 = vadd.f32 %v291, %v592
  %v594 = vpop.f32.mrf.mxu0
  %595 = vmatprep.mubr.f32.mxu0 0.0
  %596 = vmatmul.mubr.f32.gmra.mxu0 %v322
  %v597 = vpop.f32.mrf.mxu0
  %v598 = vadd.f32 %v291, %v597
  %v599 = vpop.f32.mrf.mxu0
  %600 = vmatprep.mubr.f32.mxu0 0.0
  %601 = vmatmul.mubr.f32.gmra.mxu0 %v325
  %v602 = vpop.f32.mrf.mxu0
  %v603 = vadd.f32 %v291, %v602
  %v604 = vpop.f32.mrf.mxu0
  %605 = vmatprep.mubr.f32.mxu0 0.0
  %606 = vmatmul.mubr.f32.gmra.mxu0 %v328
  %v607 = vpop.f32.mrf.mxu0
  %v608 = vadd.f32 %v291, %v607
  %v609 = vpop.f32.mrf.mxu0
  %610 = vmatprep.mubr.f32.mxu0 0.0
  %611 = vmatmul.mubr.f32.gmra.mxu0 %v331
  %v612 = vpop.f32.mrf.mxu0
  %v613 = vadd.f32 %v291, %v612
  %v614 = vpop.f32.mrf.mxu0
  %615 = vmatprep.mubr.f32.mxu0 0.0
  %616 = vmatmul.mubr.f32.gmra.mxu0 %v334
  %v617 = vpop.f32.mrf.mxu0
  %v618 = vadd.f32 %v291, %v617
  %v619 = vpop.f32.mrf.mxu0
  %620 = vmatprep.mubr.f32.mxu0 0.0
  %621 = vmatmul.mubr.f32.gmra.mxu0 %v337
  %v622 = vpop.f32.mrf.mxu0
  %v623 = vadd.f32 %v291, %v622
  %v624 = vpop.f32.mrf.mxu0
  %625 = vmatprep.mubr.f32.mxu0 0.0
  %626 = vmatmul.mubr.f32.gmra.mxu0 %v340
  %v627 = vpop.f32.mrf.mxu0
  %v628 = vadd.f32 %v291, %v627
  %v629 = vpop.f32.mrf.mxu0
  %630 = vmatprep.mubr.f32.mxu0 0.0
  %631 = vmatmul.mubr.f32.gmra.mxu0 %v343
  %v632 = vpop.f32.mrf.mxu0
  %v633 = vadd.f32 %v291, %v632
  %v634 = vpop.f32.mrf.mxu0
  %635 = vmatprep.mubr.f32.mxu0 0.0
  %636 = vmatmul.mubr.f32.gmra.mxu0 %v346
  %v637 = vpop.f32.mrf.mxu0
  %v638 = vadd.f32 %v291, %v637
  %v639 = vpop.f32.mrf.mxu0
  %640 = vmatprep.mubr.f32.mxu0 0.0
  %641 = vmatmul.mubr.f32.gmra.mxu0 %v349
  %v642 = vpop.f32.mrf.mxu0
  %v643 = vadd.f32 %v291, %v642
  %v644 = vpop.f32.mrf.mxu0
  %645 = vmatprep.mubr.f32.mxu0 0.0
  %646 = vmatmul.mubr.f32.gmra.mxu0 %v352
  %v647 = vpop.f32.mrf.mxu0
  %v648 = vadd.f32 %v291, %v647
  %v649 = vpop.f32.mrf.mxu0
  %650 = vmatprep.mubr.f32.mxu0 0.0
  %651 = vmatmul.mubr.f32.gmra.mxu0 %v355
  %v652 = vpop.f32.mrf.mxu0
  %v653 = vadd.f32 %v291, %v652
  %v654 = vpop.f32.mrf.mxu0
  %655 = vmatprep.mubr.f32.mxu0 0.0
  %656 = vmatmul.mubr.f32.gmra.mxu0 %v358
  %v657 = vpop.f32.mrf.mxu0
  %v658 = vadd.f32 %v291, %v657
  %v659 = vpop.f32.mrf.mxu0
  %660 = vmatprep.mubr.f32.mxu0 0.0
  %661 = vmatmul.mubr.f32.gmra.mxu0 %v361
  %v662 = vpop.f32.mrf.mxu0
  %v663 = vadd.f32 %v291, %v662
  %v664 = vpop.f32.mrf.mxu0
  %665 = vmatprep.mubr.f32.mxu0 0.0
  %666 = vmatmul.mubr.f32.gmra.mxu0 %v364
  %v667 = vpop.f32.mrf.mxu0
  %v668 = vadd.f32 %v291, %v667
  %v669 = vpop.f32.mrf.mxu0
  %670 = vmatprep.mubr.f32.mxu0 0.0
  %671 = vmatmul.mubr.f32.gmra.mxu0 %v367
  %v672 = vpop.f32.mrf.mxu0
  %v673 = vadd.f32 %v291, %v672
  %v674 = vpop.f32.mrf.mxu0
  %675 = vmatprep.mubr.f32.mxu0 0.0
  %676 = vmatmul.mubr.f32.gmra.mxu0 %v370
  %v677 = vpop.f32.mrf.mxu0
  %v678 = vadd.f32 %v291, %v677
  %v679 = vpop.f32.mrf.mxu0
  %680 = vmatprep.mubr.f32.mxu0 0.0
  %681 = vmatmul.mubr.f32.gmra.mxu0 %v373
  %v682 = vpop.f32.mrf.mxu0
  %v683 = vadd.f32 %v291, %v682
  %v684 = vpop.f32.mrf.mxu0
  %685 = vmatprep.mubr.f32.mxu0 0.0
  %686 = vmatmul.mubr.f32.gmra.mxu0 %v376
  %v687 = vpop.f32.mrf.mxu0
  %v688 = vadd.f32 %v291, %v687
  %v689 = vpop.f32.mrf.mxu0
  %690 = vmatprep.mubr.f32.mxu0 0.0
  %691 = vmatmul.mubr.f32.gmra.mxu0 %v379
  %v692 = vpop.f32.mrf.mxu0
  %v693 = vadd.f32 %v291, %v692
  %v694 = vpop.f32.mrf.mxu0
  %695 = vmatprep.mubr.f32.mxu0 0.0
  %696 = vmatmul.mubr.f32.gmra.mxu0 %v382
  %v697 = vpop.f32.mrf.mxu0
  %v698 = vadd.f32 %v291, %v697
  %v699 = vpop.f32.mrf.mxu0
  %700 = vmatprep.mubr.f32.mxu0 0.0
  %701 = vmatmul.mubr.f32.gmra.mxu0 %v385
  %v702 = vpop.f32.mrf.mxu0
  %v703 = vadd.f32 %v291, %v702
  %v704 = vpop.f32.mrf.mxu0
  %705 = vmatprep.mubr.f32.mxu0 0.0
  %706 = vmatmul.mubr.f32.gmra.mxu0 %v388
  %v707 = vpop.f32.mrf.mxu0
  %v708 = vadd.f32 %v291, %v707
  %v709 = vpop.f32.mrf.mxu0
  %710 = vmatprep.mubr.f32.mxu0 0.0
  %711 = vmatmul.mubr.f32.gmra.mxu0 %v391
  %v712 = vpop.f32.mrf.mxu0
  %v713 = vadd.f32 %v291, %v712
  %v714 = vpop.f32.mrf.mxu0
  %715 = vmatprep.mubr.f32.mxu0 0.0
  %716 = vmatmul.mubr.f32.gmra.mxu0 %v394
  %v717 = vpop.f32.mrf.mxu0
  %v718 = vadd.f32 %v291, %v717
  %v719 = vpop.f32.mrf.mxu0
  %720 = vmatprep.mubr.f32.mxu0 0.0
  %721 = vmatmul.mubr.f32.gmra.mxu0 %v397
  %v722 = vpop.f32.mrf.mxu0
  %v723 = vadd.f32 %v291, %v722
  %v724 = vpop.f32.mrf.mxu0
  %725 = vmatprep.mubr.f32.mxu0 0.0
  %726 = vmatmul.mubr.f32.gmra.mxu0 %v400
  %v727 = vpop.f32.mrf.mxu0
  %v728 = vadd.f32 %v291, %v727
  %v729 = vpop.f32.mrf.mxu0
  %730 = vmatprep.mubr.f32.mxu0 0.0
  %731 = vmatmul.mubr.f32.gmra.mxu0 %v403
  %v732 = vpop.f32.mrf.mxu0
  %v733 = vadd.f32 %v291, %v732
  %v734 = vpop.f32.mrf.mxu0
  %735 = vmatprep.mubr.f32.mxu0 0.0
  %736 = vmatmul.mubr.f32.gmra.mxu0 %v406
  %v737 = vpop.f32.mrf.mxu0
  %v738 = vadd.f32 %v291, %v737
  %v739 = vpop.f32.mrf.mxu0
  %740 = vmatprep.mubr.f32.mxu0 0.0
  %741 = vmatmul.mubr.f32.gmra.mxu0 %v409
  %v742 = vpop.f32.mrf.mxu0
  %v743 = vadd.f32 %v291, %v742
  %v744 = vpop.f32.mrf.mxu0
  %745 = vmatprep.mubr.f32.mxu0 0.0
  %746 = vmatmul.mubr.f32.gmra.mxu0 %v412
  %v747 = vpop.f32.mrf.mxu0
  %v748 = vadd.f32 %v291, %v747
  %v749 = vpop.f32.mrf.mxu0
  %750 = vmatprep.mubr.f32.mxu0 0.0
  %751 = vmatmul.mubr.f32.gmra.mxu0 %v415
  %v752 = vpop.f32.mrf.mxu0
  %v753 = vadd.f32 %v291, %v752
  %v754 = vpop.f32.mrf.mxu0
  %755 = vmatprep.mubr.f32.mxu0 0.0
  %756 = vmatmul.mubr.f32.gmra.mxu0 %v418
  %v757 = vpop.f32.mrf.mxu0
  %v758 = vadd.f32 %v291, %v757
  %v759 = vpop.f32.mrf.mxu0
  %760 = vmatprep.mubr.f32.mxu0 0.0
  %761 = vmatmul.mubr.f32.gmra.mxu0 %v421
  %v762 = vpop.f32.mrf.mxu0
  %v763 = vadd.f32 %v291, %v762
  %v764 = vpop.f32.mrf.mxu0
  %765 = vmatprep.mubr.f32.mxu0 0.0
  %766 = vmatmul.mubr.f32.gmra.mxu0 %v424
  %v767 = vpop.f32.mrf.mxu0
  %v768 = vadd.f32 %v291, %v767
  %v769 = vpop.f32.mrf.mxu0
  %770 = vmatprep.mubr.f32.mxu0 0.0
  %771 = vmatmul.mubr.f32.gmra.mxu0 %v427
  %v772 = vpop.f32.mrf.mxu0
  %v773 = vadd.f32 %v291, %v772
  %v774 = vpop.f32.mrf.mxu0
  %775 = vmatprep.mubr.f32.mxu0 0.0
  %776 = vmatmul.mubr.f32.gmra.mxu0 %v430
  %v777 = vpop.f32.mrf.mxu0
  %v778 = vadd.f32 %v291, %v777
  %v779 = vpop.f32.mrf.mxu0
  %780 = vmatprep.mubr.f32.mxu0 0.0
  %781 = vmatmul.mubr.f32.gmra.mxu0 %v433
  %v782 = vpop.f32.mrf.mxu0
  %v783 = vadd.f32 %v291, %v782
  %v784 = vpop.f32.mrf.mxu0
  %785 = vmatprep.mubr.f32.mxu0 0.0
  %786 = vmatmul.mubr.f32.gmra.mxu0 %v436
  %v787 = vpop.f32.mrf.mxu0
  %v788 = vadd.f32 %v291, %v787
  %v789 = vpop.f32.mrf.mxu0
  %790 = vmatprep.mubr.f32.mxu0 0.0
  %791 = vmatmul.mubr.f32.gmra.mxu0 %v439
  %v792 = vpop.f32.mrf.mxu0
  %v793 = vadd.f32 %v291, %v792
  %v794 = vpop.f32.mrf.mxu0
  %795 = vmatprep.mubr.f32.mxu0 0.0
  %796 = vmatmul.mubr.f32.gmra.mxu0 %v442
  %v797 = vpop.f32.mrf.mxu0
  %v798 = vadd.f32 %v291, %v797
  %v799 = vpop.f32.mrf.mxu0
  %800 = vmatprep.mubr.f32.mxu0 0.0
  %801 = vmatmul.mubr.f32.gmra.mxu0 %v445
  %v802 = vpop.f32.mrf.mxu0
  %v803 = vadd.f32 %v291, %v802
  %v804 = vpop.f32.mrf.mxu0
  %805 = vmatprep.mubr.f32.mxu0 0.0
  %806 = vmatmul.mubr.f32.gmra.mxu0 %v448
  %v807 = vpop.f32.mrf.mxu0
  %v808 = vadd.f32 %v291, %v807
  %v809 = vpop.f32.mrf.mxu0
  %810 = vmatprep.mubr.f32.mxu0 0.0
  %811 = vmatmul.mubr.f32.gmra.mxu0 %v451
  %v812 = vpop.f32.mrf.mxu0
  %v813 = vadd.f32 %v291, %v812
  %v814 = vpop.f32.mrf.mxu0
  %815 = vmatprep.mubr.f32.mxu0 0.0
  %816 = vmatmul.mubr.f32.gmra.mxu0 %v454
  %v817 = vpop.f32.mrf.mxu0
  %v818 = vadd.f32 %v291, %v817
  %v819 = vpop.f32.mrf.mxu0
  %820 = vmatprep.mubr.f32.mxu0 0.0
  %821 = vmatmul.mubr.f32.gmra.mxu0 %v457
  %v822 = vpop.f32.mrf.mxu0
  %v823 = vadd.f32 %v291, %v822
  %v824 = vpop.f32.mrf.mxu0
  %825 = vmatprep.mubr.f32.mxu0 0.0
  %826 = vmatmul.mubr.f32.gmra.mxu0 %v460
  %v827 = vpop.f32.mrf.mxu0
  %v828 = vadd.f32 %v291, %v827
  %v829 = vpop.f32.mrf.mxu0
  %830 = vmatprep.mubr.f32.mxu0 0.0
  %831 = vmatmul.mubr.f32.gmra.mxu0 %v463
  %v832 = vpop.f32.mrf.mxu0
  %v833 = vadd.f32 %v291, %v832
  %v834 = vpop.f32.mrf.mxu0
  %835 = vmatprep.mubr.f32.mxu0 0.0
  %836 = vmatmul.mubr.f32.gmra.mxu0 %v466
  %v837 = vpop.f32.mrf.mxu0
  %v838 = vadd.f32 %v291, %v837
  %v839 = vpop.f32.mrf.mxu0
  %840 = vmatprep.mubr.f32.mxu0 0.0
  %841 = vmatmul.mubr.f32.gmra.mxu0 %v469
  %v842 = vpop.f32.mrf.mxu0
  %v843 = vadd.f32 %v291, %v842
  %v844 = vpop.f32.mrf.mxu0
  %845 = vmatprep.mubr.f32.mxu0 0.0
  %846 = vmatmul.mubr.f32.gmra.mxu0 %v472
  %v847 = vpop.f32.mrf.mxu0
  %v848 = vadd.f32 %v291, %v847
  %v849 = vpop.f32.mrf.mxu0
  %850 = vmatprep.mubr.f32.mxu0 0.0
  %851 = vmatmul.mubr.f32.gmra.mxu0 %v475
  %v852 = vpop.f32.mrf.mxu0
  %v853 = vadd.f32 %v291, %v852
  %v854 = vpop.f32.mrf.mxu0
  %855 = vmatprep.mubr.f32.mxu0 0.0
  %856 = vmatmul.mubr.f32.gmra.mxu0 %v478
  %v857 = vpop.f32.mrf.mxu0
  %v858 = vadd.f32 %v291, %v857
  %v859 = vpop.f32.mrf.mxu0
  %860 = vmatprep.mubr.f32.mxu0 0.0
  %861 = vmatmul.mubr.f32.gmra.mxu0 %v481
  %v862 = vpop.f32.mrf.mxu0
  %v863 = vadd.f32 %v291, %v862
  %v864 = vpop.f32.mrf.mxu0
  %865 = vmatprep.mubr.f32.mxu0 0.0
  %866 = vmatmul.mubr.f32.gmra.mxu0 %v484
  %v867 = vpop.f32.mrf.mxu0
  %v868 = vadd.f32 %v291, %v867
  %v869 = vpop.f32.mrf.mxu0
  %870 = vdwg.mxu0
  %vm871 = vcmask 261120
  %872 = vst.msk [vmem:[%s4] sm:$0xff] %vm871, %v553
  %873 = vst.msk [vmem:[%s4 + $0x8] sm:$0xff] %vm871, %v558
  %874 = vst.msk [vmem:[%s4 + $0x10] sm:$0xff] %vm871, %v563
  %875 = vst.msk [vmem:[%s4 + $0x18] sm:$0xff] %vm871, %v568
  %876 = vst.msk [vmem:[%s4 + $0x20] sm:$0xff] %vm871, %v573
  %877 = vst.msk [vmem:[%s4 + $0x28] sm:$0xff] %vm871, %v578
  %878 = vst.msk [vmem:[%s4 + $0x30] sm:$0xff] %vm871, %v583
  %879 = vst.msk [vmem:[%s4 + $0x38] sm:$0xff] %vm871, %v588
  %880 = vst.msk [vmem:[%s4 + $0x40] sm:$0xff] %vm871, %v593
  %881 = vst.msk [vmem:[%s4 + $0x48] sm:$0xff] %vm871, %v598
  %882 = vst.msk [vmem:[%s4 + $0x50] sm:$0xff] %vm871, %v603
  %883 = vst.msk [vmem:[%s4 + $0x58] sm:$0xff] %vm871, %v608
  %884 = vst.msk [vmem:[%s4 + $0x60] sm:$0xff] %vm871, %v613
  %885 = vst.msk [vmem:[%s4 + $0x68] sm:$0xff] %vm871, %v618
  %886 = vst.msk [vmem:[%s4 + $0x70] sm:$0xff] %vm871, %v623
  %887 = vst.msk [vmem:[%s4 + $0x78] sm:$0xff] %vm871, %v628
  %888 = vst.msk [vmem:[%s4 + $0x80] sm:$0xff] %vm871, %v633
  %889 = vst.msk [vmem:[%s4 + $0x88] sm:$0xff] %vm871, %v638
  %890 = vst.msk [vmem:[%s4 + $0x90] sm:$0xff] %vm871, %v643
  %891 = vst.msk [vmem:[%s4 + $0x98] sm:$0xff] %vm871, %v648
  %892 = vst.msk [vmem:[%s4 + $0xa0] sm:$0xff] %vm871, %v653
  %893 = vst.msk [vmem:[%s4 + $0xa8] sm:$0xff] %vm871, %v658
  %894 = vst.msk [vmem:[%s4 + $0xb0] sm:$0xff] %vm871, %v663
  %895 = vst.msk [vmem:[%s4 + $0xb8] sm:$0xff] %vm871, %v668
  %896 = vst.msk [vmem:[%s4 + $0xc0] sm:$0xff] %vm871, %v673
  %897 = vst.msk [vmem:[%s4 + $0xc8] sm:$0xff] %vm871, %v678
  %898 = vst.msk [vmem:[%s4 + $0xd0] sm:$0xff] %vm871, %v683
  %899 = vst.msk [vmem:[%s4 + $0xd8] sm:$0xff] %vm871, %v688
  %900 = vst.msk [vmem:[%s4 + $0xe0] sm:$0xff] %vm871, %v693
  %901 = vst.msk [vmem:[%s4 + $0xe8] sm:$0xff] %vm871, %v698
  %902 = vst.msk [vmem:[%s4 + $0xf0] sm:$0xff] %vm871, %v703
  %903 = vst.msk [vmem:[%s4 + $0xf8] sm:$0xff] %vm871, %v708
  %904 = vst.msk [vmem:[%s4 + $0x100] sm:$0xff] %vm871, %v713
  %905 = vst.msk [vmem:[%s4 + $0x108] sm:$0xff] %vm871, %v718
  %906 = vst.msk [vmem:[%s4 + $0x110] sm:$0xff] %vm871, %v723
  %907 = vst.msk [vmem:[%s4 + $0x118] sm:$0xff] %vm871, %v728
  %908 = vst.msk [vmem:[%s4 + $0x120] sm:$0xff] %vm871, %v733
  %909 = vst.msk [vmem:[%s4 + $0x128] sm:$0xff] %vm871, %v738
  %910 = vst.msk [vmem:[%s4 + $0x130] sm:$0xff] %vm871, %v743
  %911 = vst.msk [vmem:[%s4 + $0x138] sm:$0xff] %vm871, %v748
  %912 = vst.msk [vmem:[%s4 + $0x140] sm:$0xff] %vm871, %v753
  %913 = vst.msk [vmem:[%s4 + $0x148] sm:$0xff] %vm871, %v758
  %914 = vst.msk [vmem:[%s4 + $0x150] sm:$0xff] %vm871, %v763
  %915 = vst.msk [vmem:[%s4 + $0x158] sm:$0xff] %vm871, %v768
  %916 = vst.msk [vmem:[%s4 + $0x160] sm:$0xff] %vm871, %v773
  %917 = vst.msk [vmem:[%s4 + $0x168] sm:$0xff] %vm871, %v778
  %918 = vst.msk [vmem:[%s4 + $0x170] sm:$0xff] %vm871, %v783
  %919 = vst.msk [vmem:[%s4 + $0x178] sm:$0xff] %vm871, %v788
  %920 = vst.msk [vmem:[%s4 + $0x180] sm:$0xff] %vm871, %v793
  %921 = vst.msk [vmem:[%s4 + $0x188] sm:$0xff] %vm871, %v798
  %922 = vst.msk [vmem:[%s4 + $0x190] sm:$0xff] %vm871, %v803
  %923 = vst.msk [vmem:[%s4 + $0x198] sm:$0xff] %vm871, %v808
  %924 = vst.msk [vmem:[%s4 + $0x1a0] sm:$0xff] %vm871, %v813
  %925 = vst.msk [vmem:[%s4 + $0x1a8] sm:$0xff] %vm871, %v818
  %926 = vst.msk [vmem:[%s4 + $0x1b0] sm:$0xff] %vm871, %v823
  %927 = vst.msk [vmem:[%s4 + $0x1b8] sm:$0xff] %vm871, %v828
  %928 = vst.msk [vmem:[%s4 + $0x1c0] sm:$0xff] %vm871, %v833
  %929 = vst.msk [vmem:[%s4 + $0x1c8] sm:$0xff] %vm871, %v838
  %930 = vst.msk [vmem:[%s4 + $0x1d0] sm:$0xff] %vm871, %v843
  %931 = vst.msk [vmem:[%s4 + $0x1d8] sm:$0xff] %vm871, %v848
  %932 = vst.msk [vmem:[%s4 + $0x1e0] sm:$0xff] %vm871, %v853
  %933 = vst.msk [vmem:[%s4 + $0x1e8] sm:$0xff] %vm871, %v858
  %934 = vst.msk [vmem:[%s4 + $0x1f0] sm:$0xff] %vm871, %v863
  %935 = vst.msk [vmem:[%s4 + $0x1f8] sm:$0xff] %vm871, %v868
  %p936 = scmp.eq.s32.totalorder 0, 0
  // Predicated region
  $region18: #{_lambda_.4} parent=0 // pred_check
    %p937 = pneg %p936
  $region19: #{_lambda_.4} parent=0 // pred_check_branch
    %939 = sbr.rel (%p937) target = $region21
  $region20: #{_lambda_.4} parent=0 // pred_region
    %vm940 = vcmask 254976
    %941 = vst.msk [vmem:[%s5] sm:$0x3] %vm940, 0.0
  $region21: #{_lambda_.4} parent=0 // pred_fallthru
    _
  %v942 = vld [vmem:[%s5] sm:$0x3]
  %v943 = vsel %vm871, %v553, 0.0
  %v944 = vsel %vm871, %v558, 0.0
  %v945 = vadd.f32 %v943, %v944
  %v946 = vsel %vm871, %v563, 0.0
  %v947 = vadd.f32 %v945, %v946
  %v948 = vsel %vm871, %v568, 0.0
  %v949 = vadd.f32 %v947, %v948
  %v950 = vsel %vm871, %v573, 0.0
  %v951 = vadd.f32 %v949, %v950
  %v952 = vsel %vm871, %v578, 0.0
  %v953 = vadd.f32 %v951, %v952
  %v954 = vsel %vm871, %v583, 0.0
  %v955 = vadd.f32 %v953, %v954
  %v956 = vsel %vm871, %v588, 0.0
  %v957 = vadd.f32 %v955, %v956
  %v958 = vsel %vm871, %v593, 0.0
  %v959 = vadd.f32 %v957, %v958
  %v960 = vsel %vm871, %v598, 0.0
  %v961 = vadd.f32 %v959, %v960
  %v962 = vsel %vm871, %v603, 0.0
  %v963 = vadd.f32 %v961, %v962
  %v964 = vsel %vm871, %v608, 0.0
  %v965 = vadd.f32 %v963, %v964
  %v966 = vsel %vm871, %v613, 0.0
  %v967 = vadd.f32 %v965, %v966
  %v968 = vsel %vm871, %v618, 0.0
  %v969 = vadd.f32 %v967, %v968
  %v970 = vsel %vm871, %v623, 0.0
  %v971 = vadd.f32 %v969, %v970
  %v972 = vsel %vm871, %v628, 0.0
  %v973 = vadd.f32 %v971, %v972
  %v974 = vsel %vm871, %v633, 0.0
  %v975 = vadd.f32 %v973, %v974
  %v976 = vsel %vm871, %v638, 0.0
  %v977 = vadd.f32 %v975, %v976
  %v978 = vsel %vm871, %v643, 0.0
  %v979 = vadd.f32 %v977, %v978
  %v980 = vsel %vm871, %v648, 0.0
  %v981 = vadd.f32 %v979, %v980
  %v982 = vsel %vm871, %v653, 0.0
  %v983 = vadd.f32 %v981, %v982
  %v984 = vsel %vm871, %v658, 0.0
  %v985 = vadd.f32 %v983, %v984
  %v986 = vsel %vm871, %v663, 0.0
  %v987 = vadd.f32 %v985, %v986
  %v988 = vsel %vm871, %v668, 0.0
  %v989 = vadd.f32 %v987, %v988
  %v990 = vsel %vm871, %v673, 0.0
  %v991 = vadd.f32 %v989, %v990
  %v992 = vsel %vm871, %v678, 0.0
  %v993 = vadd.f32 %v991, %v992
  %v994 = vsel %vm871, %v683, 0.0
  %v995 = vadd.f32 %v993, %v994
  %v996 = vsel %vm871, %v688, 0.0
  %v997 = vadd.f32 %v995, %v996
  %v998 = vsel %vm871, %v693, 0.0
  %v999 = vadd.f32 %v997, %v998
  %v1000 = vsel %vm871, %v698, 0.0
  %v1001 = vadd.f32 %v999, %v1000
  %v1002 = vsel %vm871, %v703, 0.0
  %v1003 = vadd.f32 %v1001, %v1002
  %v1004 = vsel %vm871, %v708, 0.0
  %v1005 = vadd.f32 %v1003, %v1004
  %v1006 = vsel %vm871, %v713, 0.0
  %v1007 = vadd.f32 %v1005, %v1006
  %v1008 = vsel %vm871, %v718, 0.0
  %v1009 = vadd.f32 %v1007, %v1008
  %v1010 = vsel %vm871, %v723, 0.0
  %v1011 = vadd.f32 %v1009, %v1010
  %v1012 = vsel %vm871, %v728, 0.0
  %v1013 = vadd.f32 %v1011, %v1012
  %v1014 = vsel %vm871, %v733, 0.0
  %v1015 = vadd.f32 %v1013, %v1014
  %v1016 = vsel %vm871, %v738, 0.0
  %v1017 = vadd.f32 %v1015, %v1016
  %v1018 = vsel %vm871, %v743, 0.0
  %v1019 = vadd.f32 %v1017, %v1018
  %v1020 = vsel %vm871, %v748, 0.0
  %v1021 = vadd.f32 %v1019, %v1020
  %v1022 = vsel %vm871, %v753, 0.0
  %v1023 = vadd.f32 %v1021, %v1022
  %v1024 = vsel %vm871, %v758, 0.0
  %v1025 = vadd.f32 %v1023, %v1024
  %v1026 = vsel %vm871, %v763, 0.0
  %v1027 = vadd.f32 %v1025, %v1026
  %v1028 = vsel %vm871, %v768, 0.0
  %v1029 = vadd.f32 %v1027, %v1028
  %v1030 = vsel %vm871, %v773, 0.0
  %v1031 = vadd.f32 %v1029, %v1030
  %v1032 = vsel %vm871, %v778, 0.0
  %v1033 = vadd.f32 %v1031, %v1032
  %v1034 = vsel %vm871, %v783, 0.0
  %v1035 = vadd.f32 %v1033, %v1034
  %v1036 = vsel %vm871, %v788, 0.0
  %v1037 = vadd.f32 %v1035, %v1036
  %v1038 = vsel %vm871, %v793, 0.0
  %v1039 = vadd.f32 %v1037, %v1038
  %v1040 = vsel %vm871, %v798, 0.0
  %v1041 = vadd.f32 %v1039, %v1040
  %v1042 = vsel %vm871, %v803, 0.0
  %v1043 = vadd.f32 %v1041, %v1042
  %v1044 = vsel %vm871, %v808, 0.0
  %v1045 = vadd.f32 %v1043, %v1044
  %v1046 = vsel %vm871, %v813, 0.0
  %v1047 = vadd.f32 %v1045, %v1046
  %v1048 = vsel %vm871, %v818, 0.0
  %v1049 = vadd.f32 %v1047, %v1048
  %v1050 = vsel %vm871, %v823, 0.0
  %v1051 = vadd.f32 %v1049, %v1050
  %v1052 = vsel %vm871, %v828, 0.0
  %v1053 = vadd.f32 %v1051, %v1052
  %v1054 = vsel %vm871, %v833, 0.0
  %v1055 = vadd.f32 %v1053, %v1054
  %v1056 = vsel %vm871, %v838, 0.0
  %v1057 = vadd.f32 %v1055, %v1056
  %v1058 = vsel %vm871, %v843, 0.0
  %v1059 = vadd.f32 %v1057, %v1058
  %v1060 = vsel %vm871, %v848, 0.0
  %v1061 = vadd.f32 %v1059, %v1060
  %v1062 = vsel %vm871, %v853, 0.0
  %v1063 = vadd.f32 %v1061, %v1062
  %v1064 = vsel %vm871, %v858, 0.0
  %v1065 = vadd.f32 %v1063, %v1064
  %v1066 = vsel %vm871, %v863, 0.0
  %v1067 = vadd.f32 %v1065, %v1066
  %v1068 = vsel %vm871, %v868, 0.0
  %v1069 = vadd.f32 %v1067, %v1068
  %v1070 = vrot.slane %v1069, 4
  %v1071 = vadd.f32 %v1069, %v1070
  %v1072 = vrot.slane %v1071, 2
  %v1073 = vadd.f32 %v1071, %v1072
  %v1074 = vrot.slane %v1073, 1
  %v1075 = vadd.f32 %v1073, %v1074
  %v1076 = vmul.f32 %v553, %v553
  %v1077 = vmul.f32 %v558, %v558
  %v1078 = vmul.f32 %v563, %v563
  %v1079 = vmul.f32 %v568, %v568
  %v1080 = vmul.f32 %v573, %v573
  %v1081 = vmul.f32 %v578, %v578
  %v1082 = vmul.f32 %v583, %v583
  %v1083 = vmul.f32 %v588, %v588
  %v1084 = vmul.f32 %v593, %v593
  %v1085 = vmul.f32 %v598, %v598
  %v1086 = vmul.f32 %v603, %v603
  %v1087 = vmul.f32 %v608, %v608
  %v1088 = vmul.f32 %v613, %v613
  %v1089 = vmul.f32 %v618, %v618
  %v1090 = vmul.f32 %v623, %v623
  %v1091 = vmul.f32 %v628, %v628
  %v1092 = vmul.f32 %v633, %v633
  %v1093 = vmul.f32 %v638, %v638
  %v1094 = vmul.f32 %v643, %v643
  %v1095 = vmul.f32 %v648, %v648
  %v1096 = vmul.f32 %v653, %v653
  %v1097 = vmul.f32 %v658, %v658
  %v1098 = vmul.f32 %v663, %v663
  %v1099 = vmul.f32 %v668, %v668
  %v1100 = vmul.f32 %v673, %v673
  %v1101 = vmul.f32 %v678, %v678
  %v1102 = vmul.f32 %v683, %v683
  %v1103 = vmul.f32 %v688, %v688
  %v1104 = vmul.f32 %v693, %v693
  %v1105 = vmul.f32 %v698, %v698
  %v1106 = vmul.f32 %v703, %v703
  %v1107 = vmul.f32 %v708, %v708
  %v1108 = vmul.f32 %v713, %v713
  %v1109 = vmul.f32 %v718, %v718
  %v1110 = vmul.f32 %v723, %v723
  %v1111 = vmul.f32 %v728, %v728
  %v1112 = vmul.f32 %v733, %v733
  %v1113 = vmul.f32 %v738, %v738
  %v1114 = vmul.f32 %v743, %v743
  %v1115 = vmul.f32 %v748, %v748
  %v1116 = vmul.f32 %v753, %v753
  %v1117 = vmul.f32 %v758, %v758
  %v1118 = vmul.f32 %v763, %v763
  %v1119 = vmul.f32 %v768, %v768
  %v1120 = vmul.f32 %v773, %v773
  %v1121 = vmul.f32 %v778, %v778
  %v1122 = vmul.f32 %v783, %v783
  %v1123 = vmul.f32 %v788, %v788
  %v1124 = vmul.f32 %v793, %v793
  %v1125 = vmul.f32 %v798, %v798
  %v1126 = vmul.f32 %v803, %v803
  %v1127 = vmul.f32 %v808, %v808
  %v1128 = vmul.f32 %v813, %v813
  %v1129 = vmul.f32 %v818, %v818
  %v1130 = vmul.f32 %v823, %v823
  %v1131 = vmul.f32 %v828, %v828
  %v1132 = vmul.f32 %v833, %v833
  %v1133 = vmul.f32 %v838, %v838
  %v1134 = vmul.f32 %v843, %v843
  %v1135 = vmul.f32 %v848, %v848
  %v1136 = vmul.f32 %v853, %v853
  %v1137 = vmul.f32 %v858, %v858
  %v1138 = vmul.f32 %v863, %v863
  %v1139 = vmul.f32 %v868, %v868
  %v1140 = vsel %vm871, %v1076, 0.0
  %v1141 = vsel %vm871, %v1077, 0.0
  %v1142 = vadd.f32 %v1140, %v1141
  %v1143 = vsel %vm871, %v1078, 0.0
  %v1144 = vadd.f32 %v1142, %v1143
  %v1145 = vsel %vm871, %v1079, 0.0
  %v1146 = vadd.f32 %v1144, %v1145
  %v1147 = vsel %vm871, %v1080, 0.0
  %v1148 = vadd.f32 %v1146, %v1147
  %v1149 = vsel %vm871, %v1081, 0.0
  %v1150 = vadd.f32 %v1148, %v1149
  %v1151 = vsel %vm871, %v1082, 0.0
  %v1152 = vadd.f32 %v1150, %v1151
  %v1153 = vsel %vm871, %v1083, 0.0
  %v1154 = vadd.f32 %v1152, %v1153
  %v1155 = vsel %vm871, %v1084, 0.0
  %v1156 = vadd.f32 %v1154, %v1155
  %v1157 = vsel %vm871, %v1085, 0.0
  %v1158 = vadd.f32 %v1156, %v1157
  %v1159 = vsel %vm871, %v1086, 0.0
  %v1160 = vadd.f32 %v1158, %v1159
  %v1161 = vsel %vm871, %v1087, 0.0
  %v1162 = vadd.f32 %v1160, %v1161
  %v1163 = vsel %vm871, %v1088, 0.0
  %v1164 = vadd.f32 %v1162, %v1163
  %v1165 = vsel %vm871, %v1089, 0.0
  %v1166 = vadd.f32 %v1164, %v1165
  %v1167 = vsel %vm871, %v1090, 0.0
  %v1168 = vadd.f32 %v1166, %v1167
  %v1169 = vsel %vm871, %v1091, 0.0
  %v1170 = vadd.f32 %v1168, %v1169
  %v1171 = vsel %vm871, %v1092, 0.0
  %v1172 = vadd.f32 %v1170, %v1171
  %v1173 = vsel %vm871, %v1093, 0.0
  %v1174 = vadd.f32 %v1172, %v1173
  %v1175 = vsel %vm871, %v1094, 0.0
  %v1176 = vadd.f32 %v1174, %v1175
  %v1177 = vsel %vm871, %v1095, 0.0
  %v1178 = vadd.f32 %v1176, %v1177
  %v1179 = vsel %vm871, %v1096, 0.0
  %v1180 = vadd.f32 %v1178, %v1179
  %v1181 = vsel %vm871, %v1097, 0.0
  %v1182 = vadd.f32 %v1180, %v1181
  %v1183 = vsel %vm871, %v1098, 0.0
  %v1184 = vadd.f32 %v1182, %v1183
  %v1185 = vsel %vm871, %v1099, 0.0
  %v1186 = vadd.f32 %v1184, %v1185
  %v1187 = vsel %vm871, %v1100, 0.0
  %v1188 = vadd.f32 %v1186, %v1187
  %v1189 = vsel %vm871, %v1101, 0.0
  %v1190 = vadd.f32 %v1188, %v1189
  %v1191 = vsel %vm871, %v1102, 0.0
  %v1192 = vadd.f32 %v1190, %v1191
  %v1193 = vsel %vm871, %v1103, 0.0
  %v1194 = vadd.f32 %v1192, %v1193
  %v1195 = vsel %vm871, %v1104, 0.0
  %v1196 = vadd.f32 %v1194, %v1195
  %v1197 = vsel %vm871, %v1105, 0.0
  %v1198 = vadd.f32 %v1196, %v1197
  %v1199 = vsel %vm871, %v1106, 0.0
  %v1200 = vadd.f32 %v1198, %v1199
  %v1201 = vsel %vm871, %v1107, 0.0
  %v1202 = vadd.f32 %v1200, %v1201
  %v1203 = vsel %vm871, %v1108, 0.0
  %v1204 = vadd.f32 %v1202, %v1203
  %v1205 = vsel %vm871, %v1109, 0.0
  %v1206 = vadd.f32 %v1204, %v1205
  %v1207 = vsel %vm871, %v1110, 0.0
  %v1208 = vadd.f32 %v1206, %v1207
  %v1209 = vsel %vm871, %v1111, 0.0
  %v1210 = vadd.f32 %v1208, %v1209
  %v1211 = vsel %vm871, %v1112, 0.0
  %v1212 = vadd.f32 %v1210, %v1211
  %v1213 = vsel %vm871, %v1113, 0.0
  %v1214 = vadd.f32 %v1212, %v1213
  %v1215 = vsel %vm871, %v1114, 0.0
  %v1216 = vadd.f32 %v1214, %v1215
  %v1217 = vsel %vm871, %v1115, 0.0
  %v1218 = vadd.f32 %v1216, %v1217
  %v1219 = vsel %vm871, %v1116, 0.0
  %v1220 = vadd.f32 %v1218, %v1219
  %v1221 = vsel %vm871, %v1117, 0.0
  %v1222 = vadd.f32 %v1220, %v1221
  %v1223 = vsel %vm871, %v1118, 0.0
  %v1224 = vadd.f32 %v1222, %v1223
  %v1225 = vsel %vm871, %v1119, 0.0
  %v1226 = vadd.f32 %v1224, %v1225
  %v1227 = vsel %vm871, %v1120, 0.0
  %v1228 = vadd.f32 %v1226, %v1227
  %v1229 = vsel %vm871, %v1121, 0.0
  %v1230 = vadd.f32 %v1228, %v1229
  %v1231 = vsel %vm871, %v1122, 0.0
  %v1232 = vadd.f32 %v1230, %v1231
  %v1233 = vsel %vm871, %v1123, 0.0
  %v1234 = vadd.f32 %v1232, %v1233
  %v1235 = vsel %vm871, %v1124, 0.0
  %v1236 = vadd.f32 %v1234, %v1235
  %v1237 = vsel %vm871, %v1125, 0.0
  %v1238 = vadd.f32 %v1236, %v1237
  %v1239 = vsel %vm871, %v1126, 0.0
  %v1240 = vadd.f32 %v1238, %v1239
  %v1241 = vsel %vm871, %v1127, 0.0
  %v1242 = vadd.f32 %v1240, %v1241
  %v1243 = vsel %vm871, %v1128, 0.0
  %v1244 = vadd.f32 %v1242, %v1243
  %v1245 = vsel %vm871, %v1129, 0.0
  %v1246 = vadd.f32 %v1244, %v1245
  %v1247 = vsel %vm871, %v1130, 0.0
  %v1248 = vadd.f32 %v1246, %v1247
  %v1249 = vsel %vm871, %v1131, 0.0
  %v1250 = vadd.f32 %v1248, %v1249
  %v1251 = vsel %vm871, %v1132, 0.0
  %v1252 = vadd.f32 %v1250, %v1251
  %v1253 = vsel %vm871, %v1133, 0.0
  %v1254 = vadd.f32 %v1252, %v1253
  %v1255 = vsel %vm871, %v1134, 0.0
  %v1256 = vadd.f32 %v1254, %v1255
  %v1257 = vsel %vm871, %v1135, 0.0
  %v1258 = vadd.f32 %v1256, %v1257
  %v1259 = vsel %vm871, %v1136, 0.0
  %v1260 = vadd.f32 %v1258, %v1259
  %v1261 = vsel %vm871, %v1137, 0.0
  %v1262 = vadd.f32 %v1260, %v1261
  %v1263 = vsel %vm871, %v1138, 0.0
  %v1264 = vadd.f32 %v1262, %v1263
  %v1265 = vsel %vm871, %v1139, 0.0
  %v1266 = vadd.f32 %v1264, %v1265
  %v1267 = vrot.slane %v1266, 4
  %v1268 = vadd.f32 %v1266, %v1267
  %v1269 = vrot.slane %v1268, 2
  %v1270 = vadd.f32 %v1268, %v1269
  %v1271 = vrot.slane %v1270, 1
  %v1272 = vadd.f32 %v1270, %v1271
  %vm1273 = vcmask 1040384
  %v1274 = vsel %vm1273, %v1075, %v1272
  %v1275 = vadd.f32 %v942, %v1274
  %vm1276 = vcmask 254976
  %1277 = vst.msk [vmem:[%s5] sm:$0x3] %vm1276, %v1275
  // Predicated region
  $region22: #{_lambda_.4} parent=0 // pred_check
    _
  $region23: #{_lambda_.4} parent=0 // pred_check_branch
    %1279 = sbr.rel (0) target = $region25
  $region24: #{_lambda_.4} parent=0 // pred_region
    _
  $region25: #{_lambda_.4} parent=0 // pred_fallthru
    _
  // Predicated region
  $region26: #{_lambda_.4} parent=0 // pred_check
    _
  $region27: #{_lambda_.4} parent=0 // pred_check_branch
    %1281 = sbr.rel (0) target = $region29
  $region28: #{_lambda_.4} parent=0 // pred_region
    _
  $region29: #{_lambda_.4} parent=0 // pred_fallthru
    _
  // Predicated region
  $region30: #{_lambda_.4} parent=0 // pred_check
    _
  $region31: #{_lambda_.4} parent=0 // pred_check_branch
    %1283 = sbr.rel (0) target = $region33
  $region32: #{_lambda_.4} parent=0 // pred_region
    _
  $region33: #{_lambda_.4} parent=0 // pred_fallthru
    _
  // Predicated region
  $region34: #{_lambda_.4} parent=0 // pred_check
    _
  $region35: #{_lambda_.4} parent=0 // pred_check_branch
    %1285 = sbr.rel (0) target = $region37
  $region36: #{_lambda_.4} parent=0 // pred_region
    _
  $region37: #{_lambda_.4} parent=0 // pred_fallthru
    _

// kernel: _lambda_.5
$region0: #{_lambda_.5}
  #allocation0 [shape = 'u32[]', space=smem, size = 0x4, offset = 0x4, fixed_abs, tag = 'smem constant byte address 0x4 - core index']
  #allocation1 [shape = 'u32[144,128]{1,0:T(1,128)}', space=vmem, size = 0x12000, scoped, tag = 'internal scratch']
  %s0 = inlined_call_operand.vmem [shape: f32[512,32], index: 0, kind: input, shape index: {}]
  %s1 = inlined_call_operand.vmem [shape: f32[2,32], index: 1, kind: input, shape index: {}]
  %s2 = inlined_call_operand.vmem [shape: f32[32,32], index: 2, kind: input, shape index: {}]
  %s3 = inlined_call_operand.vmem [shape: f32[1,32], index: 3, kind: input, shape index: {}]
  %s4 = inlined_call_operand.vmem [shape: f32[512,48], index: 4, kind: output, shape index: {}]
  %s5 = sld [smem:[#allocation0]]
  $region26: #{_lambda_.5} parent=0
    _
  %s7 = ssub.s32 1, %s5
  %s8 = scalar_select 0, %s7, %s5
  // Predicated region
  $region2: #{_lambda_.5} parent=0 // pred_check
    _
  $region3: #{_lambda_.5} parent=0 // pred_check_branch
    %10 = sbr.rel (0) target = $region5
  $region4: #{_lambda_.5} parent=0 // pred_region
    _
  $region5: #{_lambda_.5} parent=0 // pred_fallthru
    _
  // Predicated region
  $region6: #{_lambda_.5} parent=0 // pred_check
    _
  $region7: #{_lambda_.5} parent=0 // pred_check_branch
    %12 = sbr.rel (0) target = $region9
  $region8: #{_lambda_.5} parent=0 // pred_region
    _
  $region9: #{_lambda_.5} parent=0 // pred_fallthru
    _
  // Predicated region
  $region10: #{_lambda_.5} parent=0 // pred_check
    _
  $region11: #{_lambda_.5} parent=0 // pred_check_branch
    %14 = sbr.rel (0) target = $region13
  $region12: #{_lambda_.5} parent=0 // pred_region
    _
  $region13: #{_lambda_.5} parent=0 // pred_fallthru
    _
  // Predicated region
  $region14: #{_lambda_.5} parent=0 // pred_check
    _
  $region15: #{_lambda_.5} parent=0 // pred_check_branch
    %16 = sbr.rel (0) target = $region17
  $region16: #{_lambda_.5} parent=0 // pred_region
    _
  $region17: #{_lambda_.5} parent=0 // pred_fallthru
    _
  %v17 = vld [vmem:[%s0] sm:$0xff]
  %v18 = vld [vmem:[%s0 + $0x8] sm:$0xff]
  %v19 = vld [vmem:[%s0 + $0x10] sm:$0xff]
  %v20 = vld [vmem:[%s0 + $0x18] sm:$0xff]
  %v21 = vld [vmem:[%s0 + $0x20] sm:$0xff]
  %v22 = vld [vmem:[%s0 + $0x28] sm:$0xff]
  %v23 = vld [vmem:[%s0 + $0x30] sm:$0xff]
  %v24 = vld [vmem:[%s0 + $0x38] sm:$0xff]
  %v25 = vld [vmem:[%s0 + $0x40] sm:$0xff]
  %v26 = vld [vmem:[%s0 + $0x48] sm:$0xff]
  %v27 = vld [vmem:[%s0 + $0x50] sm:$0xff]
  %v28 = vld [vmem:[%s0 + $0x58] sm:$0xff]
  %v29 = vld [vmem:[%s0 + $0x60] sm:$0xff]
  %v30 = vld [vmem:[%s0 + $0x68] sm:$0xff]
  %v31 = vld [vmem:[%s0 + $0x70] sm:$0xff]
  %v32 = vld [vmem:[%s0 + $0x78] sm:$0xff]
  %v33 = vld [vmem:[%s0 + $0x80] sm:$0xff]
  %v34 = vld [vmem:[%s0 + $0x88] sm:$0xff]
  %v35 = vld [vmem:[%s0 + $0x90] sm:$0xff]
  %v36 = vld [vmem:[%s0 + $0x98] sm:$0xff]
  %v37 = vld [vmem:[%s0 + $0xa0] sm:$0xff]
  %v38 = vld [vmem:[%s0 + $0xa8] sm:$0xff]
  %v39 = vld [vmem:[%s0 + $0xb0] sm:$0xff]
  %v40 = vld [vmem:[%s0 + $0xb8] sm:$0xff]
  %v41 = vld [vmem:[%s0 + $0xc0] sm:$0xff]
  %v42 = vld [vmem:[%s0 + $0xc8] sm:$0xff]
  %v43 = vld [vmem:[%s0 + $0xd0] sm:$0xff]
  %v44 = vld [vmem:[%s0 + $0xd8] sm:$0xff]
  %v45 = vld [vmem:[%s0 + $0xe0] sm:$0xff]
  %v46 = vld [vmem:[%s0 + $0xe8] sm:$0xff]
  %v47 = vld [vmem:[%s0 + $0xf0] sm:$0xff]
  %v48 = vld [vmem:[%s0 + $0xf8] sm:$0xff]
  %v49 = vld [vmem:[%s0 + $0x100] sm:$0xff]
  %v50 = vld [vmem:[%s0 + $0x108] sm:$0xff]
  %v51 = vld [vmem:[%s0 + $0x110] sm:$0xff]
  %v52 = vld [vmem:[%s0 + $0x118] sm:$0xff]
  %v53 = vld [vmem:[%s0 + $0x120] sm:$0xff]
  %v54 = vld [vmem:[%s0 + $0x128] sm:$0xff]
  %v55 = vld [vmem:[%s0 + $0x130] sm:$0xff]
  %v56 = vld [vmem:[%s0 + $0x138] sm:$0xff]
  %v57 = vld [vmem:[%s0 + $0x140] sm:$0xff]
  %v58 = vld [vmem:[%s0 + $0x148] sm:$0xff]
  %v59 = vld [vmem:[%s0 + $0x150] sm:$0xff]
  %v60 = vld [vmem:[%s0 + $0x158] sm:$0xff]
  %v61 = vld [vmem:[%s0 + $0x160] sm:$0xff]
  %v62 = vld [vmem:[%s0 + $0x168] sm:$0xff]
  %v63 = vld [vmem:[%s0 + $0x170] sm:$0xff]
  %v64 = vld [vmem:[%s0 + $0x178] sm:$0xff]
  %v65 = vld [vmem:[%s0 + $0x180] sm:$0xff]
  %v66 = vld [vmem:[%s0 + $0x188] sm:$0xff]
  %v67 = vld [vmem:[%s0 + $0x190] sm:$0xff]
  %v68 = vld [vmem:[%s0 + $0x198] sm:$0xff]
  %v69 = vld [vmem:[%s0 + $0x1a0] sm:$0xff]
  %v70 = vld [vmem:[%s0 + $0x1a8] sm:$0xff]
  %v71 = vld [vmem:[%s0 + $0x1b0] sm:$0xff]
  %v72 = vld [vmem:[%s0 + $0x1b8] sm:$0xff]
  %v73 = vld [vmem:[%s0 + $0x1c0] sm:$0xff]
  %v74 = vld [vmem:[%s0 + $0x1c8] sm:$0xff]
  %v75 = vld [vmem:[%s0 + $0x1d0] sm:$0xff]
  %v76 = vld [vmem:[%s0 + $0x1d8] sm:$0xff]
  %v77 = vld [vmem:[%s0 + $0x1e0] sm:$0xff]
  %v78 = vld [vmem:[%s0 + $0x1e8] sm:$0xff]
  %v79 = vld [vmem:[%s0 + $0x1f0] sm:$0xff]
  %v80 = vld [vmem:[%s0 + $0x1f8] sm:$0xff]
  %v81 = vld [vmem:[%s1] sm:$0x1]
  %v82 = vlaneseq
  %v83 = vshrl.u32 %v82, 7
  %v84 = vsub.s32 0, %v83
  %v85 = vrot.slane %v81, %v84
  %v86 = vmul.f32 %v17, %v85
  %v87 = vmul.f32 %v18, %v85
  %v88 = vmul.f32 %v19, %v85
  %v89 = vmul.f32 %v20, %v85
  %v90 = vmul.f32 %v21, %v85
  %v91 = vmul.f32 %v22, %v85
  %v92 = vmul.f32 %v23, %v85
  %v93 = vmul.f32 %v24, %v85
  %v94 = vmul.f32 %v25, %v85
  %v95 = vmul.f32 %v26, %v85
  %v96 = vmul.f32 %v27, %v85
  %v97 = vmul.f32 %v28, %v85
  %v98 = vmul.f32 %v29, %v85
  %v99 = vmul.f32 %v30, %v85
  %v100 = vmul.f32 %v31, %v85
  %v101 = vmul.f32 %v32, %v85
  %v102 = vmul.f32 %v33, %v85
  %v103 = vmul.f32 %v34, %v85
  %v104 = vmul.f32 %v35, %v85
  %v105 = vmul.f32 %v36, %v85
  %v106 = vmul.f32 %v37, %v85
  %v107 = vmul.f32 %v38, %v85
  %v108 = vmul.f32 %v39, %v85
  %v109 = vmul.f32 %v40, %v85
  %v110 = vmul.f32 %v41, %v85
  %v111 = vmul.f32 %v42, %v85
  %v112 = vmul.f32 %v43, %v85
  %v113 = vmul.f32 %v44, %v85
  %v114 = vmul.f32 %v45, %v85
  %v115 = vmul.f32 %v46, %v85
  %v116 = vmul.f32 %v47, %v85
  %v117 = vmul.f32 %v48, %v85
  %v118 = vmul.f32 %v49, %v85
  %v119 = vmul.f32 %v50, %v85
  %v120 = vmul.f32 %v51, %v85
  %v121 = vmul.f32 %v52, %v85
  %v122 = vmul.f32 %v53, %v85
  %v123 = vmul.f32 %v54, %v85
  %v124 = vmul.f32 %v55, %v85
  %v125 = vmul.f32 %v56, %v85
  %v126 = vmul.f32 %v57, %v85
  %v127 = vmul.f32 %v58, %v85
  %v128 = vmul.f32 %v59, %v85
  %v129 = vmul.f32 %v60, %v85
  %v130 = vmul.f32 %v61, %v85
  %v131 = vmul.f32 %v62, %v85
  %v132 = vmul.f32 %v63, %v85
  %v133 = vmul.f32 %v64, %v85
  %v134 = vmul.f32 %v65, %v85
  %v135 = vmul.f32 %v66, %v85
  %v136 = vmul.f32 %v67, %v85
  %v137 = vmul.f32 %v68, %v85
  %v138 = vmul.f32 %v69, %v85
  %v139 = vmul.f32 %v70, %v85
  %v140 = vmul.f32 %v71, %v85
  %v141 = vmul.f32 %v72, %v85
  %v142 = vmul.f32 %v73, %v85
  %v143 = vmul.f32 %v74, %v85
  %v144 = vmul.f32 %v75, %v85
  %v145 = vmul.f32 %v76, %v85
  %v146 = vmul.f32 %v77, %v85
  %v147 = vmul.f32 %v78, %v85
  %v148 = vmul.f32 %v79, %v85
  %v149 = vmul.f32 %v80, %v85
  %v150 = vld [vmem:[%s1 + $0x1] sm:$0x1]
  %v151 = vlaneseq
  %v152 = vshrl.u32 %v151, 7
  %v153 = vsub.s32 0, %v152
  %v154 = vrot.slane %v150, %v153
  %v155 = vadd.f32 %v86, %v154
  %v156 = vadd.f32 %v87, %v154
  %v157 = vadd.f32 %v88, %v154
  %v158 = vadd.f32 %v89, %v154
  %v159 = vadd.f32 %v90, %v154
  %v160 = vadd.f32 %v91, %v154
  %v161 = vadd.f32 %v92, %v154
  %v162 = vadd.f32 %v93, %v154
  %v163 = vadd.f32 %v94, %v154
  %v164 = vadd.f32 %v95, %v154
  %v165 = vadd.f32 %v96, %v154
  %v166 = vadd.f32 %v97, %v154
  %v167 = vadd.f32 %v98, %v154
  %v168 = vadd.f32 %v99, %v154
  %v169 = vadd.f32 %v100, %v154
  %v170 = vadd.f32 %v101, %v154
  %v171 = vadd.f32 %v102, %v154
  %v172 = vadd.f32 %v103, %v154
  %v173 = vadd.f32 %v104, %v154
  %v174 = vadd.f32 %v105, %v154
  %v175 = vadd.f32 %v106, %v154
  %v176 = vadd.f32 %v107, %v154
  %v177 = vadd.f32 %v108, %v154
  %v178 = vadd.f32 %v109, %v154
  %v179 = vadd.f32 %v110, %v154
  %v180 = vadd.f32 %v111, %v154
  %v181 = vadd.f32 %v112, %v154
  %v182 = vadd.f32 %v113, %v154
  %v183 = vadd.f32 %v114, %v154
  %v184 = vadd.f32 %v115, %v154
  %v185 = vadd.f32 %v116, %v154
  %v186 = vadd.f32 %v117, %v154
  %v187 = vadd.f32 %v118, %v154
  %v188 = vadd.f32 %v119, %v154
  %v189 = vadd.f32 %v120, %v154
  %v190 = vadd.f32 %v121, %v154
  %v191 = vadd.f32 %v122, %v154
  %v192 = vadd.f32 %v123, %v154
  %v193 = vadd.f32 %v124, %v154
  %v194 = vadd.f32 %v125, %v154
  %v195 = vadd.f32 %v126, %v154
  %v196 = vadd.f32 %v127, %v154
  %v197 = vadd.f32 %v128, %v154
  %v198 = vadd.f32 %v129, %v154
  %v199 = vadd.f32 %v130, %v154
  %v200 = vadd.f32 %v131, %v154
  %v201 = vadd.f32 %v132, %v154
  %v202 = vadd.f32 %v133, %v154
  %v203 = vadd.f32 %v134, %v154
  %v204 = vadd.f32 %v135, %v154
  %v205 = vadd.f32 %v136, %v154
  %v206 = vadd.f32 %v137, %v154
  %v207 = vadd.f32 %v138, %v154
  %v208 = vadd.f32 %v139, %v154
  %v209 = vadd.f32 %v140, %v154
  %v210 = vadd.f32 %v141, %v154
  %v211 = vadd.f32 %v142, %v154
  %v212 = vadd.f32 %v143, %v154
  %v213 = vadd.f32 %v144, %v154
  %v214 = vadd.f32 %v145, %v154
  %v215 = vadd.f32 %v146, %v154
  %v216 = vadd.f32 %v147, %v154
  %v217 = vadd.f32 %v148, %v154
  %v218 = vadd.f32 %v149, %v154
  %v219 = vmax.f32 %v155, 0.0
  %v220 = vmax.f32 %v156, 0.0
  %v221 = vmax.f32 %v157, 0.0
  %v222 = vmax.f32 %v158, 0.0
  %v223 = vmax.f32 %v159, 0.0
  %v224 = vmax.f32 %v160, 0.0
  %v225 = vmax.f32 %v161, 0.0
  %v226 = vmax.f32 %v162, 0.0
  %v227 = vmax.f32 %v163, 0.0
  %v228 = vmax.f32 %v164, 0.0
  %v229 = vmax.f32 %v165, 0.0
  %v230 = vmax.f32 %v166, 0.0
  %v231 = vmax.f32 %v167, 0.0
  %v232 = vmax.f32 %v168, 0.0
  %v233 = vmax.f32 %v169, 0.0
  %v234 = vmax.f32 %v170, 0.0
  %v235 = vmax.f32 %v171, 0.0
  %v236 = vmax.f32 %v172, 0.0
  %v237 = vmax.f32 %v173, 0.0
  %v238 = vmax.f32 %v174, 0.0
  %v239 = vmax.f32 %v175, 0.0
  %v240 = vmax.f32 %v176, 0.0
  %v241 = vmax.f32 %v177, 0.0
  %v242 = vmax.f32 %v178, 0.0
  %v243 = vmax.f32 %v179, 0.0
  %v244 = vmax.f32 %v180, 0.0
  %v245 = vmax.f32 %v181, 0.0
  %v246 = vmax.f32 %v182, 0.0
  %v247 = vmax.f32 %v183, 0.0
  %v248 = vmax.f32 %v184, 0.0
  %v249 = vmax.f32 %v185, 0.0
  %v250 = vmax.f32 %v186, 0.0
  %v251 = vmax.f32 %v187, 0.0
  %v252 = vmax.f32 %v188, 0.0
  %v253 = vmax.f32 %v189, 0.0
  %v254 = vmax.f32 %v190, 0.0
  %v255 = vmax.f32 %v191, 0.0
  %v256 = vmax.f32 %v192, 0.0
  %v257 = vmax.f32 %v193, 0.0
  %v258 = vmax.f32 %v194, 0.0
  %v259 = vmax.f32 %v195, 0.0
  %v260 = vmax.f32 %v196, 0.0
  %v261 = vmax.f32 %v197, 0.0
  %v262 = vmax.f32 %v198, 0.0
  %v263 = vmax.f32 %v199, 0.0
  %v264 = vmax.f32 %v200, 0.0
  %v265 = vmax.f32 %v201, 0.0
  %v266 = vmax.f32 %v202, 0.0
  %v267 = vmax.f32 %v203, 0.0
  %v268 = vmax.f32 %v204, 0.0
  %v269 = vmax.f32 %v205, 0.0
  %v270 = vmax.f32 %v206, 0.0
  %v271 = vmax.f32 %v207, 0.0
  %v272 = vmax.f32 %v208, 0.0
  %v273 = vmax.f32 %v209, 0.0
  %v274 = vmax.f32 %v210, 0.0
  %v275 = vmax.f32 %v211, 0.0
  %v276 = vmax.f32 %v212, 0.0
  %v277 = vmax.f32 %v213, 0.0
  %v278 = vmax.f32 %v214, 0.0
  %v279 = vmax.f32 %v215, 0.0
  %v280 = vmax.f32 %v216, 0.0
  %v281 = vmax.f32 %v217, 0.0
  %v282 = vmax.f32 %v218, 0.0
  %v283 = vld [vmem:[%s2] sm:$0xff]
  %v284 = vld [vmem:[%s2 + $0x8] sm:$0xff]
  %v285 = vld [vmem:[%s2 + $0x10] sm:$0xff]
  %v286 = vld [vmem:[%s2 + $0x18] sm:$0xff]
  %v287 = vld [vmem:[%s3] sm:$0x1]
  %v289 = vlaneseq
  %v290 = vshrl.u32 %v289, 7
  %v291 = vsub.s32 0, %v290
  %v292 = vrot.slane %v287, %v291
  %vm294 = vcmask 261120
  %v296 = vsel %vm294, %v219, 0
  %v299 = vsel %vm294, %v220, 0
  %v302 = vsel %vm294, %v221, 0
  %v305 = vsel %vm294, %v222, 0
  %v308 = vsel %vm294, %v223, 0
  %v311 = vsel %vm294, %v224, 0
  %v314 = vsel %vm294, %v225, 0
  %v317 = vsel %vm294, %v226, 0
  %v320 = vsel %vm294, %v227, 0
  %v323 = vsel %vm294, %v228, 0
  %v326 = vsel %vm294, %v229, 0
  %v329 = vsel %vm294, %v230, 0
  %v332 = vsel %vm294, %v231, 0
  %v335 = vsel %vm294, %v232, 0
  %v338 = vsel %vm294, %v233, 0
  %v341 = vsel %vm294, %v234, 0
  %v344 = vsel %vm294, %v235, 0
  %v347 = vsel %vm294, %v236, 0
  %v350 = vsel %vm294, %v237, 0
  %v353 = vsel %vm294, %v238, 0
  %v356 = vsel %vm294, %v239, 0
  %v359 = vsel %vm294, %v240, 0
  %v362 = vsel %vm294, %v241, 0
  %v365 = vsel %vm294, %v242, 0
  %v368 = vsel %vm294, %v243, 0
  %v371 = vsel %vm294, %v244, 0
  %v374 = vsel %vm294, %v245, 0
  %v377 = vsel %vm294, %v246, 0
  %v380 = vsel %vm294, %v247, 0
  %v383 = vsel %vm294, %v248, 0
  %v386 = vsel %vm294, %v249, 0
  %v389 = vsel %vm294, %v250, 0
  %v392 = vsel %vm294, %v251, 0
  %v395 = vsel %vm294, %v252, 0
  %v398 = vsel %vm294, %v253, 0
  %v401 = vsel %vm294, %v254, 0
  %v404 = vsel %vm294, %v255, 0
  %v407 = vsel %vm294, %v256, 0
  %v410 = vsel %vm294, %v257, 0
  %v413 = vsel %vm294, %v258, 0
  %v416 = vsel %vm294, %v259, 0
  %v419 = vsel %vm294, %v260, 0
  %v422 = vsel %vm294, %v261, 0
  %v425 = vsel %vm294, %v262, 0
  %v428 = vsel %vm294, %v263, 0
  %v431 = vsel %vm294, %v264, 0
  %v434 = vsel %vm294, %v265, 0
  %v437 = vsel %vm294, %v266, 0
  %v440 = vsel %vm294, %v267, 0
  %v443 = vsel %vm294, %v268, 0
  %v446 = vsel %vm294, %v269, 0
  %v449 = vsel %vm294, %v270, 0
  %v452 = vsel %vm294, %v271, 0
  %v455 = vsel %vm294, %v272, 0
  %v458 = vsel %vm294, %v273, 0
  %v461 = vsel %vm294, %v274, 0
  %v464 = vsel %vm294, %v275, 0
  %v467 = vsel %vm294, %v276, 0
  %v470 = vsel %vm294, %v277, 0
  %v473 = vsel %vm294, %v278, 0
  %v476 = vsel %vm294, %v279, 0
  %v479 = vsel %vm294, %v280, 0
  %v482 = vsel %vm294, %v281, 0
  %v485 = vsel %vm294, %v282, 0
  %487 = vmatprep.subr.mxu0 0.0
  %488 = vmatpush1.msra.mxu0 0.0
  %489 = vmatprep.subr.mxu0 0.0
  %490 = vmatpush1.msra.mxu0 0.0
  %491 = vmatprep.subr.mxu0 0.0
  %492 = vmatpush1.msra.mxu0 0.0
  %493 = vmatprep.subr.mxu0 0.0
  %494 = vmatpush1.msra.mxu0 0.0
  %495 = vmatprep.subr.mxu0 0.0
  %496 = vmatpush1.msra.mxu0 0.0
  %497 = vmatprep.subr.mxu0 0.0
  %498 = vmatpush1.msra.mxu0 0.0
  %499 = vmatprep.subr.mxu0 0.0
  %500 = vmatpush1.msra.mxu0 0.0
  %501 = vmatprep.subr.mxu0 0.0
  %502 = vmatpush1.msra.mxu0 0.0
  %503 = vmatprep.subr.mxu0 0.0
  %504 = vmatpush1.msra.mxu0 0.0
  %505 = vmatprep.subr.mxu0 0.0
  %506 = vmatpush1.msra.mxu0 0.0
  %507 = vmatprep.subr.mxu0 0.0
  %508 = vmatpush1.msra.mxu0 0.0
  %509 = vmatprep.subr.mxu0 0.0
  %510 = vmatpush1.msra.mxu0 0.0
  %511 = vmatprep.subr.mxu0 0.0
  %512 = vmatpush1.msra.mxu0 %v286
  %513 = vmatprep.subr.mxu0 0.0
  %514 = vmatpush1.msra.mxu0 %v285
  %515 = vmatprep.subr.mxu0 0.0
  %516 = vmatpush1.msra.mxu0 %v284
  %517 = vmatprep.subr.mxu0 0.0
  %518 = vmatpush1.msra.mxu0 %v283
  %519 = vmatprep.subr.mxu0 0.0
  %520 = vmatpush2.msra.mxu0 0.0
  %521 = vmatprep.subr.mxu0 0.0
  %522 = vmatpush2.msra.mxu0 0.0
  %523 = vmatprep.subr.mxu0 0.0
  %524 = vmatpush2.msra.mxu0 0.0
  %525 = vmatprep.subr.mxu0 0.0
  %526 = vmatpush2.msra.mxu0 0.0
  %527 = vmatprep.subr.mxu0 0.0
  %528 = vmatpush2.msra.mxu0 0.0
  %529 = vmatprep.subr.mxu0 0.0
  %530 = vmatpush2.msra.mxu0 0.0
  %531 = vmatprep.subr.mxu0 0.0
  %532 = vmatpush2.msra.mxu0 0.0
  %533 = vmatprep.subr.mxu0 0.0
  %534 = vmatpush2.msra.mxu0 0.0
  %535 = vmatprep.subr.mxu0 0.0
  %536 = vmatpush2.msra.mxu0 0.0
  %537 = vmatprep.subr.mxu0 0.0
  %538 = vmatpush2.msra.mxu0 0.0
  %539 = vmatprep.subr.mxu0 0.0
  %540 = vmatpush2.msra.mxu0 0.0
  %541 = vmatprep.subr.mxu0 0.0
  %542 = vmatpush2.msra.mxu0 0.0
  %543 = vmatprep.subr.mxu0 0.0
  %544 = vmatpush2.msra.mxu0 0.0
  %545 = vmatprep.subr.mxu0 0.0
  %546 = vmatpush2.msra.mxu0 0.0
  %547 = vmatprep.subr.mxu0 0.0
  %548 = vmatpush2.msra.mxu0 0.0
  %549 = vmatprep.subr.mxu0 0.0
  %550 = vmatpush2.msra.mxu0 0.0
  %551 = vmatprep.mubr.f32.mxu0 0.0
  %552 = vmatmul.mubr.f32.gmra.mxu0 %v296
  %v553 = vpop.f32.mrf.mxu0
  %v554 = vadd.f32 %v292, %v553
  %v555 = vpop.f32.mrf.mxu0
  %556 = vmatprep.mubr.f32.mxu0 0.0
  %557 = vmatmul.mubr.f32.gmra.mxu0 %v299
  %v558 = vpop.f32.mrf.mxu0
  %v559 = vadd.f32 %v292, %v558
  %v560 = vpop.f32.mrf.mxu0
  %561 = vmatprep.mubr.f32.mxu0 0.0
  %562 = vmatmul.mubr.f32.gmra.mxu0 %v302
  %v563 = vpop.f32.mrf.mxu0
  %v564 = vadd.f32 %v292, %v563
  %v565 = vpop.f32.mrf.mxu0
  %566 = vmatprep.mubr.f32.mxu0 0.0
  %567 = vmatmul.mubr.f32.gmra.mxu0 %v305
  %v568 = vpop.f32.mrf.mxu0
  %v569 = vadd.f32 %v292, %v568
  %v570 = vpop.f32.mrf.mxu0
  %571 = vmatprep.mubr.f32.mxu0 0.0
  %572 = vmatmul.mubr.f32.gmra.mxu0 %v308
  %v573 = vpop.f32.mrf.mxu0
  %v574 = vadd.f32 %v292, %v573
  %v575 = vpop.f32.mrf.mxu0
  %576 = vmatprep.mubr.f32.mxu0 0.0
  %577 = vmatmul.mubr.f32.gmra.mxu0 %v311
  %v578 = vpop.f32.mrf.mxu0
  %v579 = vadd.f32 %v292, %v578
  %v580 = vpop.f32.mrf.mxu0
  %581 = vmatprep.mubr.f32.mxu0 0.0
  %582 = vmatmul.mubr.f32.gmra.mxu0 %v314
  %v583 = vpop.f32.mrf.mxu0
  %v584 = vadd.f32 %v292, %v583
  %v585 = vpop.f32.mrf.mxu0
  %586 = vmatprep.mubr.f32.mxu0 0.0
  %587 = vmatmul.mubr.f32.gmra.mxu0 %v317
  %v588 = vpop.f32.mrf.mxu0
  %v589 = vadd.f32 %v292, %v588
  %v590 = vpop.f32.mrf.mxu0
  %591 = vmatprep.mubr.f32.mxu0 0.0
  %592 = vmatmul.mubr.f32.gmra.mxu0 %v320
  %v593 = vpop.f32.mrf.mxu0
  %v594 = vadd.f32 %v292, %v593
  %v595 = vpop.f32.mrf.mxu0
  %596 = vmatprep.mubr.f32.mxu0 0.0
  %597 = vmatmul.mubr.f32.gmra.mxu0 %v323
  %v598 = vpop.f32.mrf.mxu0
  %v599 = vadd.f32 %v292, %v598
  %v600 = vpop.f32.mrf.mxu0
  %601 = vmatprep.mubr.f32.mxu0 0.0
  %602 = vmatmul.mubr.f32.gmra.mxu0 %v326
  %v603 = vpop.f32.mrf.mxu0
  %v604 = vadd.f32 %v292, %v603
  %v605 = vpop.f32.mrf.mxu0
  %606 = vmatprep.mubr.f32.mxu0 0.0
  %607 = vmatmul.mubr.f32.gmra.mxu0 %v329
  %v608 = vpop.f32.mrf.mxu0
  %v609 = vadd.f32 %v292, %v608
  %v610 = vpop.f32.mrf.mxu0
  %611 = vmatprep.mubr.f32.mxu0 0.0
  %612 = vmatmul.mubr.f32.gmra.mxu0 %v332
  %v613 = vpop.f32.mrf.mxu0
  %v614 = vadd.f32 %v292, %v613
  %v615 = vpop.f32.mrf.mxu0
  %616 = vmatprep.mubr.f32.mxu0 0.0
  %617 = vmatmul.mubr.f32.gmra.mxu0 %v335
  %v618 = vpop.f32.mrf.mxu0
  %v619 = vadd.f32 %v292, %v618
  %v620 = vpop.f32.mrf.mxu0
  %621 = vmatprep.mubr.f32.mxu0 0.0
  %622 = vmatmul.mubr.f32.gmra.mxu0 %v338
  %v623 = vpop.f32.mrf.mxu0
  %v624 = vadd.f32 %v292, %v623
  %v625 = vpop.f32.mrf.mxu0
  %626 = vmatprep.mubr.f32.mxu0 0.0
  %627 = vmatmul.mubr.f32.gmra.mxu0 %v341
  %v628 = vpop.f32.mrf.mxu0
  %v629 = vadd.f32 %v292, %v628
  %v630 = vpop.f32.mrf.mxu0
  %631 = vmatprep.mubr.f32.mxu0 0.0
  %632 = vmatmul.mubr.f32.gmra.mxu0 %v344
  %v633 = vpop.f32.mrf.mxu0
  %v634 = vadd.f32 %v292, %v633
  %v635 = vpop.f32.mrf.mxu0
  %636 = vmatprep.mubr.f32.mxu0 0.0
  %637 = vmatmul.mubr.f32.gmra.mxu0 %v347
  %v638 = vpop.f32.mrf.mxu0
  %v639 = vadd.f32 %v292, %v638
  %v640 = vpop.f32.mrf.mxu0
  %641 = vmatprep.mubr.f32.mxu0 0.0
  %642 = vmatmul.mubr.f32.gmra.mxu0 %v350
  %v643 = vpop.f32.mrf.mxu0
  %v644 = vadd.f32 %v292, %v643
  %v645 = vpop.f32.mrf.mxu0
  %646 = vmatprep.mubr.f32.mxu0 0.0
  %647 = vmatmul.mubr.f32.gmra.mxu0 %v353
  %v648 = vpop.f32.mrf.mxu0
  %v649 = vadd.f32 %v292, %v648
  %v650 = vpop.f32.mrf.mxu0
  %651 = vmatprep.mubr.f32.mxu0 0.0
  %652 = vmatmul.mubr.f32.gmra.mxu0 %v356
  %v653 = vpop.f32.mrf.mxu0
  %v654 = vadd.f32 %v292, %v653
  %v655 = vpop.f32.mrf.mxu0
  %656 = vmatprep.mubr.f32.mxu0 0.0
  %657 = vmatmul.mubr.f32.gmra.mxu0 %v359
  %v658 = vpop.f32.mrf.mxu0
  %v659 = vadd.f32 %v292, %v658
  %v660 = vpop.f32.mrf.mxu0
  %661 = vmatprep.mubr.f32.mxu0 0.0
  %662 = vmatmul.mubr.f32.gmra.mxu0 %v362
  %v663 = vpop.f32.mrf.mxu0
  %v664 = vadd.f32 %v292, %v663
  %v665 = vpop.f32.mrf.mxu0
  %666 = vmatprep.mubr.f32.mxu0 0.0
  %667 = vmatmul.mubr.f32.gmra.mxu0 %v365
  %v668 = vpop.f32.mrf.mxu0
  %v669 = vadd.f32 %v292, %v668
  %v670 = vpop.f32.mrf.mxu0
  %671 = vmatprep.mubr.f32.mxu0 0.0
  %672 = vmatmul.mubr.f32.gmra.mxu0 %v368
  %v673 = vpop.f32.mrf.mxu0
  %v674 = vadd.f32 %v292, %v673
  %v675 = vpop.f32.mrf.mxu0
  %676 = vmatprep.mubr.f32.mxu0 0.0
  %677 = vmatmul.mubr.f32.gmra.mxu0 %v371
  %v678 = vpop.f32.mrf.mxu0
  %v679 = vadd.f32 %v292, %v678
  %v680 = vpop.f32.mrf.mxu0
  %681 = vmatprep.mubr.f32.mxu0 0.0
  %682 = vmatmul.mubr.f32.gmra.mxu0 %v374
  %v683 = vpop.f32.mrf.mxu0
  %v684 = vadd.f32 %v292, %v683
  %v685 = vpop.f32.mrf.mxu0
  %686 = vmatprep.mubr.f32.mxu0 0.0
  %687 = vmatmul.mubr.f32.gmra.mxu0 %v377
  %v688 = vpop.f32.mrf.mxu0
  %v689 = vadd.f32 %v292, %v688
  %v690 = vpop.f32.mrf.mxu0
  %691 = vmatprep.mubr.f32.mxu0 0.0
  %692 = vmatmul.mubr.f32.gmra.mxu0 %v380
  %v693 = vpop.f32.mrf.mxu0
  %v694 = vadd.f32 %v292, %v693
  %v695 = vpop.f32.mrf.mxu0
  %696 = vmatprep.mubr.f32.mxu0 0.0
  %697 = vmatmul.mubr.f32.gmra.mxu0 %v383
  %v698 = vpop.f32.mrf.mxu0
  %v699 = vadd.f32 %v292, %v698
  %v700 = vpop.f32.mrf.mxu0
  %701 = vmatprep.mubr.f32.mxu0 0.0
  %702 = vmatmul.mubr.f32.gmra.mxu0 %v386
  %v703 = vpop.f32.mrf.mxu0
  %v704 = vadd.f32 %v292, %v703
  %v705 = vpop.f32.mrf.mxu0
  %706 = vmatprep.mubr.f32.mxu0 0.0
  %707 = vmatmul.mubr.f32.gmra.mxu0 %v389
  %v708 = vpop.f32.mrf.mxu0
  %v709 = vadd.f32 %v292, %v708
  %v710 = vpop.f32.mrf.mxu0
  %711 = vmatprep.mubr.f32.mxu0 0.0
  %712 = vmatmul.mubr.f32.gmra.mxu0 %v392
  %v713 = vpop.f32.mrf.mxu0
  %v714 = vadd.f32 %v292, %v713
  %v715 = vpop.f32.mrf.mxu0
  %716 = vmatprep.mubr.f32.mxu0 0.0
  %717 = vmatmul.mubr.f32.gmra.mxu0 %v395
  %v718 = vpop.f32.mrf.mxu0
  %v719 = vadd.f32 %v292, %v718
  %v720 = vpop.f32.mrf.mxu0
  %721 = vmatprep.mubr.f32.mxu0 0.0
  %722 = vmatmul.mubr.f32.gmra.mxu0 %v398
  %v723 = vpop.f32.mrf.mxu0
  %v724 = vadd.f32 %v292, %v723
  %v725 = vpop.f32.mrf.mxu0
  %726 = vmatprep.mubr.f32.mxu0 0.0
  %727 = vmatmul.mubr.f32.gmra.mxu0 %v401
  %v728 = vpop.f32.mrf.mxu0
  %v729 = vadd.f32 %v292, %v728
  %v730 = vpop.f32.mrf.mxu0
  %731 = vmatprep.mubr.f32.mxu0 0.0
  %732 = vmatmul.mubr.f32.gmra.mxu0 %v404
  %v733 = vpop.f32.mrf.mxu0
  %v734 = vadd.f32 %v292, %v733
  %v735 = vpop.f32.mrf.mxu0
  %736 = vmatprep.mubr.f32.mxu0 0.0
  %737 = vmatmul.mubr.f32.gmra.mxu0 %v407
  %v738 = vpop.f32.mrf.mxu0
  %v739 = vadd.f32 %v292, %v738
  %v740 = vpop.f32.mrf.mxu0
  %741 = vmatprep.mubr.f32.mxu0 0.0
  %742 = vmatmul.mubr.f32.gmra.mxu0 %v410
  %v743 = vpop.f32.mrf.mxu0
  %v744 = vadd.f32 %v292, %v743
  %v745 = vpop.f32.mrf.mxu0
  %746 = vmatprep.mubr.f32.mxu0 0.0
  %747 = vmatmul.mubr.f32.gmra.mxu0 %v413
  %v748 = vpop.f32.mrf.mxu0
  %v749 = vadd.f32 %v292, %v748
  %v750 = vpop.f32.mrf.mxu0
  %751 = vmatprep.mubr.f32.mxu0 0.0
  %752 = vmatmul.mubr.f32.gmra.mxu0 %v416
  %v753 = vpop.f32.mrf.mxu0
  %v754 = vadd.f32 %v292, %v753
  %v755 = vpop.f32.mrf.mxu0
  %756 = vmatprep.mubr.f32.mxu0 0.0
  %757 = vmatmul.mubr.f32.gmra.mxu0 %v419
  %v758 = vpop.f32.mrf.mxu0
  %v759 = vadd.f32 %v292, %v758
  %v760 = vpop.f32.mrf.mxu0
  %761 = vmatprep.mubr.f32.mxu0 0.0
  %762 = vmatmul.mubr.f32.gmra.mxu0 %v422
  %v763 = vpop.f32.mrf.mxu0
  %v764 = vadd.f32 %v292, %v763
  %v765 = vpop.f32.mrf.mxu0
  %766 = vmatprep.mubr.f32.mxu0 0.0
  %767 = vmatmul.mubr.f32.gmra.mxu0 %v425
  %v768 = vpop.f32.mrf.mxu0
  %v769 = vadd.f32 %v292, %v768
  %v770 = vpop.f32.mrf.mxu0
  %771 = vmatprep.mubr.f32.mxu0 0.0
  %772 = vmatmul.mubr.f32.gmra.mxu0 %v428
  %v773 = vpop.f32.mrf.mxu0
  %v774 = vadd.f32 %v292, %v773
  %v775 = vpop.f32.mrf.mxu0
  %776 = vmatprep.mubr.f32.mxu0 0.0
  %777 = vmatmul.mubr.f32.gmra.mxu0 %v431
  %v778 = vpop.f32.mrf.mxu0
  %v779 = vadd.f32 %v292, %v778
  %v780 = vpop.f32.mrf.mxu0
  %781 = vmatprep.mubr.f32.mxu0 0.0
  %782 = vmatmul.mubr.f32.gmra.mxu0 %v434
  %v783 = vpop.f32.mrf.mxu0
  %v784 = vadd.f32 %v292, %v783
  %v785 = vpop.f32.mrf.mxu0
  %786 = vmatprep.mubr.f32.mxu0 0.0
  %787 = vmatmul.mubr.f32.gmra.mxu0 %v437
  %v788 = vpop.f32.mrf.mxu0
  %v789 = vadd.f32 %v292, %v788
  %v790 = vpop.f32.mrf.mxu0
  %791 = vmatprep.mubr.f32.mxu0 0.0
  %792 = vmatmul.mubr.f32.gmra.mxu0 %v440
  %v793 = vpop.f32.mrf.mxu0
  %v794 = vadd.f32 %v292, %v793
  %v795 = vpop.f32.mrf.mxu0
  %796 = vmatprep.mubr.f32.mxu0 0.0
  %797 = vmatmul.mubr.f32.gmra.mxu0 %v443
  %v798 = vpop.f32.mrf.mxu0
  %v799 = vadd.f32 %v292, %v798
  %v800 = vpop.f32.mrf.mxu0
  %801 = vmatprep.mubr.f32.mxu0 0.0
  %802 = vmatmul.mubr.f32.gmra.mxu0 %v446
  %v803 = vpop.f32.mrf.mxu0
  %v804 = vadd.f32 %v292, %v803
  %v805 = vpop.f32.mrf.mxu0
  %806 = vmatprep.mubr.f32.mxu0 0.0
  %807 = vmatmul.mubr.f32.gmra.mxu0 %v449
  %v808 = vpop.f32.mrf.mxu0
  %v809 = vadd.f32 %v292, %v808
  %v810 = vpop.f32.mrf.mxu0
  %811 = vmatprep.mubr.f32.mxu0 0.0
  %812 = vmatmul.mubr.f32.gmra.mxu0 %v452
  %v813 = vpop.f32.mrf.mxu0
  %v814 = vadd.f32 %v292, %v813
  %v815 = vpop.f32.mrf.mxu0
  %816 = vmatprep.mubr.f32.mxu0 0.0
  %817 = vmatmul.mubr.f32.gmra.mxu0 %v455
  %v818 = vpop.f32.mrf.mxu0
  %v819 = vadd.f32 %v292, %v818
  %v820 = vpop.f32.mrf.mxu0
  %821 = vmatprep.mubr.f32.mxu0 0.0
  %822 = vmatmul.mubr.f32.gmra.mxu0 %v458
  %v823 = vpop.f32.mrf.mxu0
  %v824 = vadd.f32 %v292, %v823
  %v825 = vpop.f32.mrf.mxu0
  %826 = vmatprep.mubr.f32.mxu0 0.0
  %827 = vmatmul.mubr.f32.gmra.mxu0 %v461
  %v828 = vpop.f32.mrf.mxu0
  %v829 = vadd.f32 %v292, %v828
  %v830 = vpop.f32.mrf.mxu0
  %831 = vmatprep.mubr.f32.mxu0 0.0
  %832 = vmatmul.mubr.f32.gmra.mxu0 %v464
  %v833 = vpop.f32.mrf.mxu0
  %v834 = vadd.f32 %v292, %v833
  %v835 = vpop.f32.mrf.mxu0
  %836 = vmatprep.mubr.f32.mxu0 0.0
  %837 = vmatmul.mubr.f32.gmra.mxu0 %v467
  %v838 = vpop.f32.mrf.mxu0
  %v839 = vadd.f32 %v292, %v838
  %v840 = vpop.f32.mrf.mxu0
  %841 = vmatprep.mubr.f32.mxu0 0.0
  %842 = vmatmul.mubr.f32.gmra.mxu0 %v470
  %v843 = vpop.f32.mrf.mxu0
  %v844 = vadd.f32 %v292, %v843
  %v845 = vpop.f32.mrf.mxu0
  %846 = vmatprep.mubr.f32.mxu0 0.0
  %847 = vmatmul.mubr.f32.gmra.mxu0 %v473
  %v848 = vpop.f32.mrf.mxu0
  %v849 = vadd.f32 %v292, %v848
  %v850 = vpop.f32.mrf.mxu0
  %851 = vmatprep.mubr.f32.mxu0 0.0
  %852 = vmatmul.mubr.f32.gmra.mxu0 %v476
  %v853 = vpop.f32.mrf.mxu0
  %v854 = vadd.f32 %v292, %v853
  %v855 = vpop.f32.mrf.mxu0
  %856 = vmatprep.mubr.f32.mxu0 0.0
  %857 = vmatmul.mubr.f32.gmra.mxu0 %v479
  %v858 = vpop.f32.mrf.mxu0
  %v859 = vadd.f32 %v292, %v858
  %v860 = vpop.f32.mrf.mxu0
  %861 = vmatprep.mubr.f32.mxu0 0.0
  %862 = vmatmul.mubr.f32.gmra.mxu0 %v482
  %v863 = vpop.f32.mrf.mxu0
  %v864 = vadd.f32 %v292, %v863
  %v865 = vpop.f32.mrf.mxu0
  %866 = vmatprep.mubr.f32.mxu0 0.0
  %867 = vmatmul.mubr.f32.gmra.mxu0 %v485
  %v868 = vpop.f32.mrf.mxu0
  %v869 = vadd.f32 %v292, %v868
  %v870 = vpop.f32.mrf.mxu0
  %871 = vdwg.mxu0
  %v872 = vsub.f32 0.0, %v554
  %v873 = vsub.f32 0.0, %v559
  %v874 = vsub.f32 0.0, %v564
  %v875 = vsub.f32 0.0, %v569
  %v876 = vsub.f32 0.0, %v574
  %v877 = vsub.f32 0.0, %v579
  %v878 = vsub.f32 0.0, %v584
  %v879 = vsub.f32 0.0, %v589
  %v880 = vsub.f32 0.0, %v594
  %v881 = vsub.f32 0.0, %v599
  %v882 = vsub.f32 0.0, %v604
  %v883 = vsub.f32 0.0, %v609
  %v884 = vsub.f32 0.0, %v614
  %v885 = vsub.f32 0.0, %v619
  %v886 = vsub.f32 0.0, %v624
  %v887 = vsub.f32 0.0, %v629
  %v888 = vsub.f32 0.0, %v634
  %v889 = vsub.f32 0.0, %v639
  %v890 = vsub.f32 0.0, %v644
  %v891 = vsub.f32 0.0, %v649
  %v892 = vsub.f32 0.0, %v654
  %v893 = vsub.f32 0.0, %v659
  %v894 = vsub.f32 0.0, %v664
  %v895 = vsub.f32 0.0, %v669
  %v896 = vsub.f32 0.0, %v674
  %v897 = vsub.f32 0.0, %v679
  %v898 = vsub.f32 0.0, %v684
  %v899 = vsub.f32 0.0, %v689
  %v900 = vsub.f32 0.0, %v694
  %v901 = vsub.f32 0.0, %v699
  %v902 = vsub.f32 0.0, %v704
  %v903 = vsub.f32 0.0, %v709
  %v904 = vsub.f32 0.0, %v714
  %v905 = vsub.f32 0.0, %v719
  %v906 = vsub.f32 0.0, %v724
  %v907 = vsub.f32 0.0, %v729
  %v908 = vsub.f32 0.0, %v734
  %v909 = vsub.f32 0.0, %v739
  %v910 = vsub.f32 0.0, %v744
  %v911 = vsub.f32 0.0, %v749
  %v912 = vsub.f32 0.0, %v754
  %v913 = vsub.f32 0.0, %v759
  %v914 = vsub.f32 0.0, %v764
  %v915 = vsub.f32 0.0, %v769
  %v916 = vsub.f32 0.0, %v774
  %v917 = vsub.f32 0.0, %v779
  %v918 = vsub.f32 0.0, %v784
  %v919 = vsub.f32 0.0, %v789
  %v920 = vsub.f32 0.0, %v794
  %v921 = vsub.f32 0.0, %v799
  %v922 = vsub.f32 0.0, %v804
  %v923 = vsub.f32 0.0, %v809
  %v924 = vsub.f32 0.0, %v814
  %v925 = vsub.f32 0.0, %v819
  %v926 = vsub.f32 0.0, %v824
  %v927 = vsub.f32 0.0, %v829
  %v928 = vsub.f32 0.0, %v834
  %v929 = vsub.f32 0.0, %v839
  %v930 = vsub.f32 0.0, %v844
  %v931 = vsub.f32 0.0, %v849
  %v932 = vsub.f32 0.0, %v854
  %v933 = vsub.f32 0.0, %v859
  %v934 = vsub.f32 0.0, %v864
  %v935 = vsub.f32 0.0, %v869
  %v936 = vmul.f32 %v872, 1.442695
  %v937 = vpow.pop %v936
  %v938 = vmul.f32 %v873, 1.442695
  %v939 = vpow.pop %v938
  %v940 = vmul.f32 %v874, 1.442695
  %v941 = vpow.pop %v940
  %v942 = vmul.f32 %v875, 1.442695
  %v943 = vpow.pop %v942
  %v944 = vmul.f32 %v876, 1.442695
  %v945 = vpow.pop %v944
  %v946 = vmul.f32 %v877, 1.442695
  %v947 = vpow.pop %v946
  %v948 = vmul.f32 %v878, 1.442695
  %v949 = vpow.pop %v948
  %v950 = vmul.f32 %v879, 1.442695
  %v951 = vpow.pop %v950
  %v952 = vmul.f32 %v880, 1.442695
  %v953 = vpow.pop %v952
  %v954 = vmul.f32 %v881, 1.442695
  %v955 = vpow.pop %v954
  %v956 = vmul.f32 %v882, 1.442695
  %v957 = vpow.pop %v956
  %v958 = vmul.f32 %v883, 1.442695
  %v959 = vpow.pop %v958
  %v960 = vmul.f32 %v884, 1.442695
  %v961 = vpow.pop %v960
  %v962 = vmul.f32 %v885, 1.442695
  %v963 = vpow.pop %v962
  %v964 = vmul.f32 %v886, 1.442695
  %v965 = vpow.pop %v964
  %v966 = vmul.f32 %v887, 1.442695
  %v967 = vpow.pop %v966
  %v968 = vmul.f32 %v888, 1.442695
  %v969 = vpow.pop %v968
  %v970 = vmul.f32 %v889, 1.442695
  %v971 = vpow.pop %v970
  %v972 = vmul.f32 %v890, 1.442695
  %v973 = vpow.pop %v972
  %v974 = vmul.f32 %v891, 1.442695
  %v975 = vpow.pop %v974
  %v976 = vmul.f32 %v892, 1.442695
  %v977 = vpow.pop %v976
  %v978 = vmul.f32 %v893, 1.442695
  %v979 = vpow.pop %v978
  %v980 = vmul.f32 %v894, 1.442695
  %v981 = vpow.pop %v980
  %v982 = vmul.f32 %v895, 1.442695
  %v983 = vpow.pop %v982
  %v984 = vmul.f32 %v896, 1.442695
  %v985 = vpow.pop %v984
  %v986 = vmul.f32 %v897, 1.442695
  %v987 = vpow.pop %v986
  %v988 = vmul.f32 %v898, 1.442695
  %v989 = vpow.pop %v988
  %v990 = vmul.f32 %v899, 1.442695
  %v991 = vpow.pop %v990
  %v992 = vmul.f32 %v900, 1.442695
  %v993 = vpow.pop %v992
  %v994 = vmul.f32 %v901, 1.442695
  %v995 = vpow.pop %v994
  %v996 = vmul.f32 %v902, 1.442695
  %v997 = vpow.pop %v996
  %v998 = vmul.f32 %v903, 1.442695
  %v999 = vpow.pop %v998
  %v1000 = vmul.f32 %v904, 1.442695
  %v1001 = vpow.pop %v1000
  %v1002 = vmul.f32 %v905, 1.442695
  %v1003 = vpow.pop %v1002
  %v1004 = vmul.f32 %v906, 1.442695
  %v1005 = vpow.pop %v1004
  %v1006 = vmul.f32 %v907, 1.442695
  %v1007 = vpow.pop %v1006
  %v1008 = vmul.f32 %v908, 1.442695
  %v1009 = vpow.pop %v1008
  %v1010 = vmul.f32 %v909, 1.442695
  %v1011 = vpow.pop %v1010
  %v1012 = vmul.f32 %v910, 1.442695
  %v1013 = vpow.pop %v1012
  %v1014 = vmul.f32 %v911, 1.442695
  %v1015 = vpow.pop %v1014
  %v1016 = vmul.f32 %v912, 1.442695
  %v1017 = vpow.pop %v1016
  %v1018 = vmul.f32 %v913, 1.442695
  %v1019 = vpow.pop %v1018
  %v1020 = vmul.f32 %v914, 1.442695
  %v1021 = vpow.pop %v1020
  %v1022 = vmul.f32 %v915, 1.442695
  %v1023 = vpow.pop %v1022
  %v1024 = vmul.f32 %v916, 1.442695
  %v1025 = vpow.pop %v1024
  %v1026 = vmul.f32 %v917, 1.442695
  %v1027 = vpow.pop %v1026
  %v1028 = vmul.f32 %v918, 1.442695
  %v1029 = vpow.pop %v1028
  %v1030 = vmul.f32 %v919, 1.442695
  %v1031 = vpow.pop %v1030
  %v1032 = vmul.f32 %v920, 1.442695
  %v1033 = vpow.pop %v1032
  %v1034 = vmul.f32 %v921, 1.442695
  %v1035 = vpow.pop %v1034
  %v1036 = vmul.f32 %v922, 1.442695
  %v1037 = vpow.pop %v1036
  %v1038 = vmul.f32 %v923, 1.442695
  %v1039 = vpow.pop %v1038
  %v1040 = vmul.f32 %v924, 1.442695
  %v1041 = vpow.pop %v1040
  %v1042 = vmul.f32 %v925, 1.442695
  %v1043 = vpow.pop %v1042
  %v1044 = vmul.f32 %v926, 1.442695
  %v1045 = vpow.pop %v1044
  %v1046 = vmul.f32 %v927, 1.442695
  %v1047 = vpow.pop %v1046
  %v1048 = vmul.f32 %v928, 1.442695
  %v1049 = vpow.pop %v1048
  %v1050 = vmul.f32 %v929, 1.442695
  %v1051 = vpow.pop %v1050
  %v1052 = vmul.f32 %v930, 1.442695
  %v1053 = vpow.pop %v1052
  %v1054 = vmul.f32 %v931, 1.442695
  %v1055 = vpow.pop %v1054
  %v1056 = vmul.f32 %v932, 1.442695
  %v1057 = vpow.pop %v1056
  %v1058 = vmul.f32 %v933, 1.442695
  %v1059 = vpow.pop %v1058
  %v1060 = vmul.f32 %v934, 1.442695
  %v1061 = vpow.pop %v1060
  %v1062 = vmul.f32 %v935, 1.442695
  %v1063 = vpow.pop %v1062
  %v1064 = vadd.f32 %v937, 1.0
  %v1065 = vadd.f32 %v939, 1.0
  %v1066 = vadd.f32 %v941, 1.0
  %v1067 = vadd.f32 %v943, 1.0
  %v1068 = vadd.f32 %v945, 1.0
  %v1069 = vadd.f32 %v947, 1.0
  %v1070 = vadd.f32 %v949, 1.0
  %v1071 = vadd.f32 %v951, 1.0
  %v1072 = vadd.f32 %v953, 1.0
  %v1073 = vadd.f32 %v955, 1.0
  %v1074 = vadd.f32 %v957, 1.0
  %v1075 = vadd.f32 %v959, 1.0
  %v1076 = vadd.f32 %v961, 1.0
  %v1077 = vadd.f32 %v963, 1.0
  %v1078 = vadd.f32 %v965, 1.0
  %v1079 = vadd.f32 %v967, 1.0
  %v1080 = vadd.f32 %v969, 1.0
  %v1081 = vadd.f32 %v971, 1.0
  %v1082 = vadd.f32 %v973, 1.0
  %v1083 = vadd.f32 %v975, 1.0
  %v1084 = vadd.f32 %v977, 1.0
  %v1085 = vadd.f32 %v979, 1.0
  %v1086 = vadd.f32 %v981, 1.0
  %v1087 = vadd.f32 %v983, 1.0
  %v1088 = vadd.f32 %v985, 1.0
  %v1089 = vadd.f32 %v987, 1.0
  %v1090 = vadd.f32 %v989, 1.0
  %v1091 = vadd.f32 %v991, 1.0
  %v1092 = vadd.f32 %v993, 1.0
  %v1093 = vadd.f32 %v995, 1.0
  %v1094 = vadd.f32 %v997, 1.0
  %v1095 = vadd.f32 %v999, 1.0
  %v1096 = vadd.f32 %v1001, 1.0
  %v1097 = vadd.f32 %v1003, 1.0
  %v1098 = vadd.f32 %v1005, 1.0
  %v1099 = vadd.f32 %v1007, 1.0
  %v1100 = vadd.f32 %v1009, 1.0
  %v1101 = vadd.f32 %v1011, 1.0
  %v1102 = vadd.f32 %v1013, 1.0
  %v1103 = vadd.f32 %v1015, 1.0
  %v1104 = vadd.f32 %v1017, 1.0
  %v1105 = vadd.f32 %v1019, 1.0
  %v1106 = vadd.f32 %v1021, 1.0
  %v1107 = vadd.f32 %v1023, 1.0
  %v1108 = vadd.f32 %v1025, 1.0
  %v1109 = vadd.f32 %v1027, 1.0
  %v1110 = vadd.f32 %v1029, 1.0
  %v1111 = vadd.f32 %v1031, 1.0
  %v1112 = vadd.f32 %v1033, 1.0
  %v1113 = vadd.f32 %v1035, 1.0
  %v1114 = vadd.f32 %v1037, 1.0
  %v1115 = vadd.f32 %v1039, 1.0
  %v1116 = vadd.f32 %v1041, 1.0
  %v1117 = vadd.f32 %v1043, 1.0
  %v1118 = vadd.f32 %v1045, 1.0
  %v1119 = vadd.f32 %v1047, 1.0
  %v1120 = vadd.f32 %v1049, 1.0
  %v1121 = vadd.f32 %v1051, 1.0
  %v1122 = vadd.f32 %v1053, 1.0
  %v1123 = vadd.f32 %v1055, 1.0
  %v1124 = vadd.f32 %v1057, 1.0
  %v1125 = vadd.f32 %v1059, 1.0
  %v1126 = vadd.f32 %v1061, 1.0
  %v1127 = vadd.f32 %v1063, 1.0
  %v1128 = vrcp.pop %v1064
  %v1129 = vmul.f32 1.0, %v1128
  %v1130 = vrcp.pop %v1065
  %v1131 = vmul.f32 1.0, %v1130
  %v1132 = vrcp.pop %v1066
  %v1133 = vmul.f32 1.0, %v1132
  %v1134 = vrcp.pop %v1067
  %v1135 = vmul.f32 1.0, %v1134
  %v1136 = vrcp.pop %v1068
  %v1137 = vmul.f32 1.0, %v1136
  %v1138 = vrcp.pop %v1069
  %v1139 = vmul.f32 1.0, %v1138
  %v1140 = vrcp.pop %v1070
  %v1141 = vmul.f32 1.0, %v1140
  %v1142 = vrcp.pop %v1071
  %v1143 = vmul.f32 1.0, %v1142
  %v1144 = vrcp.pop %v1072
  %v1145 = vmul.f32 1.0, %v1144
  %v1146 = vrcp.pop %v1073
  %v1147 = vmul.f32 1.0, %v1146
  %v1148 = vrcp.pop %v1074
  %v1149 = vmul.f32 1.0, %v1148
  %v1150 = vrcp.pop %v1075
  %v1151 = vmul.f32 1.0, %v1150
  %v1152 = vrcp.pop %v1076
  %v1153 = vmul.f32 1.0, %v1152
  %v1154 = vrcp.pop %v1077
  %v1155 = vmul.f32 1.0, %v1154
  %v1156 = vrcp.pop %v1078
  %v1157 = vmul.f32 1.0, %v1156
  %v1158 = vrcp.pop %v1079
  %v1159 = vmul.f32 1.0, %v1158
  %v1160 = vrcp.pop %v1080
  %v1161 = vmul.f32 1.0, %v1160
  %v1162 = vrcp.pop %v1081
  %v1163 = vmul.f32 1.0, %v1162
  %v1164 = vrcp.pop %v1082
  %v1165 = vmul.f32 1.0, %v1164
  %v1166 = vrcp.pop %v1083
  %v1167 = vmul.f32 1.0, %v1166
  %v1168 = vrcp.pop %v1084
  %v1169 = vmul.f32 1.0, %v1168
  %v1170 = vrcp.pop %v1085
  %v1171 = vmul.f32 1.0, %v1170
  %v1172 = vrcp.pop %v1086
  %v1173 = vmul.f32 1.0, %v1172
  %v1174 = vrcp.pop %v1087
  %v1175 = vmul.f32 1.0, %v1174
  %v1176 = vrcp.pop %v1088
  %v1177 = vmul.f32 1.0, %v1176
  %v1178 = vrcp.pop %v1089
  %v1179 = vmul.f32 1.0, %v1178
  %v1180 = vrcp.pop %v1090
  %v1181 = vmul.f32 1.0, %v1180
  %v1182 = vrcp.pop %v1091
  %v1183 = vmul.f32 1.0, %v1182
  %v1184 = vrcp.pop %v1092
  %v1185 = vmul.f32 1.0, %v1184
  %v1186 = vrcp.pop %v1093
  %v1187 = vmul.f32 1.0, %v1186
  %v1188 = vrcp.pop %v1094
  %v1189 = vmul.f32 1.0, %v1188
  %v1190 = vrcp.pop %v1095
  %v1191 = vmul.f32 1.0, %v1190
  %v1192 = vrcp.pop %v1096
  %v1193 = vmul.f32 1.0, %v1192
  %v1194 = vrcp.pop %v1097
  %v1195 = vmul.f32 1.0, %v1194
  %v1196 = vrcp.pop %v1098
  %v1197 = vmul.f32 1.0, %v1196
  %v1198 = vrcp.pop %v1099
  %v1199 = vmul.f32 1.0, %v1198
  %v1200 = vrcp.pop %v1100
  %v1201 = vmul.f32 1.0, %v1200
  %v1202 = vrcp.pop %v1101
  %v1203 = vmul.f32 1.0, %v1202
  %v1204 = vrcp.pop %v1102
  %v1205 = vmul.f32 1.0, %v1204
  %v1206 = vrcp.pop %v1103
  %v1207 = vmul.f32 1.0, %v1206
  %v1208 = vrcp.pop %v1104
  %v1209 = vmul.f32 1.0, %v1208
  %v1210 = vrcp.pop %v1105
  %v1211 = vmul.f32 1.0, %v1210
  %v1212 = vrcp.pop %v1106
  %v1213 = vmul.f32 1.0, %v1212
  %v1214 = vrcp.pop %v1107
  %v1215 = vmul.f32 1.0, %v1214
  %v1216 = vrcp.pop %v1108
  %v1217 = vmul.f32 1.0, %v1216
  %v1218 = vrcp.pop %v1109
  %v1219 = vmul.f32 1.0, %v1218
  %v1220 = vrcp.pop %v1110
  %v1221 = vmul.f32 1.0, %v1220
  %v1222 = vrcp.pop %v1111
  %v1223 = vmul.f32 1.0, %v1222
  %v1224 = vrcp.pop %v1112
  %v1225 = vmul.f32 1.0, %v1224
  %v1226 = vrcp.pop %v1113
  %v1227 = vmul.f32 1.0, %v1226
  %v1228 = vrcp.pop %v1114
  %v1229 = vmul.f32 1.0, %v1228
  %v1230 = vrcp.pop %v1115
  %v1231 = vmul.f32 1.0, %v1230
  %v1232 = vrcp.pop %v1116
  %v1233 = vmul.f32 1.0, %v1232
  %v1234 = vrcp.pop %v1117
  %v1235 = vmul.f32 1.0, %v1234
  %v1236 = vrcp.pop %v1118
  %v1237 = vmul.f32 1.0, %v1236
  %v1238 = vrcp.pop %v1119
  %v1239 = vmul.f32 1.0, %v1238
  %v1240 = vrcp.pop %v1120
  %v1241 = vmul.f32 1.0, %v1240
  %v1242 = vrcp.pop %v1121
  %v1243 = vmul.f32 1.0, %v1242
  %v1244 = vrcp.pop %v1122
  %v1245 = vmul.f32 1.0, %v1244
  %v1246 = vrcp.pop %v1123
  %v1247 = vmul.f32 1.0, %v1246
  %v1248 = vrcp.pop %v1124
  %v1249 = vmul.f32 1.0, %v1248
  %v1250 = vrcp.pop %v1125
  %v1251 = vmul.f32 1.0, %v1250
  %v1252 = vrcp.pop %v1126
  %v1253 = vmul.f32 1.0, %v1252
  %v1254 = vrcp.pop %v1127
  %v1255 = vmul.f32 1.0, %v1254
  %1320 = vrot.lane.b32.xlu0 %v1129, 112
  %v1321 = vpop.permute.xlu0 %1320
  %1322 = vrot.lane.b32.xlu0 %v1131, 112
  %v1323 = vpop.permute.xlu0 %1322
  %1324 = vrot.lane.b32.xlu0 %v1133, 112
  %v1325 = vpop.permute.xlu0 %1324
  %1326 = vrot.lane.b32.xlu0 %v1135, 112
  %v1327 = vpop.permute.xlu0 %1326
  %1328 = vrot.lane.b32.xlu0 %v1137, 112
  %v1329 = vpop.permute.xlu0 %1328
  %1330 = vrot.lane.b32.xlu0 %v1139, 112
  %v1331 = vpop.permute.xlu0 %1330
  %1332 = vrot.lane.b32.xlu0 %v1141, 112
  %v1333 = vpop.permute.xlu0 %1332
  %1334 = vrot.lane.b32.xlu0 %v1143, 112
  %v1335 = vpop.permute.xlu0 %1334
  %1336 = vrot.lane.b32.xlu0 %v1145, 112
  %v1337 = vpop.permute.xlu0 %1336
  %1338 = vrot.lane.b32.xlu0 %v1147, 112
  %v1339 = vpop.permute.xlu0 %1338
  %1340 = vrot.lane.b32.xlu0 %v1149, 112
  %v1341 = vpop.permute.xlu0 %1340
  %1342 = vrot.lane.b32.xlu0 %v1151, 112
  %v1343 = vpop.permute.xlu0 %1342
  %1344 = vrot.lane.b32.xlu0 %v1153, 112
  %v1345 = vpop.permute.xlu0 %1344
  %1346 = vrot.lane.b32.xlu0 %v1155, 112
  %v1347 = vpop.permute.xlu0 %1346
  %1348 = vrot.lane.b32.xlu0 %v1157, 112
  %v1349 = vpop.permute.xlu0 %1348
  %1350 = vrot.lane.b32.xlu0 %v1159, 112
  %v1351 = vpop.permute.xlu0 %1350
  %1352 = vrot.lane.b32.xlu0 %v1161, 112
  %v1353 = vpop.permute.xlu0 %1352
  %1354 = vrot.lane.b32.xlu0 %v1163, 112
  %v1355 = vpop.permute.xlu0 %1354
  %1356 = vrot.lane.b32.xlu0 %v1165, 112
  %v1357 = vpop.permute.xlu0 %1356
  %1358 = vrot.lane.b32.xlu0 %v1167, 112
  %v1359 = vpop.permute.xlu0 %1358
  %1360 = vrot.lane.b32.xlu0 %v1169, 112
  %v1361 = vpop.permute.xlu0 %1360
  %1362 = vrot.lane.b32.xlu0 %v1171, 112
  %v1363 = vpop.permute.xlu0 %1362
  %1364 = vrot.lane.b32.xlu0 %v1173, 112
  %v1365 = vpop.permute.xlu0 %1364
  %1366 = vrot.lane.b32.xlu0 %v1175, 112
  %v1367 = vpop.permute.xlu0 %1366
  %1368 = vrot.lane.b32.xlu0 %v1177, 112
  %v1369 = vpop.permute.xlu0 %1368
  %1370 = vrot.lane.b32.xlu0 %v1179, 112
  %v1371 = vpop.permute.xlu0 %1370
  %1372 = vrot.lane.b32.xlu0 %v1181, 112
  %v1373 = vpop.permute.xlu0 %1372
  %1374 = vrot.lane.b32.xlu0 %v1183, 112
  %v1375 = vpop.permute.xlu0 %1374
  %1376 = vrot.lane.b32.xlu0 %v1185, 112
  %v1377 = vpop.permute.xlu0 %1376
  %1378 = vrot.lane.b32.xlu0 %v1187, 112
  %v1379 = vpop.permute.xlu0 %1378
  %1380 = vrot.lane.b32.xlu0 %v1189, 112
  %v1381 = vpop.permute.xlu0 %1380
  %1382 = vrot.lane.b32.xlu0 %v1191, 112
  %v1383 = vpop.permute.xlu0 %1382
  %1384 = vrot.lane.b32.xlu0 %v1193, 112
  %v1385 = vpop.permute.xlu0 %1384
  %1386 = vrot.lane.b32.xlu0 %v1195, 112
  %v1387 = vpop.permute.xlu0 %1386
  %1388 = vrot.lane.b32.xlu0 %v1197, 112
  %v1389 = vpop.permute.xlu0 %1388
  %1390 = vrot.lane.b32.xlu0 %v1199, 112
  %v1391 = vpop.permute.xlu0 %1390
  %1392 = vrot.lane.b32.xlu0 %v1201, 112
  %v1393 = vpop.permute.xlu0 %1392
  %1394 = vrot.lane.b32.xlu0 %v1203, 112
  %v1395 = vpop.permute.xlu0 %1394
  %1396 = vrot.lane.b32.xlu0 %v1205, 112
  %v1397 = vpop.permute.xlu0 %1396
  %1398 = vrot.lane.b32.xlu0 %v1207, 112
  %v1399 = vpop.permute.xlu0 %1398
  %1400 = vrot.lane.b32.xlu0 %v1209, 112
  %v1401 = vpop.permute.xlu0 %1400
  %1402 = vrot.lane.b32.xlu0 %v1211, 112
  %v1403 = vpop.permute.xlu0 %1402
  %1404 = vrot.lane.b32.xlu0 %v1213, 112
  %v1405 = vpop.permute.xlu0 %1404
  %1406 = vrot.lane.b32.xlu0 %v1215, 112
  %v1407 = vpop.permute.xlu0 %1406
  %1408 = vrot.lane.b32.xlu0 %v1217, 112
  %v1409 = vpop.permute.xlu0 %1408
  %1410 = vrot.lane.b32.xlu0 %v1219, 112
  %v1411 = vpop.permute.xlu0 %1410
  %1412 = vrot.lane.b32.xlu0 %v1221, 112
  %v1413 = vpop.permute.xlu0 %1412
  %1414 = vrot.lane.b32.xlu0 %v1223, 112
  %v1415 = vpop.permute.xlu0 %1414
  %1416 = vrot.lane.b32.xlu0 %v1225, 112
  %v1417 = vpop.permute.xlu0 %1416
  %1418 = vrot.lane.b32.xlu0 %v1227, 112
  %v1419 = vpop.permute.xlu0 %1418
  %1420 = vrot.lane.b32.xlu0 %v1229, 112
  %v1421 = vpop.permute.xlu0 %1420
  %1422 = vrot.lane.b32.xlu0 %v1231, 112
  %v1423 = vpop.permute.xlu0 %1422
  %1424 = vrot.lane.b32.xlu0 %v1233, 112
  %v1425 = vpop.permute.xlu0 %1424
  %1426 = vrot.lane.b32.xlu0 %v1235, 112
  %v1427 = vpop.permute.xlu0 %1426
  %1428 = vrot.lane.b32.xlu0 %v1237, 112
  %v1429 = vpop.permute.xlu0 %1428
  %1430 = vrot.lane.b32.xlu0 %v1239, 112
  %v1431 = vpop.permute.xlu0 %1430
  %1432 = vrot.lane.b32.xlu0 %v1241, 112
  %v1433 = vpop.permute.xlu0 %1432
  %1434 = vrot.lane.b32.xlu0 %v1243, 112
  %v1435 = vpop.permute.xlu0 %1434
  %1436 = vrot.lane.b32.xlu0 %v1245, 112
  %v1437 = vpop.permute.xlu0 %1436
  %1438 = vrot.lane.b32.xlu0 %v1247, 112
  %v1439 = vpop.permute.xlu0 %1438
  %1440 = vrot.lane.b32.xlu0 %v1249, 112
  %v1441 = vpop.permute.xlu0 %1440
  %1442 = vrot.lane.b32.xlu0 %v1251, 112
  %v1443 = vpop.permute.xlu0 %1442
  %1444 = vrot.lane.b32.xlu0 %v1253, 112
  %v1445 = vpop.permute.xlu0 %1444
  %1446 = vrot.lane.b32.xlu0 %v1255, 112
  %v1447 = vpop.permute.xlu0 %1446
  %v1512 = vsub.f32 %v1129, %v1321
  %v1513 = vsub.f32 %v1131, %v1323
  %v1514 = vsub.f32 %v1133, %v1325
  %v1515 = vsub.f32 %v1135, %v1327
  %v1516 = vsub.f32 %v1137, %v1329
  %v1517 = vsub.f32 %v1139, %v1331
  %v1518 = vsub.f32 %v1141, %v1333
  %v1519 = vsub.f32 %v1143, %v1335
  %v1520 = vsub.f32 %v1145, %v1337
  %v1521 = vsub.f32 %v1147, %v1339
  %v1522 = vsub.f32 %v1149, %v1341
  %v1523 = vsub.f32 %v1151, %v1343
  %v1524 = vsub.f32 %v1153, %v1345
  %v1525 = vsub.f32 %v1155, %v1347
  %v1526 = vsub.f32 %v1157, %v1349
  %v1527 = vsub.f32 %v1159, %v1351
  %v1528 = vsub.f32 %v1161, %v1353
  %v1529 = vsub.f32 %v1163, %v1355
  %v1530 = vsub.f32 %v1165, %v1357
  %v1531 = vsub.f32 %v1167, %v1359
  %v1532 = vsub.f32 %v1169, %v1361
  %v1533 = vsub.f32 %v1171, %v1363
  %v1534 = vsub.f32 %v1173, %v1365
  %v1535 = vsub.f32 %v1175, %v1367
  %v1536 = vsub.f32 %v1177, %v1369
  %v1537 = vsub.f32 %v1179, %v1371
  %v1538 = vsub.f32 %v1181, %v1373
  %v1539 = vsub.f32 %v1183, %v1375
  %v1540 = vsub.f32 %v1185, %v1377
  %v1541 = vsub.f32 %v1187, %v1379
  %v1542 = vsub.f32 %v1189, %v1381
  %v1543 = vsub.f32 %v1191, %v1383
  %v1544 = vsub.f32 %v1193, %v1385
  %v1545 = vsub.f32 %v1195, %v1387
  %v1546 = vsub.f32 %v1197, %v1389
  %v1547 = vsub.f32 %v1199, %v1391
  %v1548 = vsub.f32 %v1201, %v1393
  %v1549 = vsub.f32 %v1203, %v1395
  %v1550 = vsub.f32 %v1205, %v1397
  %v1551 = vsub.f32 %v1207, %v1399
  %v1552 = vsub.f32 %v1209, %v1401
  %v1553 = vsub.f32 %v1211, %v1403
  %v1554 = vsub.f32 %v1213, %v1405
  %v1555 = vsub.f32 %v1215, %v1407
  %v1556 = vsub.f32 %v1217, %v1409
  %v1557 = vsub.f32 %v1219, %v1411
  %v1558 = vsub.f32 %v1221, %v1413
  %v1559 = vsub.f32 %v1223, %v1415
  %v1560 = vsub.f32 %v1225, %v1417
  %v1561 = vsub.f32 %v1227, %v1419
  %v1562 = vsub.f32 %v1229, %v1421
  %v1563 = vsub.f32 %v1231, %v1423
  %v1564 = vsub.f32 %v1233, %v1425
  %v1565 = vsub.f32 %v1235, %v1427
  %v1566 = vsub.f32 %v1237, %v1429
  %v1567 = vsub.f32 %v1239, %v1431
  %v1568 = vsub.f32 %v1241, %v1433
  %v1569 = vsub.f32 %v1243, %v1435
  %v1570 = vsub.f32 %v1245, %v1437
  %v1571 = vsub.f32 %v1247, %v1439
  %v1572 = vsub.f32 %v1249, %v1441
  %v1573 = vsub.f32 %v1251, %v1443
  %v1574 = vsub.f32 %v1253, %v1445
  %v1575 = vsub.f32 %v1255, %v1447
  %v1576 = vmul.f32 %v1512, -50.0
  %v1577 = vmul.f32 %v1513, -50.0
  %v1578 = vmul.f32 %v1514, -50.0
  %v1579 = vmul.f32 %v1515, -50.0
  %v1580 = vmul.f32 %v1516, -50.0
  %v1581 = vmul.f32 %v1517, -50.0
  %v1582 = vmul.f32 %v1518, -50.0
  %v1583 = vmul.f32 %v1519, -50.0
  %v1584 = vmul.f32 %v1520, -50.0
  %v1585 = vmul.f32 %v1521, -50.0
  %v1586 = vmul.f32 %v1522, -50.0
  %v1587 = vmul.f32 %v1523, -50.0
  %v1588 = vmul.f32 %v1524, -50.0
  %v1589 = vmul.f32 %v1525, -50.0
  %v1590 = vmul.f32 %v1526, -50.0
  %v1591 = vmul.f32 %v1527, -50.0
  %v1592 = vmul.f32 %v1528, -50.0
  %v1593 = vmul.f32 %v1529, -50.0
  %v1594 = vmul.f32 %v1530, -50.0
  %v1595 = vmul.f32 %v1531, -50.0
  %v1596 = vmul.f32 %v1532, -50.0
  %v1597 = vmul.f32 %v1533, -50.0
  %v1598 = vmul.f32 %v1534, -50.0
  %v1599 = vmul.f32 %v1535, -50.0
  %v1600 = vmul.f32 %v1536, -50.0
  %v1601 = vmul.f32 %v1537, -50.0
  %v1602 = vmul.f32 %v1538, -50.0
  %v1603 = vmul.f32 %v1539, -50.0
  %v1604 = vmul.f32 %v1540, -50.0
  %v1605 = vmul.f32 %v1541, -50.0
  %v1606 = vmul.f32 %v1542, -50.0
  %v1607 = vmul.f32 %v1543, -50.0
  %v1608 = vmul.f32 %v1544, -50.0
  %v1609 = vmul.f32 %v1545, -50.0
  %v1610 = vmul.f32 %v1546, -50.0
  %v1611 = vmul.f32 %v1547, -50.0
  %v1612 = vmul.f32 %v1548, -50.0
  %v1613 = vmul.f32 %v1549, -50.0
  %v1614 = vmul.f32 %v1550, -50.0
  %v1615 = vmul.f32 %v1551, -50.0
  %v1616 = vmul.f32 %v1552, -50.0
  %v1617 = vmul.f32 %v1553, -50.0
  %v1618 = vmul.f32 %v1554, -50.0
  %v1619 = vmul.f32 %v1555, -50.0
  %v1620 = vmul.f32 %v1556, -50.0
  %v1621 = vmul.f32 %v1557, -50.0
  %v1622 = vmul.f32 %v1558, -50.0
  %v1623 = vmul.f32 %v1559, -50.0
  %v1624 = vmul.f32 %v1560, -50.0
  %v1625 = vmul.f32 %v1561, -50.0
  %v1626 = vmul.f32 %v1562, -50.0
  %v1627 = vmul.f32 %v1563, -50.0
  %v1628 = vmul.f32 %v1564, -50.0
  %v1629 = vmul.f32 %v1565, -50.0
  %v1630 = vmul.f32 %v1566, -50.0
  %v1631 = vmul.f32 %v1567, -50.0
  %v1632 = vmul.f32 %v1568, -50.0
  %v1633 = vmul.f32 %v1569, -50.0
  %v1634 = vmul.f32 %v1570, -50.0
  %v1635 = vmul.f32 %v1571, -50.0
  %v1636 = vmul.f32 %v1572, -50.0
  %v1637 = vmul.f32 %v1573, -50.0
  %v1638 = vmul.f32 %v1574, -50.0
  %v1639 = vmul.f32 %v1575, -50.0
  %v1640 = vmul.f32 %v1576, 1.442695
  %v1641 = vpow.pop %v1640
  %v1642 = vmul.f32 %v1577, 1.442695
  %v1643 = vpow.pop %v1642
  %v1644 = vmul.f32 %v1578, 1.442695
  %v1645 = vpow.pop %v1644
  %v1646 = vmul.f32 %v1579, 1.442695
  %v1647 = vpow.pop %v1646
  %v1648 = vmul.f32 %v1580, 1.442695
  %v1649 = vpow.pop %v1648
  %v1650 = vmul.f32 %v1581, 1.442695
  %v1651 = vpow.pop %v1650
  %v1652 = vmul.f32 %v1582, 1.442695
  %v1653 = vpow.pop %v1652
  %v1654 = vmul.f32 %v1583, 1.442695
  %v1655 = vpow.pop %v1654
  %v1656 = vmul.f32 %v1584, 1.442695
  %v1657 = vpow.pop %v1656
  %v1658 = vmul.f32 %v1585, 1.442695
  %v1659 = vpow.pop %v1658
  %v1660 = vmul.f32 %v1586, 1.442695
  %v1661 = vpow.pop %v1660
  %v1662 = vmul.f32 %v1587, 1.442695
  %v1663 = vpow.pop %v1662
  %v1664 = vmul.f32 %v1588, 1.442695
  %v1665 = vpow.pop %v1664
  %v1666 = vmul.f32 %v1589, 1.442695
  %v1667 = vpow.pop %v1666
  %v1668 = vmul.f32 %v1590, 1.442695
  %v1669 = vpow.pop %v1668
  %v1670 = vmul.f32 %v1591, 1.442695
  %v1671 = vpow.pop %v1670
  %v1672 = vmul.f32 %v1592, 1.442695
  %v1673 = vpow.pop %v1672
  %v1674 = vmul.f32 %v1593, 1.442695
  %v1675 = vpow.pop %v1674
  %v1676 = vmul.f32 %v1594, 1.442695
  %v1677 = vpow.pop %v1676
  %v1678 = vmul.f32 %v1595, 1.442695
  %v1679 = vpow.pop %v1678
  %v1680 = vmul.f32 %v1596, 1.442695
  %v1681 = vpow.pop %v1680
  %v1682 = vmul.f32 %v1597, 1.442695
  %v1683 = vpow.pop %v1682
  %v1684 = vmul.f32 %v1598, 1.442695
  %v1685 = vpow.pop %v1684
  %v1686 = vmul.f32 %v1599, 1.442695
  %v1687 = vpow.pop %v1686
  %v1688 = vmul.f32 %v1600, 1.442695
  %v1689 = vpow.pop %v1688
  %v1690 = vmul.f32 %v1601, 1.442695
  %v1691 = vpow.pop %v1690
  %v1692 = vmul.f32 %v1602, 1.442695
  %v1693 = vpow.pop %v1692
  %v1694 = vmul.f32 %v1603, 1.442695
  %v1695 = vpow.pop %v1694
  %v1696 = vmul.f32 %v1604, 1.442695
  %v1697 = vpow.pop %v1696
  %v1698 = vmul.f32 %v1605, 1.442695
  %v1699 = vpow.pop %v1698
  %v1700 = vmul.f32 %v1606, 1.442695
  %v1701 = vpow.pop %v1700
  %v1702 = vmul.f32 %v1607, 1.442695
  %v1703 = vpow.pop %v1702
  %v1704 = vmul.f32 %v1608, 1.442695
  %v1705 = vpow.pop %v1704
  %v1706 = vmul.f32 %v1609, 1.442695
  %v1707 = vpow.pop %v1706
  %v1708 = vmul.f32 %v1610, 1.442695
  %v1709 = vpow.pop %v1708
  %v1710 = vmul.f32 %v1611, 1.442695
  %v1711 = vpow.pop %v1710
  %v1712 = vmul.f32 %v1612, 1.442695
  %v1713 = vpow.pop %v1712
  %v1714 = vmul.f32 %v1613, 1.442695
  %v1715 = vpow.pop %v1714
  %v1716 = vmul.f32 %v1614, 1.442695
  %v1717 = vpow.pop %v1716
  %v1718 = vmul.f32 %v1615, 1.442695
  %v1719 = vpow.pop %v1718
  %v1720 = vmul.f32 %v1616, 1.442695
  %v1721 = vpow.pop %v1720
  %v1722 = vmul.f32 %v1617, 1.442695
  %v1723 = vpow.pop %v1722
  %v1724 = vmul.f32 %v1618, 1.442695
  %v1725 = vpow.pop %v1724
  %v1726 = vmul.f32 %v1619, 1.442695
  %v1727 = vpow.pop %v1726
  %v1728 = vmul.f32 %v1620, 1.442695
  %v1729 = vpow.pop %v1728
  %v1730 = vmul.f32 %v1621, 1.442695
  %v1731 = vpow.pop %v1730
  %v1732 = vmul.f32 %v1622, 1.442695
  %v1733 = vpow.pop %v1732
  %v1734 = vmul.f32 %v1623, 1.442695
  %v1735 = vpow.pop %v1734
  %v1736 = vmul.f32 %v1624, 1.442695
  %v1737 = vpow.pop %v1736
  %v1738 = vmul.f32 %v1625, 1.442695
  %v1739 = vpow.pop %v1738
  %v1740 = vmul.f32 %v1626, 1.442695
  %v1741 = vpow.pop %v1740
  %v1742 = vmul.f32 %v1627, 1.442695
  %v1743 = vpow.pop %v1742
  %v1744 = vmul.f32 %v1628, 1.442695
  %v1745 = vpow.pop %v1744
  %v1746 = vmul.f32 %v1629, 1.442695
  %v1747 = vpow.pop %v1746
  %v1748 = vmul.f32 %v1630, 1.442695
  %v1749 = vpow.pop %v1748
  %v1750 = vmul.f32 %v1631, 1.442695
  %v1751 = vpow.pop %v1750
  %v1752 = vmul.f32 %v1632, 1.442695
  %v1753 = vpow.pop %v1752
  %v1754 = vmul.f32 %v1633, 1.442695
  %v1755 = vpow.pop %v1754
  %v1756 = vmul.f32 %v1634, 1.442695
  %v1757 = vpow.pop %v1756
  %v1758 = vmul.f32 %v1635, 1.442695
  %v1759 = vpow.pop %v1758
  %v1760 = vmul.f32 %v1636, 1.442695
  %v1761 = vpow.pop %v1760
  %v1762 = vmul.f32 %v1637, 1.442695
  %v1763 = vpow.pop %v1762
  %v1764 = vmul.f32 %v1638, 1.442695
  %v1765 = vpow.pop %v1764
  %v1766 = vmul.f32 %v1639, 1.442695
  %v1767 = vpow.pop %v1766
  %v1768 = vadd.f32 %v1641, 1.0
  %v1769 = vadd.f32 %v1643, 1.0
  %v1770 = vadd.f32 %v1645, 1.0
  %v1771 = vadd.f32 %v1647, 1.0
  %v1772 = vadd.f32 %v1649, 1.0
  %v1773 = vadd.f32 %v1651, 1.0
  %v1774 = vadd.f32 %v1653, 1.0
  %v1775 = vadd.f32 %v1655, 1.0
  %v1776 = vadd.f32 %v1657, 1.0
  %v1777 = vadd.f32 %v1659, 1.0
  %v1778 = vadd.f32 %v1661, 1.0
  %v1779 = vadd.f32 %v1663, 1.0
  %v1780 = vadd.f32 %v1665, 1.0
  %v1781 = vadd.f32 %v1667, 1.0
  %v1782 = vadd.f32 %v1669, 1.0
  %v1783 = vadd.f32 %v1671, 1.0
  %v1784 = vadd.f32 %v1673, 1.0
  %v1785 = vadd.f32 %v1675, 1.0
  %v1786 = vadd.f32 %v1677, 1.0
  %v1787 = vadd.f32 %v1679, 1.0
  %v1788 = vadd.f32 %v1681, 1.0
  %v1789 = vadd.f32 %v1683, 1.0
  %v1790 = vadd.f32 %v1685, 1.0
  %v1791 = vadd.f32 %v1687, 1.0
  %v1792 = vadd.f32 %v1689, 1.0
  %v1793 = vadd.f32 %v1691, 1.0
  %v1794 = vadd.f32 %v1693, 1.0
  %v1795 = vadd.f32 %v1695, 1.0
  %v1796 = vadd.f32 %v1697, 1.0
  %v1797 = vadd.f32 %v1699, 1.0
  %v1798 = vadd.f32 %v1701, 1.0
  %v1799 = vadd.f32 %v1703, 1.0
  %v1800 = vadd.f32 %v1705, 1.0
  %v1801 = vadd.f32 %v1707, 1.0
  %v1802 = vadd.f32 %v1709, 1.0
  %v1803 = vadd.f32 %v1711, 1.0
  %v1804 = vadd.f32 %v1713, 1.0
  %v1805 = vadd.f32 %v1715, 1.0
  %v1806 = vadd.f32 %v1717, 1.0
  %v1807 = vadd.f32 %v1719, 1.0
  %v1808 = vadd.f32 %v1721, 1.0
  %v1809 = vadd.f32 %v1723, 1.0
  %v1810 = vadd.f32 %v1725, 1.0
  %v1811 = vadd.f32 %v1727, 1.0
  %v1812 = vadd.f32 %v1729, 1.0
  %v1813 = vadd.f32 %v1731, 1.0
  %v1814 = vadd.f32 %v1733, 1.0
  %v1815 = vadd.f32 %v1735, 1.0
  %v1816 = vadd.f32 %v1737, 1.0
  %v1817 = vadd.f32 %v1739, 1.0
  %v1818 = vadd.f32 %v1741, 1.0
  %v1819 = vadd.f32 %v1743, 1.0
  %v1820 = vadd.f32 %v1745, 1.0
  %v1821 = vadd.f32 %v1747, 1.0
  %v1822 = vadd.f32 %v1749, 1.0
  %v1823 = vadd.f32 %v1751, 1.0
  %v1824 = vadd.f32 %v1753, 1.0
  %v1825 = vadd.f32 %v1755, 1.0
  %v1826 = vadd.f32 %v1757, 1.0
  %v1827 = vadd.f32 %v1759, 1.0
  %v1828 = vadd.f32 %v1761, 1.0
  %v1829 = vadd.f32 %v1763, 1.0
  %v1830 = vadd.f32 %v1765, 1.0
  %v1831 = vadd.f32 %v1767, 1.0
  %v1832 = vrcp.pop %v1768
  %v1833 = vmul.f32 1.0, %v1832
  %v1834 = vrcp.pop %v1769
  %v1835 = vmul.f32 1.0, %v1834
  %v1836 = vrcp.pop %v1770
  %v1837 = vmul.f32 1.0, %v1836
  %v1838 = vrcp.pop %v1771
  %v1839 = vmul.f32 1.0, %v1838
  %v1840 = vrcp.pop %v1772
  %v1841 = vmul.f32 1.0, %v1840
  %v1842 = vrcp.pop %v1773
  %v1843 = vmul.f32 1.0, %v1842
  %v1844 = vrcp.pop %v1774
  %v1845 = vmul.f32 1.0, %v1844
  %v1846 = vrcp.pop %v1775
  %v1847 = vmul.f32 1.0, %v1846
  %v1848 = vrcp.pop %v1776
  %v1849 = vmul.f32 1.0, %v1848
  %v1850 = vrcp.pop %v1777
  %v1851 = vmul.f32 1.0, %v1850
  %v1852 = vrcp.pop %v1778
  %v1853 = vmul.f32 1.0, %v1852
  %v1854 = vrcp.pop %v1779
  %v1855 = vmul.f32 1.0, %v1854
  %v1856 = vrcp.pop %v1780
  %v1857 = vmul.f32 1.0, %v1856
  %v1858 = vrcp.pop %v1781
  %v1859 = vmul.f32 1.0, %v1858
  %v1860 = vrcp.pop %v1782
  %v1861 = vmul.f32 1.0, %v1860
  %v1862 = vrcp.pop %v1783
  %v1863 = vmul.f32 1.0, %v1862
  %v1864 = vrcp.pop %v1784
  %v1865 = vmul.f32 1.0, %v1864
  %v1866 = vrcp.pop %v1785
  %v1867 = vmul.f32 1.0, %v1866
  %v1868 = vrcp.pop %v1786
  %v1869 = vmul.f32 1.0, %v1868
  %v1870 = vrcp.pop %v1787
  %v1871 = vmul.f32 1.0, %v1870
  %v1872 = vrcp.pop %v1788
  %v1873 = vmul.f32 1.0, %v1872
  %v1874 = vrcp.pop %v1789
  %v1875 = vmul.f32 1.0, %v1874
  %v1876 = vrcp.pop %v1790
  %v1877 = vmul.f32 1.0, %v1876
  %v1878 = vrcp.pop %v1791
  %v1879 = vmul.f32 1.0, %v1878
  %v1880 = vrcp.pop %v1792
  %v1881 = vmul.f32 1.0, %v1880
  %v1882 = vrcp.pop %v1793
  %v1883 = vmul.f32 1.0, %v1882
  %v1884 = vrcp.pop %v1794
  %v1885 = vmul.f32 1.0, %v1884
  %v1886 = vrcp.pop %v1795
  %v1887 = vmul.f32 1.0, %v1886
  %v1888 = vrcp.pop %v1796
  %v1889 = vmul.f32 1.0, %v1888
  %v1890 = vrcp.pop %v1797
  %v1891 = vmul.f32 1.0, %v1890
  %v1892 = vrcp.pop %v1798
  %v1893 = vmul.f32 1.0, %v1892
  %v1894 = vrcp.pop %v1799
  %v1895 = vmul.f32 1.0, %v1894
  %v1896 = vrcp.pop %v1800
  %v1897 = vmul.f32 1.0, %v1896
  %v1898 = vrcp.pop %v1801
  %v1899 = vmul.f32 1.0, %v1898
  %v1900 = vrcp.pop %v1802
  %v1901 = vmul.f32 1.0, %v1900
  %v1902 = vrcp.pop %v1803
  %v1903 = vmul.f32 1.0, %v1902
  %v1904 = vrcp.pop %v1804
  %v1905 = vmul.f32 1.0, %v1904
  %v1906 = vrcp.pop %v1805
  %v1907 = vmul.f32 1.0, %v1906
  %v1908 = vrcp.pop %v1806
  %v1909 = vmul.f32 1.0, %v1908
  %v1910 = vrcp.pop %v1807
  %v1911 = vmul.f32 1.0, %v1910
  %v1912 = vrcp.pop %v1808
  %v1913 = vmul.f32 1.0, %v1912
  %v1914 = vrcp.pop %v1809
  %v1915 = vmul.f32 1.0, %v1914
  %v1916 = vrcp.pop %v1810
  %v1917 = vmul.f32 1.0, %v1916
  %v1918 = vrcp.pop %v1811
  %v1919 = vmul.f32 1.0, %v1918
  %v1920 = vrcp.pop %v1812
  %v1921 = vmul.f32 1.0, %v1920
  %v1922 = vrcp.pop %v1813
  %v1923 = vmul.f32 1.0, %v1922
  %v1924 = vrcp.pop %v1814
  %v1925 = vmul.f32 1.0, %v1924
  %v1926 = vrcp.pop %v1815
  %v1927 = vmul.f32 1.0, %v1926
  %v1928 = vrcp.pop %v1816
  %v1929 = vmul.f32 1.0, %v1928
  %v1930 = vrcp.pop %v1817
  %v1931 = vmul.f32 1.0, %v1930
  %v1932 = vrcp.pop %v1818
  %v1933 = vmul.f32 1.0, %v1932
  %v1934 = vrcp.pop %v1819
  %v1935 = vmul.f32 1.0, %v1934
  %v1936 = vrcp.pop %v1820
  %v1937 = vmul.f32 1.0, %v1936
  %v1938 = vrcp.pop %v1821
  %v1939 = vmul.f32 1.0, %v1938
  %v1940 = vrcp.pop %v1822
  %v1941 = vmul.f32 1.0, %v1940
  %v1942 = vrcp.pop %v1823
  %v1943 = vmul.f32 1.0, %v1942
  %v1944 = vrcp.pop %v1824
  %v1945 = vmul.f32 1.0, %v1944
  %v1946 = vrcp.pop %v1825
  %v1947 = vmul.f32 1.0, %v1946
  %v1948 = vrcp.pop %v1826
  %v1949 = vmul.f32 1.0, %v1948
  %v1950 = vrcp.pop %v1827
  %v1951 = vmul.f32 1.0, %v1950
  %v1952 = vrcp.pop %v1828
  %v1953 = vmul.f32 1.0, %v1952
  %v1954 = vrcp.pop %v1829
  %v1955 = vmul.f32 1.0, %v1954
  %v1956 = vrcp.pop %v1830
  %v1957 = vmul.f32 1.0, %v1956
  %v1958 = vrcp.pop %v1831
  %v1959 = vmul.f32 1.0, %v1958
  %2024 = vrot.lane.b32.xlu0 %v1833, 32
  %v2025 = vpop.permute.xlu0 %2024
  %2026 = vrot.lane.b32.xlu0 %v1835, 32
  %v2027 = vpop.permute.xlu0 %2026
  %2028 = vrot.lane.b32.xlu0 %v1837, 32
  %v2029 = vpop.permute.xlu0 %2028
  %2030 = vrot.lane.b32.xlu0 %v1839, 32
  %v2031 = vpop.permute.xlu0 %2030
  %2032 = vrot.lane.b32.xlu0 %v1841, 32
  %v2033 = vpop.permute.xlu0 %2032
  %2034 = vrot.lane.b32.xlu0 %v1843, 32
  %v2035 = vpop.permute.xlu0 %2034
  %2036 = vrot.lane.b32.xlu0 %v1845, 32
  %v2037 = vpop.permute.xlu0 %2036
  %2038 = vrot.lane.b32.xlu0 %v1847, 32
  %v2039 = vpop.permute.xlu0 %2038
  %2040 = vrot.lane.b32.xlu0 %v1849, 32
  %v2041 = vpop.permute.xlu0 %2040
  %2042 = vrot.lane.b32.xlu0 %v1851, 32
  %v2043 = vpop.permute.xlu0 %2042
  %2044 = vrot.lane.b32.xlu0 %v1853, 32
  %v2045 = vpop.permute.xlu0 %2044
  %2046 = vrot.lane.b32.xlu0 %v1855, 32
  %v2047 = vpop.permute.xlu0 %2046
  %2048 = vrot.lane.b32.xlu0 %v1857, 32
  %v2049 = vpop.permute.xlu0 %2048
  %2050 = vrot.lane.b32.xlu0 %v1859, 32
  %v2051 = vpop.permute.xlu0 %2050
  %2052 = vrot.lane.b32.xlu0 %v1861, 32
  %v2053 = vpop.permute.xlu0 %2052
  %2054 = vrot.lane.b32.xlu0 %v1863, 32
  %v2055 = vpop.permute.xlu0 %2054
  %2056 = vrot.lane.b32.xlu0 %v1865, 32
  %v2057 = vpop.permute.xlu0 %2056
  %2058 = vrot.lane.b32.xlu0 %v1867, 32
  %v2059 = vpop.permute.xlu0 %2058
  %2060 = vrot.lane.b32.xlu0 %v1869, 32
  %v2061 = vpop.permute.xlu0 %2060
  %2062 = vrot.lane.b32.xlu0 %v1871, 32
  %v2063 = vpop.permute.xlu0 %2062
  %2064 = vrot.lane.b32.xlu0 %v1873, 32
  %v2065 = vpop.permute.xlu0 %2064
  %2066 = vrot.lane.b32.xlu0 %v1875, 32
  %v2067 = vpop.permute.xlu0 %2066
  %2068 = vrot.lane.b32.xlu0 %v1877, 32
  %v2069 = vpop.permute.xlu0 %2068
  %2070 = vrot.lane.b32.xlu0 %v1879, 32
  %v2071 = vpop.permute.xlu0 %2070
  %2072 = vrot.lane.b32.xlu0 %v1881, 32
  %v2073 = vpop.permute.xlu0 %2072
  %2074 = vrot.lane.b32.xlu0 %v1883, 32
  %v2075 = vpop.permute.xlu0 %2074
  %2076 = vrot.lane.b32.xlu0 %v1885, 32
  %v2077 = vpop.permute.xlu0 %2076
  %2078 = vrot.lane.b32.xlu0 %v1887, 32
  %v2079 = vpop.permute.xlu0 %2078
  %2080 = vrot.lane.b32.xlu0 %v1889, 32
  %v2081 = vpop.permute.xlu0 %2080
  %2082 = vrot.lane.b32.xlu0 %v1891, 32
  %v2083 = vpop.permute.xlu0 %2082
  %2084 = vrot.lane.b32.xlu0 %v1893, 32
  %v2085 = vpop.permute.xlu0 %2084
  %2086 = vrot.lane.b32.xlu0 %v1895, 32
  %v2087 = vpop.permute.xlu0 %2086
  %2088 = vrot.lane.b32.xlu0 %v1897, 32
  %v2089 = vpop.permute.xlu0 %2088
  %2090 = vrot.lane.b32.xlu0 %v1899, 32
  %v2091 = vpop.permute.xlu0 %2090
  %2092 = vrot.lane.b32.xlu0 %v1901, 32
  %v2093 = vpop.permute.xlu0 %2092
  %2094 = vrot.lane.b32.xlu0 %v1903, 32
  %v2095 = vpop.permute.xlu0 %2094
  %2096 = vrot.lane.b32.xlu0 %v1905, 32
  %v2097 = vpop.permute.xlu0 %2096
  %2098 = vrot.lane.b32.xlu0 %v1907, 32
  %v2099 = vpop.permute.xlu0 %2098
  %2100 = vrot.lane.b32.xlu0 %v1909, 32
  %v2101 = vpop.permute.xlu0 %2100
  %2102 = vrot.lane.b32.xlu0 %v1911, 32
  %v2103 = vpop.permute.xlu0 %2102
  %2104 = vrot.lane.b32.xlu0 %v1913, 32
  %v2105 = vpop.permute.xlu0 %2104
  %2106 = vrot.lane.b32.xlu0 %v1915, 32
  %v2107 = vpop.permute.xlu0 %2106
  %2108 = vrot.lane.b32.xlu0 %v1917, 32
  %v2109 = vpop.permute.xlu0 %2108
  %2110 = vrot.lane.b32.xlu0 %v1919, 32
  %v2111 = vpop.permute.xlu0 %2110
  %2112 = vrot.lane.b32.xlu0 %v1921, 32
  %v2113 = vpop.permute.xlu0 %2112
  %2114 = vrot.lane.b32.xlu0 %v1923, 32
  %v2115 = vpop.permute.xlu0 %2114
  %2116 = vrot.lane.b32.xlu0 %v1925, 32
  %v2117 = vpop.permute.xlu0 %2116
  %2118 = vrot.lane.b32.xlu0 %v1927, 32
  %v2119 = vpop.permute.xlu0 %2118
  %2120 = vrot.lane.b32.xlu0 %v1929, 32
  %v2121 = vpop.permute.xlu0 %2120
  %2122 = vrot.lane.b32.xlu0 %v1931, 32
  %v2123 = vpop.permute.xlu0 %2122
  %2124 = vrot.lane.b32.xlu0 %v1933, 32
  %v2125 = vpop.permute.xlu0 %2124
  %2126 = vrot.lane.b32.xlu0 %v1935, 32
  %v2127 = vpop.permute.xlu0 %2126
  %2128 = vrot.lane.b32.xlu0 %v1937, 32
  %v2129 = vpop.permute.xlu0 %2128
  %2130 = vrot.lane.b32.xlu0 %v1939, 32
  %v2131 = vpop.permute.xlu0 %2130
  %2132 = vrot.lane.b32.xlu0 %v1941, 32
  %v2133 = vpop.permute.xlu0 %2132
  %2134 = vrot.lane.b32.xlu0 %v1943, 32
  %v2135 = vpop.permute.xlu0 %2134
  %2136 = vrot.lane.b32.xlu0 %v1945, 32
  %v2137 = vpop.permute.xlu0 %2136
  %2138 = vrot.lane.b32.xlu0 %v1947, 32
  %v2139 = vpop.permute.xlu0 %2138
  %2140 = vrot.lane.b32.xlu0 %v1949, 32
  %v2141 = vpop.permute.xlu0 %2140
  %2142 = vrot.lane.b32.xlu0 %v1951, 32
  %v2143 = vpop.permute.xlu0 %2142
  %2144 = vrot.lane.b32.xlu0 %v1953, 32
  %v2145 = vpop.permute.xlu0 %2144
  %2146 = vrot.lane.b32.xlu0 %v1955, 32
  %v2147 = vpop.permute.xlu0 %2146
  %2148 = vrot.lane.b32.xlu0 %v1957, 32
  %v2149 = vpop.permute.xlu0 %2148
  %2150 = vrot.lane.b32.xlu0 %v1959, 32
  %v2151 = vpop.permute.xlu0 %2150
  %v2216 = vsel %vm294, %v1129, %v2025
  %v2217 = vsel %vm294, %v1131, %v2027
  %v2218 = vsel %vm294, %v1133, %v2029
  %v2219 = vsel %vm294, %v1135, %v2031
  %v2220 = vsel %vm294, %v1137, %v2033
  %v2221 = vsel %vm294, %v1139, %v2035
  %v2222 = vsel %vm294, %v1141, %v2037
  %v2223 = vsel %vm294, %v1143, %v2039
  %v2224 = vsel %vm294, %v1145, %v2041
  %v2225 = vsel %vm294, %v1147, %v2043
  %v2226 = vsel %vm294, %v1149, %v2045
  %v2227 = vsel %vm294, %v1151, %v2047
  %v2228 = vsel %vm294, %v1153, %v2049
  %v2229 = vsel %vm294, %v1155, %v2051
  %v2230 = vsel %vm294, %v1157, %v2053
  %v2231 = vsel %vm294, %v1159, %v2055
  %v2232 = vsel %vm294, %v1161, %v2057
  %v2233 = vsel %vm294, %v1163, %v2059
  %v2234 = vsel %vm294, %v1165, %v2061
  %v2235 = vsel %vm294, %v1167, %v2063
  %v2236 = vsel %vm294, %v1169, %v2065
  %v2237 = vsel %vm294, %v1171, %v2067
  %v2238 = vsel %vm294, %v1173, %v2069
  %v2239 = vsel %vm294, %v1175, %v2071
  %v2240 = vsel %vm294, %v1177, %v2073
  %v2241 = vsel %vm294, %v1179, %v2075
  %v2242 = vsel %vm294, %v1181, %v2077
  %v2243 = vsel %vm294, %v1183, %v2079
  %v2244 = vsel %vm294, %v1185, %v2081
  %v2245 = vsel %vm294, %v1187, %v2083
  %v2246 = vsel %vm294, %v1189, %v2085
  %v2247 = vsel %vm294, %v1191, %v2087
  %v2248 = vsel %vm294, %v1193, %v2089
  %v2249 = vsel %vm294, %v1195, %v2091
  %v2250 = vsel %vm294, %v1197, %v2093
  %v2251 = vsel %vm294, %v1199, %v2095
  %v2252 = vsel %vm294, %v1201, %v2097
  %v2253 = vsel %vm294, %v1203, %v2099
  %v2254 = vsel %vm294, %v1205, %v2101
  %v2255 = vsel %vm294, %v1207, %v2103
  %v2256 = vsel %vm294, %v1209, %v2105
  %v2257 = vsel %vm294, %v1211, %v2107
  %v2258 = vsel %vm294, %v1213, %v2109
  %v2259 = vsel %vm294, %v1215, %v2111
  %v2260 = vsel %vm294, %v1217, %v2113
  %v2261 = vsel %vm294, %v1219, %v2115
  %v2262 = vsel %vm294, %v1221, %v2117
  %v2263 = vsel %vm294, %v1223, %v2119
  %v2264 = vsel %vm294, %v1225, %v2121
  %v2265 = vsel %vm294, %v1227, %v2123
  %v2266 = vsel %vm294, %v1229, %v2125
  %v2267 = vsel %vm294, %v1231, %v2127
  %v2268 = vsel %vm294, %v1233, %v2129
  %v2269 = vsel %vm294, %v1235, %v2131
  %v2270 = vsel %vm294, %v1237, %v2133
  %v2271 = vsel %vm294, %v1239, %v2135
  %v2272 = vsel %vm294, %v1241, %v2137
  %v2273 = vsel %vm294, %v1243, %v2139
  %v2274 = vsel %vm294, %v1245, %v2141
  %v2275 = vsel %vm294, %v1247, %v2143
  %v2276 = vsel %vm294, %v1249, %v2145
  %v2277 = vsel %vm294, %v1251, %v2147
  %v2278 = vsel %vm294, %v1253, %v2149
  %v2279 = vsel %vm294, %v1255, %v2151
  %vm2280 = vcmask 392192
  %2281 = vst.msk [vmem:[%s4] sm:$0xff] %vm2280, %v2216
  %2282 = vst.msk [vmem:[%s4 + $0x8] sm:$0xff] %vm2280, %v2217
  %2283 = vst.msk [vmem:[%s4 + $0x10] sm:$0xff] %vm2280, %v2218
  %2284 = vst.msk [vmem:[%s4 + $0x18] sm:$0xff] %vm2280, %v2219
  %2285 = vst.msk [vmem:[%s4 + $0x20] sm:$0xff] %vm2280, %v2220
  %2286 = vst.msk [vmem:[%s4 + $0x28] sm:$0xff] %vm2280, %v2221
  %2287 = vst.msk [vmem:[%s4 + $0x30] sm:$0xff] %vm2280, %v2222
  %2288 = vst.msk [vmem:[%s4 + $0x38] sm:$0xff] %vm2280, %v2223
  %2289 = vst.msk [vmem:[%s4 + $0x40] sm:$0xff] %vm2280, %v2224
  %2290 = vst.msk [vmem:[%s4 + $0x48] sm:$0xff] %vm2280, %v2225
  %2291 = vst.msk [vmem:[%s4 + $0x50] sm:$0xff] %vm2280, %v2226
  %2292 = vst.msk [vmem:[%s4 + $0x58] sm:$0xff] %vm2280, %v2227
  %2293 = vst.msk [vmem:[%s4 + $0x60] sm:$0xff] %vm2280, %v2228
  %2294 = vst.msk [vmem:[%s4 + $0x68] sm:$0xff] %vm2280, %v2229
  %2295 = vst.msk [vmem:[%s4 + $0x70] sm:$0xff] %vm2280, %v2230
  %2296 = vst.msk [vmem:[%s4 + $0x78] sm:$0xff] %vm2280, %v2231
  %2297 = vst.msk [vmem:[%s4 + $0x80] sm:$0xff] %vm2280, %v2232
  %2298 = vst.msk [vmem:[%s4 + $0x88] sm:$0xff] %vm2280, %v2233
  %2299 = vst.msk [vmem:[%s4 + $0x90] sm:$0xff] %vm2280, %v2234
  %2300 = vst.msk [vmem:[%s4 + $0x98] sm:$0xff] %vm2280, %v2235
  %2301 = vst.msk [vmem:[%s4 + $0xa0] sm:$0xff] %vm2280, %v2236
  %2302 = vst.msk [vmem:[%s4 + $0xa8] sm:$0xff] %vm2280, %v2237
  %2303 = vst.msk [vmem:[%s4 + $0xb0] sm:$0xff] %vm2280, %v2238
  %2304 = vst.msk [vmem:[%s4 + $0xb8] sm:$0xff] %vm2280, %v2239
  %2305 = vst.msk [vmem:[%s4 + $0xc0] sm:$0xff] %vm2280, %v2240
  %2306 = vst.msk [vmem:[%s4 + $0xc8] sm:$0xff] %vm2280, %v2241
  %2307 = vst.msk [vmem:[%s4 + $0xd0] sm:$0xff] %vm2280, %v2242
  %2308 = vst.msk [vmem:[%s4 + $0xd8] sm:$0xff] %vm2280, %v2243
  %2309 = vst.msk [vmem:[%s4 + $0xe0] sm:$0xff] %vm2280, %v2244
  %2310 = vst.msk [vmem:[%s4 + $0xe8] sm:$0xff] %vm2280, %v2245
  %2311 = vst.msk [vmem:[%s4 + $0xf0] sm:$0xff] %vm2280, %v2246
  %2312 = vst.msk [vmem:[%s4 + $0xf8] sm:$0xff] %vm2280, %v2247
  %2313 = vst.msk [vmem:[%s4 + $0x100] sm:$0xff] %vm2280, %v2248
  %2314 = vst.msk [vmem:[%s4 + $0x108] sm:$0xff] %vm2280, %v2249
  %2315 = vst.msk [vmem:[%s4 + $0x110] sm:$0xff] %vm2280, %v2250
  %2316 = vst.msk [vmem:[%s4 + $0x118] sm:$0xff] %vm2280, %v2251
  %2317 = vst.msk [vmem:[%s4 + $0x120] sm:$0xff] %vm2280, %v2252
  %2318 = vst.msk [vmem:[%s4 + $0x128] sm:$0xff] %vm2280, %v2253
  %2319 = vst.msk [vmem:[%s4 + $0x130] sm:$0xff] %vm2280, %v2254
  %2320 = vst.msk [vmem:[%s4 + $0x138] sm:$0xff] %vm2280, %v2255
  %2321 = vst.msk [vmem:[%s4 + $0x140] sm:$0xff] %vm2280, %v2256
  %2322 = vst.msk [vmem:[%s4 + $0x148] sm:$0xff] %vm2280, %v2257
  %2323 = vst.msk [vmem:[%s4 + $0x150] sm:$0xff] %vm2280, %v2258
  %2324 = vst.msk [vmem:[%s4 + $0x158] sm:$0xff] %vm2280, %v2259
  %2325 = vst.msk [vmem:[%s4 + $0x160] sm:$0xff] %vm2280, %v2260
  %2326 = vst.msk [vmem:[%s4 + $0x168] sm:$0xff] %vm2280, %v2261
  %2327 = vst.msk [vmem:[%s4 + $0x170] sm:$0xff] %vm2280, %v2262
  %2328 = vst.msk [vmem:[%s4 + $0x178] sm:$0xff] %vm2280, %v2263
  %2329 = vst.msk [vmem:[%s4 + $0x180] sm:$0xff] %vm2280, %v2264
  %2330 = vst.msk [vmem:[%s4 + $0x188] sm:$0xff] %vm2280, %v2265
  %2331 = vst.msk [vmem:[%s4 + $0x190] sm:$0xff] %vm2280, %v2266
  %2332 = vst.msk [vmem:[%s4 + $0x198] sm:$0xff] %vm2280, %v2267
  %2333 = vst.msk [vmem:[%s4 + $0x1a0] sm:$0xff] %vm2280, %v2268
  %2334 = vst.msk [vmem:[%s4 + $0x1a8] sm:$0xff] %vm2280, %v2269
  %2335 = vst.msk [vmem:[%s4 + $0x1b0] sm:$0xff] %vm2280, %v2270
  %2336 = vst.msk [vmem:[%s4 + $0x1b8] sm:$0xff] %vm2280, %v2271
  %2337 = vst.msk [vmem:[%s4 + $0x1c0] sm:$0xff] %vm2280, %v2272
  %2338 = vst.msk [vmem:[%s4 + $0x1c8] sm:$0xff] %vm2280, %v2273
  %2339 = vst.msk [vmem:[%s4 + $0x1d0] sm:$0xff] %vm2280, %v2274
  %2340 = vst.msk [vmem:[%s4 + $0x1d8] sm:$0xff] %vm2280, %v2275
  %2341 = vst.msk [vmem:[%s4 + $0x1e0] sm:$0xff] %vm2280, %v2276
  %2342 = vst.msk [vmem:[%s4 + $0x1e8] sm:$0xff] %vm2280, %v2277
  %2343 = vst.msk [vmem:[%s4 + $0x1f0] sm:$0xff] %vm2280, %v2278
  %2344 = vst.msk [vmem:[%s4 + $0x1f8] sm:$0xff] %vm2280, %v2279
  // Predicated region
  $region18: #{_lambda_.5} parent=0 // pred_check
    _
  $region19: #{_lambda_.5} parent=0 // pred_check_branch
    %2346 = sbr.rel (0) target = $region21
  $region20: #{_lambda_.5} parent=0 // pred_region
    _
  $region21: #{_lambda_.5} parent=0 // pred_fallthru
    _
  // Predicated region
  $region22: #{_lambda_.5} parent=0 // pred_check
    _
  $region23: #{_lambda_.5} parent=0 // pred_check_branch
    %2348 = sbr.rel (0) target = $region25
  $region24: #{_lambda_.5} parent=0 // pred_region
    _
  $region25: #{_lambda_.5} parent=0 // pred_fallthru
    _

</llo_original>
